<compile_context>
chip_gen: v7x
topology: tpu7x:2x2x1
jax: 0.10.0
libtpu: 0.0.40
codegen_flags: <defaults>
</compile_context>

<pallas_src>
import functools

import jax
import jax.numpy as jnp
from jax.experimental import pallas as pl
from jax.experimental.pallas import tpu as pltpu

LANE = 128


def _round_up(x, m):
    return ((x + m - 1) // m) * m


# ----------------------------------------------------------------------------
# Pallas kernel 1: fused (patches @ weight) + shift + activation
# (weights carry the folded BN scale; patches/weights bf16, accumulate f32)
# ----------------------------------------------------------------------------
def _fused_matmul_kernel(p_ref, w_ref, sh_ref, o_ref, *, act):
    acc = jnp.dot(p_ref[...], w_ref[...], preferred_element_type=jnp.float32)
    y = acc + sh_ref[...]
    if act == "relu":
        y = jnp.maximum(y, 0.0)
    elif act == "tanh":
        y = jnp.tanh(y)
    o_ref[...] = y.astype(o_ref.dtype)


def fused_conv_matmul(patches, wmat, shift, act="none"):
    """patches [M, K] float, wmat [K, OCp] bf16 (OCp % 128 == 0), shift [1, OCp] f32."""
    M, K = patches.shape
    OC = wmat.shape[1]
    patches = patches.astype(jnp.bfloat16)

    TM = min(128, _round_up(M, 8))          # no 94%-zero row padding for tiny M
    Mp = _round_up(M, TM)
    if Mp != M:
        patches = jnp.pad(patches, ((0, Mp - M), (0, 0)))

    cost = pl.CostEstimate(
        flops=2 * Mp * K * OC,
        transcendentals=Mp * OC if act == "tanh" else 0,
        bytes_accessed=Mp * K * 2 + K * OC * 2 + OC * 4 + Mp * OC * 4,
    )
    out = pl.pallas_call(
        functools.partial(_fused_matmul_kernel, act=act),
        out_shape=jax.ShapeDtypeStruct((Mp, OC), jnp.float32),
        grid=(Mp // TM,),
        in_specs=[
            pl.BlockSpec((TM, K), lambda i: (i, 0)),
            pl.BlockSpec((K, OC), lambda i: (0, 0)),
            pl.BlockSpec((1, OC), lambda i: (0, 0)),
        ],
        out_specs=pl.BlockSpec((TM, OC), lambda i: (i, 0)),
        compiler_params=pltpu.CompilerParams(dimension_semantics=("parallel",)),
        cost_estimate=cost,
    )(patches, wmat, shift)
    return out if Mp == M else out[:M]


# ----------------------------------------------------------------------------
# Pallas kernel 2: entire residual stage fused into one call.
# At the residual resolution, each 3x3 pad-1 conv over the full HxW feature map
# is a dense [H*W*Cp, H*W*Cp] matmul, so every block is two matmuls + relu + add
# done fully in VMEM (no intermediate HBM round trips, no extra launches).
# ----------------------------------------------------------------------------
def _residual_stage_kernel(x_ref, w1_ref, b1_ref, w2_ref, b2_ref, o_ref, *, num_res):
    x = x_ref[...]                                      # [N, D] f32
    for r in range(num_res):                            # small static loop
        h = jnp.dot(x.astype(jnp.bfloat16), w1_ref[r],
                    preferred_element_type=jnp.float32)
        h = jnp.maximum(h + b1_ref[r], 0.0)
        y = jnp.dot(h.astype(jnp.bfloat16), w2_ref[r],
                    preferred_element_type=jnp.float32)
        x = x + y + b2_ref[r]
    o_ref[...] = x


def _conv3x3_to_dense(w9, H, W, cin_pad):
    """w9 [3,3,IC,OCp] (scale folded) -> dense [H*W*cin_pad, H*W*OCp] matrix that
    implements a stride-1 pad-1 3x3 conv over an HxW feature map as one matmul."""
    IC, OCp = w9.shape[2], w9.shape[3]
    wd = jnp.zeros((H, W, cin_pad, H, W, OCp), jnp.float32)
    for yo in range(H):
        for xo in range(W):
            for dy in (-1, 0, 1):
                for dx in (-1, 0, 1):
                    yi, xi = yo + dy, xo + dx
                    if 0 <= yi < H and 0 <= xi < W:
                        wd = wd.at[yi, xi, :IC, yo, xo, :].set(w9[dy + 1, dx + 1])
    return wd.reshape(H * W * cin_pad, H * W * OCp)


def residual_stage_fused(h, res_params):
    N, H, W, Cp = h.shape
    D = H * W * Cp
    R = len(res_params)
    w1s = jnp.stack([_conv3x3_to_dense(p1["w9"], H, W, Cp)
                     for p1, _ in res_params]).astype(jnp.bfloat16)
    w2s = jnp.stack([_conv3x3_to_dense(p2["w9"], H, W, Cp)
                     for _, p2 in res_params]).astype(jnp.bfloat16)
    b1s = jnp.stack([jnp.tile(p1["b"], (1, H * W)) for p1, _ in res_params])
    b2s = jnp.stack([jnp.tile(p2["b"], (1, H * W)) for _, p2 in res_params])

    x = h.reshape(N, D)
    cost = pl.CostEstimate(
        flops=R * 2 * 2 * N * D * D,
        transcendentals=0,
        bytes_accessed=2 * N * D * 4 + 2 * R * D * D * 2 + 2 * R * D * 4,
    )
    out = pl.pallas_call(
        functools.partial(_residual_stage_kernel, num_res=R),
        out_shape=jax.ShapeDtypeStruct((N, D), jnp.float32),
        grid=(1,),
        in_specs=[
            pl.BlockSpec((N, D), lambda i: (0, 0)),
            pl.BlockSpec((R, D, D), lambda i: (0, 0, 0)),
            pl.BlockSpec((R, 1, D), lambda i: (0, 0, 0)),
            pl.BlockSpec((R, D, D), lambda i: (0, 0, 0)),
            pl.BlockSpec((R, 1, D), lambda i: (0, 0, 0)),
        ],
        out_specs=pl.BlockSpec((N, D), lambda i: (0, 0)),
        compiler_params=pltpu.CompilerParams(dimension_semantics=("arbitrary",)),
        cost_estimate=cost,
    )(x, w1s, b1s, w2s, b2s)
    return out.reshape(N, H, W, Cp)


# ----------------------------------------------------------------------------
# Plain-JAX glue: im2col on NHWC (lane-padded) activations, layer wrappers
# ----------------------------------------------------------------------------
def im2col_nhwc(x, c_real, kh, kw, stride, pad):
    """x [N,H,W,C] (only first c_real channels are real data).
    Returns patches [N*OH*OW, kh*kw*c_real] (column order kh, kw, ic), OH, OW."""
    N, H, W, C = x.shape
    if c_real != C:
        x = x[..., :c_real]
    xp = jnp.pad(x, ((0, 0), (pad, pad), (pad, pad), (0, 0)))
    OH = (H + 2 * pad - kh) // stride + 1
    OW = (W + 2 * pad - kw) // stride + 1
    cols = []
    for i in range(kh):
        for j in range(kw):
            cols.append(xp[:, i:i + stride * OH:stride, j:j + stride * OW:stride, :])
    col = jnp.stack(cols, axis=3)            # [N, OH, OW, kh*kw, c_real]
    return col.reshape(N * OH * OW, kh * kw * c_real), OH, OW


def conv_layer(x, params, stride, pad, act):
    N = x.shape[0]
    patches, OH, OW = im2col_nhwc(x, params["ic"], params["k"], params["k"], stride, pad)
    out = fused_conv_matmul(patches, params["w"], params["b"], act)
    return out.reshape(N, OH, OW, params["ocp"])


def tconv_layer(x, params, act):
    # ConvTranspose2d(k=4, s=2, p=1) as sub-pixel conv: stride-1 pad-1 3x3 conv
    # producing (ry, rx, oc) channel groups, then depth-to-space (reshape only).
    N = x.shape[0]
    patches, OH, OW = im2col_nhwc(x, params["ic"], 3, 3, 1, 1)
    out = fused_conv_matmul(patches, params["w"], params["b"], act)
    ocp = params["ocp"]
    out = out.reshape(N, OH, OW, 2, 2, ocp)
    out = out.transpose(0, 1, 3, 2, 4, 5).reshape(N, 2 * OH, 2 * OW, ocp)
    return out


# ----------------------------------------------------------------------------
# Deterministic parameter construction (BN folded; scale folded into weights;
# output channels zero-padded to a multiple of 128 lanes)
# ----------------------------------------------------------------------------
def _bn_fold(keys, oc, batch_norm):
    k_g, k_b, k_m, k_v = keys
    if batch_norm:
        gamma = 1.0 + 0.1 * jax.random.normal(k_g, (oc,), jnp.float32)
        beta = 0.1 * jax.random.normal(k_b, (oc,), jnp.float32)
        mean = 0.1 * jax.random.normal(k_m, (oc,), jnp.float32)
        var = 1.0 + 0.1 * jnp.abs(jax.random.normal(k_v, (oc,), jnp.float32))
        scale = gamma / jnp.sqrt(var + 1e-5)
        shift = beta - mean * scale
    else:
        bias = 0.1 * jax.random.normal(k_b, (oc,), jnp.float32)
        scale = jnp.ones((oc,), jnp.float32)
        shift = bias
    return scale, shift


def _make_conv_params(key, ic, oc, k, batch_norm=True, keep_w9=False):
    k_w, *k_bn = jax.random.split(key, 5)
    w = 0.1 * jax.random.normal(k_w, (oc, ic, k, k), jnp.float32)   # torch Conv2d layout
    scale, shift = _bn_fold(k_bn, oc, batch_norm)
    ocp = _round_up(oc, LANE)
    w9 = (w * scale[:, None, None, None]).transpose(2, 3, 1, 0)     # [k,k,ic,oc]
    w9p = jnp.zeros((k, k, ic, ocp), jnp.float32).at[..., :oc].set(w9)
    b = jnp.zeros((1, ocp), jnp.float32).at[0, :oc].set(shift)
    p = {"w": w9p.reshape(k * k * ic, ocp).astype(jnp.bfloat16), "b": b,
         "k": k, "ic": ic, "oc": oc, "ocp": ocp}
    if keep_w9:
        p["w9"] = w9p          # f32 copy for the fused residual-stage dense matrices
    return p


def _make_tconv_params(key, ic, oc, k, batch_norm=True):
    assert k == 4
    k_w, *k_bn = jax.random.split(key, 5)
    # torch ConvTranspose2d weight layout: [IC, OC, KH, KW]
    w_t = 0.1 * jax.random.normal(k_w, (ic, oc, k, k), jnp.float32)
    scale, shift = _bn_fold(k_bn, oc, batch_norm)
    ocp = _round_up(oc, LANE)
    w_sc = w_t * scale[None, :, None, None]
    # Sub-pixel form: tap (dy,dx) of sub-pixel (ry,rx) uses kernel element
    # kh = ry + 1 - 2*dy (same for kw); out-of-range taps are zero.
    w3 = jnp.zeros((3, 3, ic, 2, 2, ocp), jnp.float32)
    for dy in (-1, 0, 1):
        for dx in (-1, 0, 1):
            for ry in (0, 1):
                for rx in (0, 1):
                    kh = ry + 1 - 2 * dy
                    kw_ = rx + 1 - 2 * dx
                    if 0 <= kh < k and 0 <= kw_ < k:
                        w3 = w3.at[dy + 1, dx + 1, :, ry, rx, :oc].set(w_sc[:, :, kh, kw_])
    b = jnp.zeros((2, 2, ocp), jnp.float32).at[:, :, :oc].set(
        jnp.broadcast_to(shift, (2, 2, oc)))
    return {"w": w3.reshape(9 * ic, 4 * ocp).astype(jnp.bfloat16),
            "b": b.reshape(1, 4 * ocp), "ic": ic, "oc": oc, "ocp": ocp}


def make_generator_params(key, channel_size, num_residuals):
    C = channel_size
    keys = jax.random.split(key, 6 + 2 * num_residuals)
    return {
        "conv1": _make_conv_params(keys[0], 3, C, 4),
        "conv2": _make_conv_params(keys[1], C, 2 * C, 4),
        "conv3": _make_conv_params(keys[2], 2 * C, 4 * C, 4),
        "res": [
            (_make_conv_params(keys[6 + 2 * r], 4 * C, 4 * C, 3, keep_w9=True),
             _make_conv_params(keys[6 + 2 * r + 1], 4 * C, 4 * C, 3, keep_w9=True))
            for r in range(num_residuals)
        ],
        "tconv1": _make_tconv_params(keys[3], 4 * C, 2 * C, 4),
        "tconv2": _make_tconv_params(keys[4], 2 * C, C, 4),
        "tconv3": _make_tconv_params(keys[5], C, 3, 4, batch_norm=False),
    }


# ----------------------------------------------------------------------------
# Generator forward
# ----------------------------------------------------------------------------
def generator_forward(params, x):
    # NCHW -> NHWC once at entry; intermediates stay NHWC, lane-padded channels.
    h = x.transpose(0, 2, 3, 1)
    h = conv_layer(h, params["conv1"], stride=2, pad=1, act="relu")
    h = conv_layer(h, params["conv2"], stride=2, pad=1, act="relu")
    h = conv_layer(h, params["conv3"], stride=2, pad=1, act="relu")

    N, H, W, Cp = h.shape
    if H * W <= 16 and H * W * Cp <= 4096:
        # whole residual stage in a single pallas_call
        h = residual_stage_fused(h, params["res"])
    else:
        # generic fallback: per-conv im2col path (same math, more launches)
        for p1, p2 in params["res"]:
            r = conv_layer(h, p1, stride=1, pad=1, act="relu")
            y = conv_layer(r, p2, stride=1, pad=1, act="none")
            h = h + y

    h = tconv_layer(h, params["tconv1"], act="relu")
    h = tconv_layer(h, params["tconv2"], act="relu")
    h = tconv_layer(h, params["tconv3"], act="tanh")
    # drop lane padding, back to NCHW
    return h[..., :params["tconv3"]["oc"]].transpose(0, 3, 1, 2)


if __name__ == "__main__":
    key = jax.random.PRNGKey(0)
    k_param, k_x = jax.random.split(key)

    channel_size = 8
    num_residuals = 2
    params = make_generator_params(k_param, channel_size, num_residuals)

    # input: NCHW, [batch=2, 3, 16, 16]
    x = jax.random.normal(k_x, (2, 3, 16, 16), jnp.float32)

    fwd = jax.jit(functools.partial(generator_forward, params))
    out = jax.block_until_ready(fwd(x))

    assert out.shape == (2, 3, 16, 16), out.shape
    assert out.dtype == jnp.float32
    assert bool(jnp.all(jnp.isfinite(out)))
    assert bool(jnp.all(jnp.abs(out) <= 1.0 + 1e-6))  # tanh output range

    print("KERNEL_OK")
</pallas_src>

<mosaic_0001>
module attributes {stable_mosaic.version = 11 : i64} {
  func.func @_fused_matmul_kernel(%arg0: i32, %arg1: memref<128x48xbf16, #tpu.memory_space<vmem>>, %arg2: memref<48x128xbf16, #tpu.memory_space<vmem>>, %arg3: memref<1x128xf32, #tpu.memory_space<vmem>>, %arg4: memref<128x128xf32, #tpu.memory_space<vmem>>) attributes {dimension_semantics = [#tpu.dimension_semantics<parallel>], iteration_bounds = array<i64: 1>, scalar_prefetch = 0 : i64, scratch_operands = 0 : i64, tpu.core_type = #tpu.core_type<tc>, window_params = [{transform_indices = @transform_0, window_bounds = array<i64: 128, 48>}, {pipeline_mode = #tpu.pipeline_mode<synchronous>, transform_indices = @transform_1, window_bounds = array<i64: 48, 128>}, {pipeline_mode = #tpu.pipeline_mode<synchronous>, transform_indices = @transform_2, window_bounds = array<i64: 1, 128>}, {transform_indices = @transform_3, window_bounds = array<i64: 128, 128>}]} {
    %c0 = arith.constant 0 : index
    %c0_0 = arith.constant 0 : index
    %0 = vector.load %arg1[%c0, %c0_0] : memref<128x48xbf16, #tpu.memory_space<vmem>>, vector<128x48xbf16>
    %c0_1 = arith.constant 0 : index
    %c0_2 = arith.constant 0 : index
    %1 = vector.load %arg2[%c0_1, %c0_2] : memref<48x128xbf16, #tpu.memory_space<vmem>>, vector<48x128xbf16>
    %cst = arith.constant dense<0.000000e+00> : vector<128x128xf32>
    %2 = tpu.matmul %0, %1, %cst {dimension_numbers = #tpu.dot_dimension_numbers<[1], [0], [0], [1], [0, 0, 1, 1], [], []>} : vector<128x48xbf16>, vector<48x128xbf16>, vector<128x128xf32> -> vector<128x128xf32>
    %c0_3 = arith.constant 0 : index
    %c0_4 = arith.constant 0 : index
    %3 = vector.load %arg3[%c0_3, %c0_4] : memref<1x128xf32, #tpu.memory_space<vmem>>, vector<1x128xf32>
    %4 = vector.broadcast %3 : vector<1x128xf32> to vector<128x128xf32>
    %5 = arith.addf %2, %4 : vector<128x128xf32>
    %cst_5 = arith.constant 0.000000e+00 : f32
    %6 = vector.broadcast %cst_5 : f32 to vector<128x128xf32>
    %7 = arith.maximumf %5, %6 : vector<128x128xf32>
    %c0_6 = arith.constant 0 : index
    %c0_7 = arith.constant 0 : index
    %8 = vector.load %arg4[%c0_6, %c0_7] : memref<128x128xf32, #tpu.memory_space<vmem>>, vector<128x128xf32>
    tpu.vector_store %arg4[%c0_6, %c0_7], %7 {strides = array<i32>} : memref<128x128xf32, #tpu.memory_space<vmem>>, vector<128x128xf32>,
    return
  }
  func.func @transform_0(%arg0: i32) -> (i32, i32) {
    %c0_i32 = arith.constant 0 : i32
    %c0_i32_0 = arith.constant 0 : i32
    return %arg0, %c0_i32 : i32, i32
  }
  func.func @transform_1(%arg0: i32) -> (i32, i32) {
    %c0_i32 = arith.constant 0 : i32
    %c0_i32_0 = arith.constant 0 : i32
    %c0_i32_1 = arith.constant 0 : i32
    return %c0_i32, %c0_i32_0 : i32, i32
  }
  func.func @transform_2(%arg0: i32) -> (i32, i32) {
    %c0_i32 = arith.constant 0 : i32
    %c0_i32_0 = arith.constant 0 : i32
    %c0_i32_1 = arith.constant 0 : i32
    return %c0_i32, %c0_i32_0 : i32, i32
  }
  func.func @transform_3(%arg0: i32) -> (i32, i32) {
    %c0_i32 = arith.constant 0 : i32
    %c0_i32_0 = arith.constant 0 : i32
    return %arg0, %c0_i32 : i32, i32
  }
}

module attributes {stable_mosaic.version = 11 : i64} {
  func.func @_fused_matmul_kernel(%arg0: i32, %arg1: memref<32x128xbf16, #tpu.memory_space<vmem>>, %arg2: memref<128x128xbf16, #tpu.memory_space<vmem>>, %arg3: memref<1x128xf32, #tpu.memory_space<vmem>>, %arg4: memref<32x128xf32, #tpu.memory_space<vmem>>) attributes {dimension_semantics = [#tpu.dimension_semantics<parallel>], iteration_bounds = array<i64: 1>, scalar_prefetch = 0 : i64, scratch_operands = 0 : i64, tpu.core_type = #tpu.core_type<tc>, window_params = [{transform_indices = @transform_0, window_bounds = array<i64: 32, 128>}, {pipeline_mode = #tpu.pipeline_mode<synchronous>, transform_indices = @transform_1, window_bounds = array<i64: 128, 128>}, {pipeline_mode = #tpu.pipeline_mode<synchronous>, transform_indices = @transform_2, window_bounds = array<i64: 1, 128>}, {transform_indices = @transform_3, window_bounds = array<i64: 32, 128>}]} {
    %c0 = arith.constant 0 : index
    %c0_0 = arith.constant 0 : index
    %0 = vector.load %arg1[%c0, %c0_0] : memref<32x128xbf16, #tpu.memory_space<vmem>>, vector<32x128xbf16>
    %c0_1 = arith.constant 0 : index
    %c0_2 = arith.constant 0 : index
    %1 = vector.load %arg2[%c0_1, %c0_2] : memref<128x128xbf16, #tpu.memory_space<vmem>>, vector<128x128xbf16>
    %cst = arith.constant dense<0.000000e+00> : vector<32x128xf32>
    %2 = tpu.matmul %0, %1, %cst {dimension_numbers = #tpu.dot_dimension_numbers<[1], [0], [0], [1], [0, 0, 1, 1], [], []>} : vector<32x128xbf16>, vector<128x128xbf16>, vector<32x128xf32> -> vector<32x128xf32>
    %c0_3 = arith.constant 0 : index
    %c0_4 = arith.constant 0 : index
    %3 = vector.load %arg3[%c0_3, %c0_4] : memref<1x128xf32, #tpu.memory_space<vmem>>, vector<1x128xf32>
    %4 = vector.broadcast %3 : vector<1x128xf32> to vector<32x128xf32>
    %5 = arith.addf %2, %4 : vector<32x128xf32>
    %cst_5 = arith.constant 0.000000e+00 : f32
    %6 = vector.broadcast %cst_5 : f32 to vector<32x128xf32>
    %7 = arith.maximumf %5, %6 : vector<32x128xf32>
    %c0_6 = arith.constant 0 : index
    %c0_7 = arith.constant 0 : index
    %8 = vector.load %arg4[%c0_6, %c0_7] : memref<32x128xf32, #tpu.memory_space<vmem>>, vector<32x128xf32>
    tpu.vector_store %arg4[%c0_6, %c0_7], %7 {strides = array<i32>} : memref<32x128xf32, #tpu.memory_space<vmem>>, vector<32x128xf32>,
    return
  }
  func.func @transform_0(%arg0: i32) -> (i32, i32) {
    %c0_i32 = arith.constant 0 : i32
    %c0_i32_0 = arith.constant 0 : i32
    return %arg0, %c0_i32 : i32, i32
  }
  func.func @transform_1(%arg0: i32) -> (i32, i32) {
    %c0_i32 = arith.constant 0 : i32
    %c0_i32_0 = arith.constant 0 : i32
    %c0_i32_1 = arith.constant 0 : i32
    return %c0_i32, %c0_i32_0 : i32, i32
  }
  func.func @transform_2(%arg0: i32) -> (i32, i32) {
    %c0_i32 = arith.constant 0 : i32
    %c0_i32_0 = arith.constant 0 : i32
    %c0_i32_1 = arith.constant 0 : i32
    return %c0_i32, %c0_i32_0 : i32, i32
  }
  func.func @transform_3(%arg0: i32) -> (i32, i32) {
    %c0_i32 = arith.constant 0 : i32
    %c0_i32_0 = arith.constant 0 : i32
    return %arg0, %c0_i32 : i32, i32
  }
}

module attributes {stable_mosaic.version = 11 : i64} {
  func.func @_fused_matmul_kernel(%arg0: i32, %arg1: memref<8x256xbf16, #tpu.memory_space<vmem>>, %arg2: memref<256x128xbf16, #tpu.memory_space<vmem>>, %arg3: memref<1x128xf32, #tpu.memory_space<vmem>>, %arg4: memref<8x128xf32, #tpu.memory_space<vmem>>) attributes {dimension_semantics = [#tpu.dimension_semantics<parallel>], iteration_bounds = array<i64: 1>, scalar_prefetch = 0 : i64, scratch_operands = 0 : i64, tpu.core_type = #tpu.core_type<tc>, window_params = [{transform_indices = @transform_0, window_bounds = array<i64: 8, 256>}, {pipeline_mode = #tpu.pipeline_mode<synchronous>, transform_indices = @transform_1, window_bounds = array<i64: 256, 128>}, {pipeline_mode = #tpu.pipeline_mode<synchronous>, transform_indices = @transform_2, window_bounds = array<i64: 1, 128>}, {transform_indices = @transform_3, window_bounds = array<i64: 8, 128>}]} {
    %c0 = arith.constant 0 : index
    %c0_0 = arith.constant 0 : index
    %0 = vector.load %arg1[%c0, %c0_0] : memref<8x256xbf16, #tpu.memory_space<vmem>>, vector<8x256xbf16>
    %c0_1 = arith.constant 0 : index
    %c0_2 = arith.constant 0 : index
    %1 = vector.load %arg2[%c0_1, %c0_2] : memref<256x128xbf16, #tpu.memory_space<vmem>>, vector<256x128xbf16>
    %cst = arith.constant dense<0.000000e+00> : vector<8x128xf32>
    %2 = tpu.matmul %0, %1, %cst {dimension_numbers = #tpu.dot_dimension_numbers<[1], [0], [0], [1], [0, 0, 1, 1], [], []>} : vector<8x256xbf16>, vector<256x128xbf16>, vector<8x128xf32> -> vector<8x128xf32>
    %c0_3 = arith.constant 0 : index
    %c0_4 = arith.constant 0 : index
    %3 = vector.load %arg3[%c0_3, %c0_4] : memref<1x128xf32, #tpu.memory_space<vmem>>, vector<1x128xf32>
    %4 = vector.broadcast %3 : vector<1x128xf32> to vector<8x128xf32>
    %5 = arith.addf %2, %4 : vector<8x128xf32>
    %cst_5 = arith.constant 0.000000e+00 : f32
    %6 = vector.broadcast %cst_5 : f32 to vector<8x128xf32>
    %7 = arith.maximumf %5, %6 : vector<8x128xf32>
    %c0_6 = arith.constant 0 : index
    %c0_7 = arith.constant 0 : index
    %8 = vector.load %arg4[%c0_6, %c0_7] : memref<8x128xf32, #tpu.memory_space<vmem>>, vector<8x128xf32>
    tpu.vector_store %arg4[%c0_6, %c0_7], %7 {strides = array<i32>} : memref<8x128xf32, #tpu.memory_space<vmem>>, vector<8x128xf32>,
    return
  }
  func.func @transform_0(%arg0: i32) -> (i32, i32) {
    %c0_i32 = arith.constant 0 : i32
    %c0_i32_0 = arith.constant 0 : i32
    return %arg0, %c0_i32 : i32, i32
  }
  func.func @transform_1(%arg0: i32) -> (i32, i32) {
    %c0_i32 = arith.constant 0 : i32
    %c0_i32_0 = arith.constant 0 : i32
    %c0_i32_1 = arith.constant 0 : i32
    return %c0_i32, %c0_i32_0 : i32, i32
  }
  func.func @transform_2(%arg0: i32) -> (i32, i32) {
    %c0_i32 = arith.constant 0 : i32
    %c0_i32_0 = arith.constant 0 : i32
    %c0_i32_1 = arith.constant 0 : i32
    return %c0_i32, %c0_i32_0 : i32, i32
  }
  func.func @transform_3(%arg0: i32) -> (i32, i32) {
    %c0_i32 = arith.constant 0 : i32
    %c0_i32_0 = arith.constant 0 : i32
    return %arg0, %c0_i32 : i32, i32
  }
}

module attributes {stable_mosaic.version = 11 : i64} {
  func.func @_residual_stage_kernel(%arg0: i32, %arg1: memref<2x512xf32, #tpu.memory_space<vmem>>, %arg2: memref<2x512x512xbf16, #tpu.memory_space<vmem>>, %arg3: memref<2x1x512xf32, #tpu.memory_space<vmem>>, %arg4: memref<2x512x512xbf16, #tpu.memory_space<vmem>>, %arg5: memref<2x1x512xf32, #tpu.memory_space<vmem>>, %arg6: memref<2x512xf32, #tpu.memory_space<vmem>>) attributes {dimension_semantics = [#tpu.dimension_semantics<arbitrary>], iteration_bounds = array<i64: 1>, scalar_prefetch = 0 : i64, scratch_operands = 0 : i64, tpu.core_type = #tpu.core_type<tc>, window_params = [{pipeline_mode = #tpu.pipeline_mode<synchronous>, transform_indices = @transform_0, window_bounds = array<i64: 2, 512>}, {pipeline_mode = #tpu.pipeline_mode<synchronous>, transform_indices = @transform_1, window_bounds = array<i64: 2, 512, 512>}, {pipeline_mode = #tpu.pipeline_mode<synchronous>, transform_indices = @transform_2, window_bounds = array<i64: 2, 1, 512>}, {pipeline_mode = #tpu.pipeline_mode<synchronous>, transform_indices = @transform_3, window_bounds = array<i64: 2, 512, 512>}, {pipeline_mode = #tpu.pipeline_mode<synchronous>, transform_indices = @transform_4, window_bounds = array<i64: 2, 1, 512>}, {pipeline_mode = #tpu.pipeline_mode<synchronous>, transform_indices = @transform_5, window_bounds = array<i64: 2, 512>}]} {
    %c0 = arith.constant 0 : index
    %c0_0 = arith.constant 0 : index
    %0 = vector.load %arg1[%c0, %c0_0] : memref<2x512xf32, #tpu.memory_space<vmem>>, vector<2x512xf32>
    %1 = arith.truncf %0 : vector<2x512xf32> to vector<2x512xbf16>
    %c0_1 = arith.constant 0 : index
    %c0_2 = arith.constant 0 : index
    %c0_3 = arith.constant 0 : index
    %2 = vector.load %arg2[%c0_1, %c0_2, %c0_3] : memref<2x512x512xbf16, #tpu.memory_space<vmem>>, vector<1x512x512xbf16>
    %3 = vector.shape_cast %2 : vector<1x512x512xbf16> to vector<512x512xbf16>
    %cst = arith.constant dense<0.000000e+00> : vector<2x512xf32>
    %4 = tpu.matmul %1, %3, %cst {dimension_numbers = #tpu.dot_dimension_numbers<[1], [0], [0], [1], [0, 0, 1, 1], [], []>} : vector<2x512xbf16>, vector<512x512xbf16>, vector<2x512xf32> -> vector<2x512xf32>
    %c0_4 = arith.constant 0 : index
    %c0_5 = arith.constant 0 : index
    %c0_6 = arith.constant 0 : index
    %5 = vector.load %arg3[%c0_4, %c0_5, %c0_6] : memref<2x1x512xf32, #tpu.memory_space<vmem>>, vector<1x1x512xf32>
    %6 = vector.shape_cast %5 : vector<1x1x512xf32> to vector<1x512xf32>
    %7 = vector.broadcast %6 : vector<1x512xf32> to vector<2x512xf32>
    %8 = arith.addf %4, %7 : vector<2x512xf32>
    %cst_7 = arith.constant 0.000000e+00 : f32
    %9 = vector.broadcast %cst_7 : f32 to vector<2x512xf32>
    %10 = arith.maximumf %8, %9 : vector<2x512xf32>
    %11 = arith.truncf %10 : vector<2x512xf32> to vector<2x512xbf16>
    %c0_8 = arith.constant 0 : index
    %c0_9 = arith.constant 0 : index
    %c0_10 = arith.constant 0 : index
    %12 = vector.load %arg4[%c0_8, %c0_9, %c0_10] : memref<2x512x512xbf16, #tpu.memory_space<vmem>>, vector<1x512x512xbf16>
    %13 = vector.shape_cast %12 : vector<1x512x512xbf16> to vector<512x512xbf16>
    %cst_11 = arith.constant dense<0.000000e+00> : vector<2x512xf32>
    %14 = tpu.matmul %11, %13, %cst_11 {dimension_numbers = #tpu.dot_dimension_numbers<[1], [0], [0], [1], [0, 0, 1, 1], [], []>} : vector<2x512xbf16>, vector<512x512xbf16>, vector<2x512xf32> -> vector<2x512xf32>
    %15 = arith.addf %0, %14 : vector<2x512xf32>
    %c0_12 = arith.constant 0 : index
    %c0_13 = arith.constant 0 : index
    %c0_14 = arith.constant 0 : index
    %16 = vector.load %arg5[%c0_12, %c0_13, %c0_14] : memref<2x1x512xf32, #tpu.memory_space<vmem>>, vector<1x1x512xf32>
    %17 = vector.shape_cast %16 : vector<1x1x512xf32> to vector<1x512xf32>
    %18 = vector.broadcast %17 : vector<1x512xf32> to vector<2x512xf32>
    %19 = arith.addf %15, %18 : vector<2x512xf32>
    %20 = arith.truncf %19 : vector<2x512xf32> to vector<2x512xbf16>
    %c1 = arith.constant 1 : index
    %c0_15 = arith.constant 0 : index
    %c0_16 = arith.constant 0 : index
    %21 = vector.load %arg2[%c1, %c0_15, %c0_16] : memref<2x512x512xbf16, #tpu.memory_space<vmem>>, vector<1x512x512xbf16>
    %22 = vector.shape_cast %21 : vector<1x512x512xbf16> to vector<512x512xbf16>
    %cst_17 = arith.constant dense<0.000000e+00> : vector<2x512xf32>
    %23 = tpu.matmul %20, %22, %cst_17 {dimension_numbers = #tpu.dot_dimension_numbers<[1], [0], [0], [1], [0, 0, 1, 1], [], []>} : vector<2x512xbf16>, vector<512x512xbf16>, vector<2x512xf32> -> vector<2x512xf32>
    %c1_18 = arith.constant 1 : index
    %c0_19 = arith.constant 0 : index
    %c0_20 = arith.constant 0 : index
    %24 = vector.load %arg3[%c1_18, %c0_19, %c0_20] : memref<2x1x512xf32, #tpu.memory_space<vmem>>, vector<1x1x512xf32>
    %25 = vector.shape_cast %24 : vector<1x1x512xf32> to vector<1x512xf32>
    %26 = vector.broadcast %25 : vector<1x512xf32> to vector<2x512xf32>
    %27 = arith.addf %23, %26 : vector<2x512xf32>
    %cst_21 = arith.constant 0.000000e+00 : f32
    %28 = vector.broadcast %cst_21 : f32 to vector<2x512xf32>
    %29 = arith.maximumf %27, %28 : vector<2x512xf32>
    %30 = arith.truncf %29 : vector<2x512xf32> to vector<2x512xbf16>
    %c1_22 = arith.constant 1 : index
    %c0_23 = arith.constant 0 : index
    %c0_24 = arith.constant 0 : index
    %31 = vector.load %arg4[%c1_22, %c0_23, %c0_24] : memref<2x512x512xbf16, #tpu.memory_space<vmem>>, vector<1x512x512xbf16>
    %32 = vector.shape_cast %31 : vector<1x512x512xbf16> to vector<512x512xbf16>
    %cst_25 = arith.constant dense<0.000000e+00> : vector<2x512xf32>
    %33 = tpu.matmul %30, %32, %cst_25 {dimension_numbers = #tpu.dot_dimension_numbers<[1], [0], [0], [1], [0, 0, 1, 1], [], []>} : vector<2x512xbf16>, vector<512x512xbf16>, vector<2x512xf32> -> vector<2x512xf32>
    %34 = arith.addf %19, %33 : vector<2x512xf32>
    %c1_26 = arith.constant 1 : index
    %c0_27 = arith.constant 0 : index
    %c0_28 = arith.constant 0 : index
    %35 = vector.load %arg5[%c1_26, %c0_27, %c0_28] : memref<2x1x512xf32, #tpu.memory_space<vmem>>, vector<1x1x512xf32>
    %36 = vector.shape_cast %35 : vector<1x1x512xf32> to vector<1x512xf32>
    %37 = vector.broadcast %36 : vector<1x512xf32> to vector<2x512xf32>
    %38 = arith.addf %34, %37 : vector<2x512xf32>
    %c0_29 = arith.constant 0 : index
    %c0_30 = arith.constant 0 : index
    %39 = vector.load %arg6[%c0_29, %c0_30] : memref<2x512xf32, #tpu.memory_space<vmem>>, vector<2x512xf32>
    tpu.vector_store %arg6[%c0_29, %c0_30], %38 {strides = array<i32>} : memref<2x512xf32, #tpu.memory_space<vmem>>, vector<2x512xf32>,
    return
  }
  func.func @transform_0(%arg0: i32) -> (i32, i32) {
    %c0_i32 = arith.constant 0 : i32
    %c0_i32_0 = arith.constant 0 : i32
    %c0_i32_1 = arith.constant 0 : i32
    return %c0_i32, %c0_i32_0 : i32, i32
  }
  func.func @transform_1(%arg0: i32) -> (i32, i32, i32) {
    %c0_i32 = arith.constant 0 : i32
    %c0_i32_0 = arith.constant 0 : i32
    %c0_i32_1 = arith.constant 0 : i32
    %c0_i32_2 = arith.constant 0 : i32
    return %c0_i32, %c0_i32_0, %c0_i32_1 : i32, i32, i32
  }
  func.func @transform_2(%arg0: i32) -> (i32, i32, i32) {
    %c0_i32 = arith.constant 0 : i32
    %c0_i32_0 = arith.constant 0 : i32
    %c0_i32_1 = arith.constant 0 : i32
    %c0_i32_2 = arith.constant 0 : i32
    return %c0_i32, %c0_i32_0, %c0_i32_1 : i32, i32, i32
  }
  func.func @transform_3(%arg0: i32) -> (i32, i32, i32) {
    %c0_i32 = arith.constant 0 : i32
    %c0_i32_0 = arith.constant 0 : i32
    %c0_i32_1 = arith.constant 0 : i32
    %c0_i32_2 = arith.constant 0 : i32
    return %c0_i32, %c0_i32_0, %c0_i32_1 : i32, i32, i32
  }
  func.func @transform_4(%arg0: i32) -> (i32, i32, i32) {
    %c0_i32 = arith.constant 0 : i32
    %c0_i32_0 = arith.constant 0 : i32
    %c0_i32_1 = arith.constant 0 : i32
    %c0_i32_2 = arith.constant 0 : i32
    return %c0_i32, %c0_i32_0, %c0_i32_1 : i32, i32, i32
  }
  func.func @transform_5(%arg0: i32) -> (i32, i32) {
    %c0_i32 = arith.constant 0 : i32
    %c0_i32_0 = arith.constant 0 : i32
    %c0_i32_1 = arith.constant 0 : i32
    return %c0_i32, %c0_i32_0 : i32, i32
  }
}

module attributes {stable_mosaic.version = 11 : i64} {
  func.func @_fused_matmul_kernel(%arg0: i32, %arg1: memref<8x288xbf16, #tpu.memory_space<vmem>>, %arg2: memref<288x512xbf16, #tpu.memory_space<vmem>>, %arg3: memref<1x512xf32, #tpu.memory_space<vmem>>, %arg4: memref<8x512xf32, #tpu.memory_space<vmem>>) attributes {dimension_semantics = [#tpu.dimension_semantics<parallel>], iteration_bounds = array<i64: 1>, scalar_prefetch = 0 : i64, scratch_operands = 0 : i64, tpu.core_type = #tpu.core_type<tc>, window_params = [{transform_indices = @transform_0, window_bounds = array<i64: 8, 288>}, {pipeline_mode = #tpu.pipeline_mode<synchronous>, transform_indices = @transform_1, window_bounds = array<i64: 288, 512>}, {pipeline_mode = #tpu.pipeline_mode<synchronous>, transform_indices = @transform_2, window_bounds = array<i64: 1, 512>}, {transform_indices = @transform_3, window_bounds = array<i64: 8, 512>}]} {
    %c0 = arith.constant 0 : index
    %c0_0 = arith.constant 0 : index
    %0 = vector.load %arg1[%c0, %c0_0] : memref<8x288xbf16, #tpu.memory_space<vmem>>, vector<8x288xbf16>
    %c0_1 = arith.constant 0 : index
    %c0_2 = arith.constant 0 : index
    %1 = vector.load %arg2[%c0_1, %c0_2] : memref<288x512xbf16, #tpu.memory_space<vmem>>, vector<288x512xbf16>
    %cst = arith.constant dense<0.000000e+00> : vector<8x512xf32>
    %2 = tpu.matmul %0, %1, %cst {dimension_numbers = #tpu.dot_dimension_numbers<[1], [0], [0], [1], [0, 0, 1, 1], [], []>} : vector<8x288xbf16>, vector<288x512xbf16>, vector<8x512xf32> -> vector<8x512xf32>
    %c0_3 = arith.constant 0 : index
    %c0_4 = arith.constant 0 : index
    %3 = vector.load %arg3[%c0_3, %c0_4] : memref<1x512xf32, #tpu.memory_space<vmem>>, vector<1x512xf32>
    %4 = vector.broadcast %3 : vector<1x512xf32> to vector<8x512xf32>
    %5 = arith.addf %2, %4 : vector<8x512xf32>
    %cst_5 = arith.constant 0.000000e+00 : f32
    %6 = vector.broadcast %cst_5 : f32 to vector<8x512xf32>
    %7 = arith.maximumf %5, %6 : vector<8x512xf32>
    %c0_6 = arith.constant 0 : index
    %c0_7 = arith.constant 0 : index
    %8 = vector.load %arg4[%c0_6, %c0_7] : memref<8x512xf32, #tpu.memory_space<vmem>>, vector<8x512xf32>
    tpu.vector_store %arg4[%c0_6, %c0_7], %7 {strides = array<i32>} : memref<8x512xf32, #tpu.memory_space<vmem>>, vector<8x512xf32>,
    return
  }
  func.func @transform_0(%arg0: i32) -> (i32, i32) {
    %c0_i32 = arith.constant 0 : i32
    %c0_i32_0 = arith.constant 0 : i32
    return %arg0, %c0_i32 : i32, i32
  }
  func.func @transform_1(%arg0: i32) -> (i32, i32) {
    %c0_i32 = arith.constant 0 : i32
    %c0_i32_0 = arith.constant 0 : i32
    %c0_i32_1 = arith.constant 0 : i32
    return %c0_i32, %c0_i32_0 : i32, i32
  }
  func.func @transform_2(%arg0: i32) -> (i32, i32) {
    %c0_i32 = arith.constant 0 : i32
    %c0_i32_0 = arith.constant 0 : i32
    %c0_i32_1 = arith.constant 0 : i32
    return %c0_i32, %c0_i32_0 : i32, i32
  }
  func.func @transform_3(%arg0: i32) -> (i32, i32) {
    %c0_i32 = arith.constant 0 : i32
    %c0_i32_0 = arith.constant 0 : i32
    return %arg0, %c0_i32 : i32, i32
  }
}

module attributes {stable_mosaic.version = 11 : i64} {
  func.func @_fused_matmul_kernel(%arg0: i32, %arg1: memref<32x144xbf16, #tpu.memory_space<vmem>>, %arg2: memref<144x512xbf16, #tpu.memory_space<vmem>>, %arg3: memref<1x512xf32, #tpu.memory_space<vmem>>, %arg4: memref<32x512xf32, #tpu.memory_space<vmem>>) attributes {dimension_semantics = [#tpu.dimension_semantics<parallel>], iteration_bounds = array<i64: 1>, scalar_prefetch = 0 : i64, scratch_operands = 0 : i64, tpu.core_type = #tpu.core_type<tc>, window_params = [{transform_indices = @transform_0, window_bounds = array<i64: 32, 144>}, {pipeline_mode = #tpu.pipeline_mode<synchronous>, transform_indices = @transform_1, window_bounds = array<i64: 144, 512>}, {pipeline_mode = #tpu.pipeline_mode<synchronous>, transform_indices = @transform_2, window_bounds = array<i64: 1, 512>}, {transform_indices = @transform_3, window_bounds = array<i64: 32, 512>}]} {
    %c0 = arith.constant 0 : index
    %c0_0 = arith.constant 0 : index
    %0 = vector.load %arg1[%c0, %c0_0] : memref<32x144xbf16, #tpu.memory_space<vmem>>, vector<32x144xbf16>
    %c0_1 = arith.constant 0 : index
    %c0_2 = arith.constant 0 : index
    %1 = vector.load %arg2[%c0_1, %c0_2] : memref<144x512xbf16, #tpu.memory_space<vmem>>, vector<144x512xbf16>
    %cst = arith.constant dense<0.000000e+00> : vector<32x512xf32>
    %2 = tpu.matmul %0, %1, %cst {dimension_numbers = #tpu.dot_dimension_numbers<[1], [0], [0], [1], [0, 0, 1, 1], [], []>} : vector<32x144xbf16>, vector<144x512xbf16>, vector<32x512xf32> -> vector<32x512xf32>
    %c0_3 = arith.constant 0 : index
    %c0_4 = arith.constant 0 : index
    %3 = vector.load %arg3[%c0_3, %c0_4] : memref<1x512xf32, #tpu.memory_space<vmem>>, vector<1x512xf32>
    %4 = vector.broadcast %3 : vector<1x512xf32> to vector<32x512xf32>
    %5 = arith.addf %2, %4 : vector<32x512xf32>
    %cst_5 = arith.constant 0.000000e+00 : f32
    %6 = vector.broadcast %cst_5 : f32 to vector<32x512xf32>
    %7 = arith.maximumf %5, %6 : vector<32x512xf32>
    %c0_6 = arith.constant 0 : index
    %c0_7 = arith.constant 0 : index
    %8 = vector.load %arg4[%c0_6, %c0_7] : memref<32x512xf32, #tpu.memory_space<vmem>>, vector<32x512xf32>
    tpu.vector_store %arg4[%c0_6, %c0_7], %7 {strides = array<i32>} : memref<32x512xf32, #tpu.memory_space<vmem>>, vector<32x512xf32>,
    return
  }
  func.func @transform_0(%arg0: i32) -> (i32, i32) {
    %c0_i32 = arith.constant 0 : i32
    %c0_i32_0 = arith.constant 0 : i32
    return %arg0, %c0_i32 : i32, i32
  }
  func.func @transform_1(%arg0: i32) -> (i32, i32) {
    %c0_i32 = arith.constant 0 : i32
    %c0_i32_0 = arith.constant 0 : i32
    %c0_i32_1 = arith.constant 0 : i32
    return %c0_i32, %c0_i32_0 : i32, i32
  }
  func.func @transform_2(%arg0: i32) -> (i32, i32) {
    %c0_i32 = arith.constant 0 : i32
    %c0_i32_0 = arith.constant 0 : i32
    %c0_i32_1 = arith.constant 0 : i32
    return %c0_i32, %c0_i32_0 : i32, i32
  }
  func.func @transform_3(%arg0: i32) -> (i32, i32) {
    %c0_i32 = arith.constant 0 : i32
    %c0_i32_0 = arith.constant 0 : i32
    return %arg0, %c0_i32 : i32, i32
  }
}

module attributes {stable_mosaic.version = 11 : i64} {
  func.func @_fused_matmul_kernel(%arg0: i32, %arg1: memref<128x72xbf16, #tpu.memory_space<vmem>>, %arg2: memref<72x512xbf16, #tpu.memory_space<vmem>>, %arg3: memref<1x512xf32, #tpu.memory_space<vmem>>, %arg4: memref<128x512xf32, #tpu.memory_space<vmem>>) attributes {dimension_semantics = [#tpu.dimension_semantics<parallel>], iteration_bounds = array<i64: 1>, scalar_prefetch = 0 : i64, scratch_operands = 0 : i64, tpu.core_type = #tpu.core_type<tc>, window_params = [{transform_indices = @transform_0, window_bounds = array<i64: 128, 72>}, {pipeline_mode = #tpu.pipeline_mode<synchronous>, transform_indices = @transform_1, window_bounds = array<i64: 72, 512>}, {pipeline_mode = #tpu.pipeline_mode<synchronous>, transform_indices = @transform_2, window_bounds = array<i64: 1, 512>}, {transform_indices = @transform_3, window_bounds = array<i64: 128, 512>}]} {
    %c0 = arith.constant 0 : index
    %c0_0 = arith.constant 0 : index
    %0 = vector.load %arg1[%c0, %c0_0] : memref<128x72xbf16, #tpu.memory_space<vmem>>, vector<128x72xbf16>
    %c0_1 = arith.constant 0 : index
    %c0_2 = arith.constant 0 : index
    %1 = vector.load %arg2[%c0_1, %c0_2] : memref<72x512xbf16, #tpu.memory_space<vmem>>, vector<72x512xbf16>
    %cst = arith.constant dense<0.000000e+00> : vector<128x512xf32>
    %2 = tpu.matmul %0, %1, %cst {dimension_numbers = #tpu.dot_dimension_numbers<[1], [0], [0], [1], [0, 0, 1, 1], [], []>} : vector<128x72xbf16>, vector<72x512xbf16>, vector<128x512xf32> -> vector<128x512xf32>
    %c0_3 = arith.constant 0 : index
    %c0_4 = arith.constant 0 : index
    %3 = vector.load %arg3[%c0_3, %c0_4] : memref<1x512xf32, #tpu.memory_space<vmem>>, vector<1x512xf32>
    %4 = vector.broadcast %3 : vector<1x512xf32> to vector<128x512xf32>
    %5 = arith.addf %2, %4 : vector<128x512xf32>
    %6 = math.tanh %5 : vector<128x512xf32>
    %c0_5 = arith.constant 0 : index
    %c0_6 = arith.constant 0 : index
    %7 = vector.load %arg4[%c0_5, %c0_6] : memref<128x512xf32, #tpu.memory_space<vmem>>, vector<128x512xf32>
    tpu.vector_store %arg4[%c0_5, %c0_6], %6 {strides = array<i32>} : memref<128x512xf32, #tpu.memory_space<vmem>>, vector<128x512xf32>,
    return
  }
  func.func @transform_0(%arg0: i32) -> (i32, i32) {
    %c0_i32 = arith.constant 0 : i32
    %c0_i32_0 = arith.constant 0 : i32
    return %arg0, %c0_i32 : i32, i32
  }
  func.func @transform_1(%arg0: i32) -> (i32, i32) {
    %c0_i32 = arith.constant 0 : i32
    %c0_i32_0 = arith.constant 0 : i32
    %c0_i32_1 = arith.constant 0 : i32
    return %c0_i32, %c0_i32_0 : i32, i32
  }
  func.func @transform_2(%arg0: i32) -> (i32, i32) {
    %c0_i32 = arith.constant 0 : i32
    %c0_i32_0 = arith.constant 0 : i32
    %c0_i32_1 = arith.constant 0 : i32
    return %c0_i32, %c0_i32_0 : i32, i32
  }
  func.func @transform_3(%arg0: i32) -> (i32, i32) {
    %c0_i32 = arith.constant 0 : i32
    %c0_i32_0 = arith.constant 0 : i32
    return %arg0, %c0_i32 : i32, i32
  }
}

</mosaic_0001>

<llo_original>
// kernel: generator_forward.7
$region0: #{generator_forward.7}
  #allocation0 [shape = 'u32[]', space=smem, size = 0x4, offset = 0x4, fixed_abs, tag = 'smem constant byte address 0x4 - core index']
  #allocation1 [shape = 'u32[144,128]{1,0:T(1,128)}', space=vmem, size = 0x12000, scoped, tag = 'internal scratch']
  %s0 = inlined_call_operand.vmem [shape: bf16[128,48], index: 0, kind: input, shape index: {}]
  %s1 = inlined_call_operand.vmem [shape: bf16[48,128], index: 1, kind: input, shape index: {}]
  %s2 = inlined_call_operand.vmem [shape: f32[1,128], index: 2, kind: input, shape index: {}]
  %s3 = inlined_call_operand.vmem [shape: f32[128,128], index: 3, kind: output, shape index: {}]
  %s4 = sld [smem:[#allocation0]]
  $region22: #{generator_forward.7} parent=0
    _
  %s6 = ssub.s32 1, %s4
  %s7 = scalar_select 0, %s6, %s4
  // Predicated region
  $region2: #{generator_forward.7} parent=0 // pred_check
    _
  $region3: #{generator_forward.7} parent=0 // pred_check_branch
    %9 = sbr.rel (0) target = $region5
  $region4: #{generator_forward.7} parent=0 // pred_region
    _
  $region5: #{generator_forward.7} parent=0 // pred_fallthru
    _
  // Predicated region
  $region6: #{generator_forward.7} parent=0 // pred_check
    _
  $region7: #{generator_forward.7} parent=0 // pred_check_branch
    %11 = sbr.rel (0) target = $region9
  $region8: #{generator_forward.7} parent=0 // pred_region
    _
  $region9: #{generator_forward.7} parent=0 // pred_fallthru
    _
  // Predicated region
  $region10: #{generator_forward.7} parent=0 // pred_check
    _
  $region11: #{generator_forward.7} parent=0 // pred_check_branch
    %13 = sbr.rel (0) target = $region13
  $region12: #{generator_forward.7} parent=0 // pred_region
    _
  $region13: #{generator_forward.7} parent=0 // pred_fallthru
    _
  %v15 = vld [vmem:[%s0] sm:$0xf]
  %v16 = vld [vmem:[%s0 + $0x4] sm:$0xf]
  %v17 = vld [vmem:[%s0 + $0x8] sm:$0xf]
  %v18 = vld [vmem:[%s0 + $0xc] sm:$0xf]
  %v19 = vld [vmem:[%s0 + $0x10] sm:$0xf]
  %v20 = vld [vmem:[%s0 + $0x14] sm:$0xf]
  %v21 = vld [vmem:[%s0 + $0x18] sm:$0xf]
  %v22 = vld [vmem:[%s0 + $0x1c] sm:$0xf]
  %v23 = vld [vmem:[%s0 + $0x20] sm:$0xf]
  %v24 = vld [vmem:[%s0 + $0x24] sm:$0xf]
  %v25 = vld [vmem:[%s0 + $0x28] sm:$0xf]
  %v26 = vld [vmem:[%s0 + $0x2c] sm:$0xf]
  %v27 = vld [vmem:[%s0 + $0x30] sm:$0xf]
  %v28 = vld [vmem:[%s0 + $0x34] sm:$0xf]
  %v29 = vld [vmem:[%s0 + $0x38] sm:$0xf]
  %v30 = vld [vmem:[%s0 + $0x3c] sm:$0xf]
  %v31 = vld [vmem:[%s1] sm:$0xf]
  %v32 = vld [vmem:[%s1 + $0x4] sm:$0xf]
  %v33 = vld [vmem:[%s1 + $0x8] sm:$0xf]
  %v34 = vld [vmem:[%s1 + $0xc] sm:$0xf]
  %v35 = vld [vmem:[%s1 + $0x10] sm:$0xf]
  %v36 = vld [vmem:[%s1 + $0x14] sm:$0xf]
  %v37 = vld [vmem:[%s2] sm:$0x1]
  %v39 = vlaneseq
  %v40 = vshrl.u32 %v39, 7
  %v41 = vsub.s32 0, %v40
  %v42 = vrot.slane %v37, %v41
  %v60 = vunpack.c.l.b16 %v15
  %v61 = vunpack.c.l.b16 %v16
  %v62 = vunpack.c.l.b16 %v17
  %v63 = vunpack.c.l.b16 %v18
  %v64 = vunpack.c.l.b16 %v19
  %v65 = vunpack.c.l.b16 %v20
  %v66 = vunpack.c.l.b16 %v21
  %v67 = vunpack.c.l.b16 %v22
  %v68 = vunpack.c.l.b16 %v23
  %v69 = vunpack.c.l.b16 %v24
  %v70 = vunpack.c.l.b16 %v25
  %v71 = vunpack.c.l.b16 %v26
  %v72 = vunpack.c.l.b16 %v27
  %v73 = vunpack.c.l.b16 %v28
  %v74 = vunpack.c.l.b16 %v29
  %v75 = vunpack.c.l.b16 %v30
  %v76 = vpack.c.b16 %v61, %v60
  %v77 = vpack.c.b16 %v63, %v62
  %v78 = vpack.c.b16 %v65, %v64
  %v79 = vpack.c.b16 %v67, %v66
  %v80 = vpack.c.b16 %v69, %v68
  %v81 = vpack.c.b16 %v71, %v70
  %v82 = vpack.c.b16 %v73, %v72
  %v83 = vpack.c.b16 %v75, %v74
  %v90 = vunpack.c.l.b16 %v31
  %v91 = vunpack.c.l.b16 %v32
  %v92 = vunpack.c.l.b16 %v33
  %v93 = vunpack.c.l.b16 %v34
  %v94 = vunpack.c.l.b16 %v35
  %v95 = vunpack.c.l.b16 %v36
  %v96 = vpack.c.b16 %v91, %v90
  %v97 = vpack.c.b16 %v93, %v92
  %v98 = vpack.c.b16 %v95, %v94
  %vm102 = vcmask 392192
  %v104 = vsel %vm102, %v76, 0
  %v107 = vsel %vm102, %v77, 0
  %v110 = vsel %vm102, %v78, 0
  %v113 = vsel %vm102, %v79, 0
  %v116 = vsel %vm102, %v80, 0
  %v119 = vsel %vm102, %v81, 0
  %v122 = vsel %vm102, %v82, 0
  %v125 = vsel %vm102, %v83, 0
  %127 = vmatprep.subr.bf16.mxu0 0
  %128 = vmatpush1.bf16.msra.mxu0 %v96
  %129 = vmatprep.subr.bf16.mxu0 0
  %130 = vmatpush1.bf16.msra.mxu0 %v97
  %131 = vmatprep.subr.bf16.mxu0 0
  %132 = vmatpush1.bf16.msra.mxu0 %v98
  %133 = vmatprep.subr.bf16.mxu0 0
  %134 = vmatpush1.bf16.msra.mxu0 0
  %135 = vmatprep.subr.bf16.mxu0 0
  %136 = vmatpush1.bf16.msra.mxu0 0
  %137 = vmatprep.subr.bf16.mxu0 0
  %138 = vmatpush1.bf16.msra.mxu0 0
  %139 = vmatprep.subr.bf16.mxu0 0
  %140 = vmatpush1.bf16.msra.mxu0 0
  %141 = vmatprep.subr.bf16.mxu0 0
  %142 = vmatpush1.bf16.msra.mxu0 0
  %143 = vmatprep.subr.bf16.mxu0 0
  %144 = vmatpush1.bf16.msra.mxu0 0
  %145 = vmatprep.subr.bf16.mxu0 0
  %146 = vmatpush1.bf16.msra.mxu0 0
  %147 = vmatprep.subr.bf16.mxu0 0
  %148 = vmatpush1.bf16.msra.mxu0 0
  %149 = vmatprep.subr.bf16.mxu0 0
  %150 = vmatpush1.bf16.msra.mxu0 0
  %151 = vmatprep.subr.bf16.mxu0 0
  %152 = vmatpush1.bf16.msra.mxu0 0
  %153 = vmatprep.subr.bf16.mxu0 0
  %154 = vmatpush1.bf16.msra.mxu0 0
  %155 = vmatprep.subr.bf16.mxu0 0
  %156 = vmatpush1.bf16.msra.mxu0 0
  %157 = vmatprep.subr.bf16.mxu0 0
  %158 = vmatpush1.bf16.msra.mxu0 0
  %159 = vmatprep.mubr.bf16.mxu0 0
  %160 = vmatmul.mubr.bf16.gmra.mrb[0].mxu0 %v104
  %v161 = vpop.f32.mrb[0].mxu0
  %v162 = vadd.f32 %v42, %v161
  %v163 = vpop.f32.mrb[0].mxu0
  %v164 = vpop.f32.mrb[0].mxu0
  %v165 = vadd.f32 %v42, %v164
  %v166 = vpop.f32.mrb[0].mxu0
  %167 = vmatprep.mubr.bf16.mxu0 0
  %168 = vmatmul.mubr.bf16.gmra.mrb[0].mxu0 %v107
  %v169 = vpop.f32.mrb[0].mxu0
  %v170 = vadd.f32 %v42, %v169
  %v171 = vpop.f32.mrb[0].mxu0
  %v172 = vpop.f32.mrb[0].mxu0
  %v173 = vadd.f32 %v42, %v172
  %v174 = vpop.f32.mrb[0].mxu0
  %175 = vmatprep.mubr.bf16.mxu0 0
  %176 = vmatmul.mubr.bf16.gmra.mrb[0].mxu0 %v110
  %v177 = vpop.f32.mrb[0].mxu0
  %v178 = vadd.f32 %v42, %v177
  %v179 = vpop.f32.mrb[0].mxu0
  %v180 = vpop.f32.mrb[0].mxu0
  %v181 = vadd.f32 %v42, %v180
  %v182 = vpop.f32.mrb[0].mxu0
  %183 = vmatprep.mubr.bf16.mxu0 0
  %184 = vmatmul.mubr.bf16.gmra.mrb[0].mxu0 %v113
  %v185 = vpop.f32.mrb[0].mxu0
  %v186 = vadd.f32 %v42, %v185
  %v187 = vpop.f32.mrb[0].mxu0
  %v188 = vpop.f32.mrb[0].mxu0
  %v189 = vadd.f32 %v42, %v188
  %v190 = vpop.f32.mrb[0].mxu0
  %191 = vmatprep.mubr.bf16.mxu0 0
  %192 = vmatmul.mubr.bf16.gmra.mrb[0].mxu0 %v116
  %v193 = vpop.f32.mrb[0].mxu0
  %v194 = vadd.f32 %v42, %v193
  %v195 = vpop.f32.mrb[0].mxu0
  %v196 = vpop.f32.mrb[0].mxu0
  %v197 = vadd.f32 %v42, %v196
  %v198 = vpop.f32.mrb[0].mxu0
  %199 = vmatprep.mubr.bf16.mxu0 0
  %200 = vmatmul.mubr.bf16.gmra.mrb[0].mxu0 %v119
  %v201 = vpop.f32.mrb[0].mxu0
  %v202 = vadd.f32 %v42, %v201
  %v203 = vpop.f32.mrb[0].mxu0
  %v204 = vpop.f32.mrb[0].mxu0
  %v205 = vadd.f32 %v42, %v204
  %v206 = vpop.f32.mrb[0].mxu0
  %207 = vmatprep.mubr.bf16.mxu0 0
  %208 = vmatmul.mubr.bf16.gmra.mrb[0].mxu0 %v122
  %v209 = vpop.f32.mrb[0].mxu0
  %v210 = vadd.f32 %v42, %v209
  %v211 = vpop.f32.mrb[0].mxu0
  %v212 = vpop.f32.mrb[0].mxu0
  %v213 = vadd.f32 %v42, %v212
  %v214 = vpop.f32.mrb[0].mxu0
  %215 = vmatprep.mubr.bf16.mxu0 0
  %216 = vmatmul.mubr.bf16.gmra.mrb[0].mxu0 %v125
  %v217 = vpop.f32.mrb[0].mxu0
  %v218 = vadd.f32 %v42, %v217
  %v219 = vpop.f32.mrb[0].mxu0
  %v220 = vpop.f32.mrb[0].mxu0
  %v221 = vadd.f32 %v42, %v220
  %v222 = vpop.f32.mrb[0].mxu0
  %223 = vdwg.mxu0
  %v224 = vmax.f32 %v162, 0.0
  %v225 = vmax.f32 %v165, 0.0
  %v226 = vmax.f32 %v170, 0.0
  %v227 = vmax.f32 %v173, 0.0
  %v228 = vmax.f32 %v178, 0.0
  %v229 = vmax.f32 %v181, 0.0
  %v230 = vmax.f32 %v186, 0.0
  %v231 = vmax.f32 %v189, 0.0
  %v232 = vmax.f32 %v194, 0.0
  %v233 = vmax.f32 %v197, 0.0
  %v234 = vmax.f32 %v202, 0.0
  %v235 = vmax.f32 %v205, 0.0
  %v236 = vmax.f32 %v210, 0.0
  %v237 = vmax.f32 %v213, 0.0
  %v238 = vmax.f32 %v218, 0.0
  %v239 = vmax.f32 %v221, 0.0
  %240 = vst [vmem:[%s3] sm:$0xff] %v224
  %241 = vst [vmem:[%s3 + $0x8] sm:$0xff] %v225
  %242 = vst [vmem:[%s3 + $0x10] sm:$0xff] %v226
  %243 = vst [vmem:[%s3 + $0x18] sm:$0xff] %v227
  %244 = vst [vmem:[%s3 + $0x20] sm:$0xff] %v228
  %245 = vst [vmem:[%s3 + $0x28] sm:$0xff] %v229
  %246 = vst [vmem:[%s3 + $0x30] sm:$0xff] %v230
  %247 = vst [vmem:[%s3 + $0x38] sm:$0xff] %v231
  %248 = vst [vmem:[%s3 + $0x40] sm:$0xff] %v232
  %249 = vst [vmem:[%s3 + $0x48] sm:$0xff] %v233
  %250 = vst [vmem:[%s3 + $0x50] sm:$0xff] %v234
  %251 = vst [vmem:[%s3 + $0x58] sm:$0xff] %v235
  %252 = vst [vmem:[%s3 + $0x60] sm:$0xff] %v236
  %253 = vst [vmem:[%s3 + $0x68] sm:$0xff] %v237
  %254 = vst [vmem:[%s3 + $0x70] sm:$0xff] %v238
  %255 = vst [vmem:[%s3 + $0x78] sm:$0xff] %v239
  // Predicated region
  $region14: #{generator_forward.7} parent=0 // pred_check
    _
  $region15: #{generator_forward.7} parent=0 // pred_check_branch
    %257 = sbr.rel (0) target = $region17
  $region16: #{generator_forward.7} parent=0 // pred_region
    _
  $region17: #{generator_forward.7} parent=0 // pred_fallthru
    _
  // Predicated region
  $region18: #{generator_forward.7} parent=0 // pred_check
    _
  $region19: #{generator_forward.7} parent=0 // pred_check_branch
    %259 = sbr.rel (0) target = $region21
  $region20: #{generator_forward.7} parent=0 // pred_region
    _
  $region21: #{generator_forward.7} parent=0 // pred_fallthru
    _

// kernel: generator_forward.8
$region0: #{generator_forward.8}
  #allocation0 [shape = 'u32[]', space=smem, size = 0x4, offset = 0x4, fixed_abs, tag = 'smem constant byte address 0x4 - core index']
  #allocation1 [shape = 'u32[144,128]{1,0:T(1,128)}', space=vmem, size = 0x12000, scoped, tag = 'internal scratch']
  %s0 = inlined_call_operand.vmem [shape: bf16[32,128], index: 0, kind: input, shape index: {}]
  %s1 = inlined_call_operand.vmem [shape: bf16[128,128], index: 1, kind: input, shape index: {}]
  %s2 = inlined_call_operand.vmem [shape: f32[1,128], index: 2, kind: input, shape index: {}]
  %s3 = inlined_call_operand.vmem [shape: f32[32,128], index: 3, kind: output, shape index: {}]
  %s4 = sld [smem:[#allocation0]]
  $region22: #{generator_forward.8} parent=0
    _
  %s6 = ssub.s32 1, %s4
  %s7 = scalar_select 0, %s6, %s4
  // Predicated region
  $region2: #{generator_forward.8} parent=0 // pred_check
    _
  $region3: #{generator_forward.8} parent=0 // pred_check_branch
    %9 = sbr.rel (0) target = $region5
  $region4: #{generator_forward.8} parent=0 // pred_region
    _
  $region5: #{generator_forward.8} parent=0 // pred_fallthru
    _
  // Predicated region
  $region6: #{generator_forward.8} parent=0 // pred_check
    _
  $region7: #{generator_forward.8} parent=0 // pred_check_branch
    %11 = sbr.rel (0) target = $region9
  $region8: #{generator_forward.8} parent=0 // pred_region
    _
  $region9: #{generator_forward.8} parent=0 // pred_fallthru
    _
  // Predicated region
  $region10: #{generator_forward.8} parent=0 // pred_check
    _
  $region11: #{generator_forward.8} parent=0 // pred_check_branch
    %13 = sbr.rel (0) target = $region13
  $region12: #{generator_forward.8} parent=0 // pred_region
    _
  $region13: #{generator_forward.8} parent=0 // pred_fallthru
    _
  %v15 = vld [vmem:[%s0] sm:$0xf]
  %v16 = vld [vmem:[%s0 + $0x4] sm:$0xf]
  %v17 = vld [vmem:[%s0 + $0x8] sm:$0xf]
  %v18 = vld [vmem:[%s0 + $0xc] sm:$0xf]
  %v19 = vld [vmem:[%s1] sm:$0xf]
  %v20 = vld [vmem:[%s1 + $0x4] sm:$0xf]
  %v21 = vld [vmem:[%s1 + $0x8] sm:$0xf]
  %v22 = vld [vmem:[%s1 + $0xc] sm:$0xf]
  %v23 = vld [vmem:[%s1 + $0x10] sm:$0xf]
  %v24 = vld [vmem:[%s1 + $0x14] sm:$0xf]
  %v25 = vld [vmem:[%s1 + $0x18] sm:$0xf]
  %v26 = vld [vmem:[%s1 + $0x1c] sm:$0xf]
  %v27 = vld [vmem:[%s1 + $0x20] sm:$0xf]
  %v28 = vld [vmem:[%s1 + $0x24] sm:$0xf]
  %v29 = vld [vmem:[%s1 + $0x28] sm:$0xf]
  %v30 = vld [vmem:[%s1 + $0x2c] sm:$0xf]
  %v31 = vld [vmem:[%s1 + $0x30] sm:$0xf]
  %v32 = vld [vmem:[%s1 + $0x34] sm:$0xf]
  %v33 = vld [vmem:[%s1 + $0x38] sm:$0xf]
  %v34 = vld [vmem:[%s1 + $0x3c] sm:$0xf]
  %v35 = vld [vmem:[%s2] sm:$0x1]
  %v37 = vlaneseq
  %v38 = vshrl.u32 %v37, 7
  %v39 = vsub.s32 0, %v38
  %v40 = vrot.slane %v35, %v39
  %v46 = vunpack.c.l.b16 %v15
  %v47 = vunpack.c.l.b16 %v16
  %v48 = vunpack.c.l.b16 %v17
  %v49 = vunpack.c.l.b16 %v18
  %v50 = vpack.c.b16 %v47, %v46
  %v51 = vpack.c.b16 %v49, %v48
  %v70 = vunpack.c.l.b16 %v19
  %v71 = vunpack.c.l.b16 %v20
  %v72 = vunpack.c.l.b16 %v21
  %v73 = vunpack.c.l.b16 %v22
  %v74 = vunpack.c.l.b16 %v23
  %v75 = vunpack.c.l.b16 %v24
  %v76 = vunpack.c.l.b16 %v25
  %v77 = vunpack.c.l.b16 %v26
  %v78 = vunpack.c.l.b16 %v27
  %v79 = vunpack.c.l.b16 %v28
  %v80 = vunpack.c.l.b16 %v29
  %v81 = vunpack.c.l.b16 %v30
  %v82 = vunpack.c.l.b16 %v31
  %v83 = vunpack.c.l.b16 %v32
  %v84 = vunpack.c.l.b16 %v33
  %v85 = vunpack.c.l.b16 %v34
  %v86 = vpack.c.b16 %v71, %v70
  %v87 = vpack.c.b16 %v73, %v72
  %v88 = vpack.c.b16 %v75, %v74
  %v89 = vpack.c.b16 %v77, %v76
  %v90 = vpack.c.b16 %v79, %v78
  %v91 = vpack.c.b16 %v81, %v80
  %v92 = vpack.c.b16 %v83, %v82
  %v93 = vpack.c.b16 %v85, %v84
  %102 = vmatprep.subr.bf16.mxu0 0
  %103 = vmatpush1.bf16.msra.mxu0 %v86
  %104 = vmatprep.subr.bf16.mxu0 0
  %105 = vmatpush1.bf16.msra.mxu0 %v87
  %106 = vmatprep.subr.bf16.mxu0 0
  %107 = vmatpush1.bf16.msra.mxu0 %v88
  %108 = vmatprep.subr.bf16.mxu0 0
  %109 = vmatpush1.bf16.msra.mxu0 %v89
  %110 = vmatprep.subr.bf16.mxu0 0
  %111 = vmatpush1.bf16.msra.mxu0 %v90
  %112 = vmatprep.subr.bf16.mxu0 0
  %113 = vmatpush1.bf16.msra.mxu0 %v91
  %114 = vmatprep.subr.bf16.mxu0 0
  %115 = vmatpush1.bf16.msra.mxu0 %v92
  %116 = vmatprep.subr.bf16.mxu0 0
  %117 = vmatpush1.bf16.msra.mxu0 %v93
  %118 = vmatprep.subr.bf16.mxu0 0
  %119 = vmatpush1.bf16.msra.mxu0 0
  %120 = vmatprep.subr.bf16.mxu0 0
  %121 = vmatpush1.bf16.msra.mxu0 0
  %122 = vmatprep.subr.bf16.mxu0 0
  %123 = vmatpush1.bf16.msra.mxu0 0
  %124 = vmatprep.subr.bf16.mxu0 0
  %125 = vmatpush1.bf16.msra.mxu0 0
  %126 = vmatprep.subr.bf16.mxu0 0
  %127 = vmatpush1.bf16.msra.mxu0 0
  %128 = vmatprep.subr.bf16.mxu0 0
  %129 = vmatpush1.bf16.msra.mxu0 0
  %130 = vmatprep.subr.bf16.mxu0 0
  %131 = vmatpush1.bf16.msra.mxu0 0
  %132 = vmatprep.subr.bf16.mxu0 0
  %133 = vmatpush1.bf16.msra.mxu0 0
  %134 = vmatprep.mubr.bf16.mxu0 0
  %135 = vmatmul.mubr.bf16.gmra.mrb[0].mxu0 %v50
  %v136 = vpop.f32.mrb[0].mxu0
  %v137 = vadd.f32 %v40, %v136
  %v138 = vpop.f32.mrb[0].mxu0
  %v139 = vpop.f32.mrb[0].mxu0
  %v140 = vadd.f32 %v40, %v139
  %v141 = vpop.f32.mrb[0].mxu0
  %142 = vmatprep.mubr.bf16.mxu0 0
  %143 = vmatmul.mubr.bf16.gmra.mrb[0].mxu0 %v51
  %v144 = vpop.f32.mrb[0].mxu0
  %v145 = vadd.f32 %v40, %v144
  %v146 = vpop.f32.mrb[0].mxu0
  %v147 = vpop.f32.mrb[0].mxu0
  %v148 = vadd.f32 %v40, %v147
  %v149 = vpop.f32.mrb[0].mxu0
  %150 = vdwg.mxu0
  %v151 = vmax.f32 %v137, 0.0
  %v152 = vmax.f32 %v140, 0.0
  %v153 = vmax.f32 %v145, 0.0
  %v154 = vmax.f32 %v148, 0.0
  %155 = vst [vmem:[%s3] sm:$0xff] %v151
  %156 = vst [vmem:[%s3 + $0x8] sm:$0xff] %v152
  %157 = vst [vmem:[%s3 + $0x10] sm:$0xff] %v153
  %158 = vst [vmem:[%s3 + $0x18] sm:$0xff] %v154
  // Predicated region
  $region14: #{generator_forward.8} parent=0 // pred_check
    _
  $region15: #{generator_forward.8} parent=0 // pred_check_branch
    %160 = sbr.rel (0) target = $region17
  $region16: #{generator_forward.8} parent=0 // pred_region
    _
  $region17: #{generator_forward.8} parent=0 // pred_fallthru
    _
  // Predicated region
  $region18: #{generator_forward.8} parent=0 // pred_check
    _
  $region19: #{generator_forward.8} parent=0 // pred_check_branch
    %162 = sbr.rel (0) target = $region21
  $region20: #{generator_forward.8} parent=0 // pred_region
    _
  $region21: #{generator_forward.8} parent=0 // pred_fallthru
    _

// kernel: generator_forward.9
$region0: #{generator_forward.9}
  #allocation0 [shape = 'u32[]', space=smem, size = 0x4, offset = 0x4, fixed_abs, tag = 'smem constant byte address 0x4 - core index']
  #allocation1 [shape = 'u32[144,128]{1,0:T(1,128)}', space=vmem, size = 0x12000, scoped, tag = 'internal scratch']
  %s0 = inlined_call_operand.vmem [shape: bf16[8,256], index: 0, kind: input, shape index: {}]
  %s1 = inlined_call_operand.vmem [shape: bf16[256,128], index: 1, kind: input, shape index: {}]
  %s2 = inlined_call_operand.vmem [shape: f32[1,128], index: 2, kind: input, shape index: {}]
  %s3 = inlined_call_operand.vmem [shape: f32[8,128], index: 3, kind: output, shape index: {}]
  %s4 = sld [smem:[#allocation0]]
  $region22: #{generator_forward.9} parent=0
    _
  %s6 = ssub.s32 1, %s4
  %s7 = scalar_select 0, %s6, %s4
  // Predicated region
  $region2: #{generator_forward.9} parent=0 // pred_check
    _
  $region3: #{generator_forward.9} parent=0 // pred_check_branch
    %9 = sbr.rel (0) target = $region5
  $region4: #{generator_forward.9} parent=0 // pred_region
    _
  $region5: #{generator_forward.9} parent=0 // pred_fallthru
    _
  // Predicated region
  $region6: #{generator_forward.9} parent=0 // pred_check
    _
  $region7: #{generator_forward.9} parent=0 // pred_check_branch
    %11 = sbr.rel (0) target = $region9
  $region8: #{generator_forward.9} parent=0 // pred_region
    _
  $region9: #{generator_forward.9} parent=0 // pred_fallthru
    _
  // Predicated region
  $region10: #{generator_forward.9} parent=0 // pred_check
    _
  $region11: #{generator_forward.9} parent=0 // pred_check_branch
    %13 = sbr.rel (0) target = $region13
  $region12: #{generator_forward.9} parent=0 // pred_region
    _
  $region13: #{generator_forward.9} parent=0 // pred_fallthru
    _
  %v15 = vld [vmem:[%s0] sm:$0xff]
  %v16 = vld [vmem:[%s1] sm:$0xf]
  %v17 = vld [vmem:[%s1 + $0x4] sm:$0xf]
  %v18 = vld [vmem:[%s1 + $0x8] sm:$0xf]
  %v19 = vld [vmem:[%s1 + $0xc] sm:$0xf]
  %v20 = vld [vmem:[%s1 + $0x10] sm:$0xf]
  %v21 = vld [vmem:[%s1 + $0x14] sm:$0xf]
  %v22 = vld [vmem:[%s1 + $0x18] sm:$0xf]
  %v23 = vld [vmem:[%s1 + $0x1c] sm:$0xf]
  %v24 = vld [vmem:[%s1 + $0x20] sm:$0xf]
  %v25 = vld [vmem:[%s1 + $0x24] sm:$0xf]
  %v26 = vld [vmem:[%s1 + $0x28] sm:$0xf]
  %v27 = vld [vmem:[%s1 + $0x2c] sm:$0xf]
  %v28 = vld [vmem:[%s1 + $0x30] sm:$0xf]
  %v29 = vld [vmem:[%s1 + $0x34] sm:$0xf]
  %v30 = vld [vmem:[%s1 + $0x38] sm:$0xf]
  %v31 = vld [vmem:[%s1 + $0x3c] sm:$0xf]
  %v32 = vld [vmem:[%s1 + $0x40] sm:$0xf]
  %v33 = vld [vmem:[%s1 + $0x44] sm:$0xf]
  %v34 = vld [vmem:[%s1 + $0x48] sm:$0xf]
  %v35 = vld [vmem:[%s1 + $0x4c] sm:$0xf]
  %v36 = vld [vmem:[%s1 + $0x50] sm:$0xf]
  %v37 = vld [vmem:[%s1 + $0x54] sm:$0xf]
  %v38 = vld [vmem:[%s1 + $0x58] sm:$0xf]
  %v39 = vld [vmem:[%s1 + $0x5c] sm:$0xf]
  %v40 = vld [vmem:[%s1 + $0x60] sm:$0xf]
  %v41 = vld [vmem:[%s1 + $0x64] sm:$0xf]
  %v42 = vld [vmem:[%s1 + $0x68] sm:$0xf]
  %v43 = vld [vmem:[%s1 + $0x6c] sm:$0xf]
  %v44 = vld [vmem:[%s1 + $0x70] sm:$0xf]
  %v45 = vld [vmem:[%s1 + $0x74] sm:$0xf]
  %v46 = vld [vmem:[%s1 + $0x78] sm:$0xf]
  %v47 = vld [vmem:[%s1 + $0x7c] sm:$0xf]
  %v48 = vld [vmem:[%s2] sm:$0x1]
  %v50 = vlaneseq
  %v51 = vshrl.u32 %v50, 7
  %v52 = vsub.s32 0, %v51
  %v53 = vrot.slane %v48, %v52
  %v56 = vunpack.c.l.b16 %v15
  %v57 = vunpack.c.h.b16 %v15
  %v58 = vpack.c.b16 %v56, %v56
  %v59 = vpack.c.b16 %v57, %v57
  %v94 = vunpack.c.l.b16 %v16
  %v95 = vunpack.c.l.b16 %v17
  %v96 = vunpack.c.l.b16 %v18
  %v97 = vunpack.c.l.b16 %v19
  %v98 = vunpack.c.l.b16 %v20
  %v99 = vunpack.c.l.b16 %v21
  %v100 = vunpack.c.l.b16 %v22
  %v101 = vunpack.c.l.b16 %v23
  %v102 = vunpack.c.l.b16 %v24
  %v103 = vunpack.c.l.b16 %v25
  %v104 = vunpack.c.l.b16 %v26
  %v105 = vunpack.c.l.b16 %v27
  %v106 = vunpack.c.l.b16 %v28
  %v107 = vunpack.c.l.b16 %v29
  %v108 = vunpack.c.l.b16 %v30
  %v109 = vunpack.c.l.b16 %v31
  %v110 = vunpack.c.l.b16 %v32
  %v111 = vunpack.c.l.b16 %v33
  %v112 = vunpack.c.l.b16 %v34
  %v113 = vunpack.c.l.b16 %v35
  %v114 = vunpack.c.l.b16 %v36
  %v115 = vunpack.c.l.b16 %v37
  %v116 = vunpack.c.l.b16 %v38
  %v117 = vunpack.c.l.b16 %v39
  %v118 = vunpack.c.l.b16 %v40
  %v119 = vunpack.c.l.b16 %v41
  %v120 = vunpack.c.l.b16 %v42
  %v121 = vunpack.c.l.b16 %v43
  %v122 = vunpack.c.l.b16 %v44
  %v123 = vunpack.c.l.b16 %v45
  %v124 = vunpack.c.l.b16 %v46
  %v125 = vunpack.c.l.b16 %v47
  %v126 = vpack.c.b16 %v95, %v94
  %v127 = vpack.c.b16 %v97, %v96
  %v128 = vpack.c.b16 %v99, %v98
  %v129 = vpack.c.b16 %v101, %v100
  %v130 = vpack.c.b16 %v103, %v102
  %v131 = vpack.c.b16 %v105, %v104
  %v132 = vpack.c.b16 %v107, %v106
  %v133 = vpack.c.b16 %v109, %v108
  %v134 = vpack.c.b16 %v111, %v110
  %v135 = vpack.c.b16 %v113, %v112
  %v136 = vpack.c.b16 %v115, %v114
  %v137 = vpack.c.b16 %v117, %v116
  %v138 = vpack.c.b16 %v119, %v118
  %v139 = vpack.c.b16 %v121, %v120
  %v140 = vpack.c.b16 %v123, %v122
  %v141 = vpack.c.b16 %v125, %v124
  %158 = vmatprep.subr.bf16.mxu0 0
  %159 = vmatpush1.bf16.msra.mxu0 %v126
  %160 = vmatprep.subr.bf16.mxu0 0
  %161 = vmatpush1.bf16.msra.mxu0 %v127
  %162 = vmatprep.subr.bf16.mxu0 0
  %163 = vmatpush1.bf16.msra.mxu0 %v128
  %164 = vmatprep.subr.bf16.mxu0 0
  %165 = vmatpush1.bf16.msra.mxu0 %v129
  %166 = vmatprep.subr.bf16.mxu0 0
  %167 = vmatpush1.bf16.msra.mxu0 %v130
  %168 = vmatprep.subr.bf16.mxu0 0
  %169 = vmatpush1.bf16.msra.mxu0 %v131
  %170 = vmatprep.subr.bf16.mxu0 0
  %171 = vmatpush1.bf16.msra.mxu0 %v132
  %172 = vmatprep.subr.bf16.mxu0 0
  %173 = vmatpush1.bf16.msra.mxu0 %v133
  %174 = vmatprep.subr.bf16.mxu0 0
  %175 = vmatpush1.bf16.msra.mxu0 %v134
  %176 = vmatprep.subr.bf16.mxu0 0
  %177 = vmatpush1.bf16.msra.mxu0 %v135
  %178 = vmatprep.subr.bf16.mxu0 0
  %179 = vmatpush1.bf16.msra.mxu0 %v136
  %180 = vmatprep.subr.bf16.mxu0 0
  %181 = vmatpush1.bf16.msra.mxu0 %v137
  %182 = vmatprep.subr.bf16.mxu0 0
  %183 = vmatpush1.bf16.msra.mxu0 %v138
  %184 = vmatprep.subr.bf16.mxu0 0
  %185 = vmatpush1.bf16.msra.mxu0 %v139
  %186 = vmatprep.subr.bf16.mxu0 0
  %187 = vmatpush1.bf16.msra.mxu0 %v140
  %188 = vmatprep.subr.bf16.mxu0 0
  %189 = vmatpush1.bf16.msra.mxu0 %v141
  %190 = vmatprep.mubr.bf16.mxu0 %v59
  %191 = vmatmul.mubr.bf16.gmra.mrb[0].mxu0 %v58
  %v192 = vpop.f32.mrb[0].mxu0
  %v193 = vadd.f32 %v53, %v192
  %v194 = vpop.f32.mrb[0].mxu0
  %v195 = vpop.f32.mrb[0].mxu0
  %v196 = vpop.f32.mrb[0].mxu0
  %197 = vdwg.mxu0
  %v198 = vmax.f32 %v193, 0.0
  %199 = vst [vmem:[%s3] sm:$0xff] %v198
  // Predicated region
  $region14: #{generator_forward.9} parent=0 // pred_check
    _
  $region15: #{generator_forward.9} parent=0 // pred_check_branch
    %201 = sbr.rel (0) target = $region17
  $region16: #{generator_forward.9} parent=0 // pred_region
    _
  $region17: #{generator_forward.9} parent=0 // pred_fallthru
    _
  // Predicated region
  $region18: #{generator_forward.9} parent=0 // pred_check
    _
  $region19: #{generator_forward.9} parent=0 // pred_check_branch
    %203 = sbr.rel (0) target = $region21
  $region20: #{generator_forward.9} parent=0 // pred_region
    _
  $region21: #{generator_forward.9} parent=0 // pred_fallthru
    _

// kernel: generator_forward.11
$region0: #{generator_forward.11}
  #allocation0 [shape = 'u32[]', space=smem, size = 0x4, offset = 0x4, fixed_abs, tag = 'smem constant byte address 0x4 - core index']
  #allocation1 [shape = 'u32[144,128]{1,0:T(1,128)}', space=vmem, size = 0x12000, scoped, tag = 'internal scratch']
  %s0 = inlined_call_operand.vmem [shape: bf16[8,288], index: 0, kind: input, shape index: {}]
  %s1 = inlined_call_operand.vmem [shape: bf16[288,512], index: 1, kind: input, shape index: {}]
  %s2 = inlined_call_operand.vmem [shape: f32[1,512], index: 2, kind: input, shape index: {}]
  %s3 = inlined_call_operand.vmem [shape: f32[8,512], index: 3, kind: output, shape index: {}]
  %s4 = sld [smem:[#allocation0]]
  $region22: #{generator_forward.11} parent=0
    _
  %s6 = ssub.s32 1, %s4
  %s7 = scalar_select 0, %s6, %s4
  // Predicated region
  $region2: #{generator_forward.11} parent=0 // pred_check
    _
  $region3: #{generator_forward.11} parent=0 // pred_check_branch
    %9 = sbr.rel (0) target = $region5
  $region4: #{generator_forward.11} parent=0 // pred_region
    _
  $region5: #{generator_forward.11} parent=0 // pred_fallthru
    _
  // Predicated region
  $region6: #{generator_forward.11} parent=0 // pred_check
    _
  $region7: #{generator_forward.11} parent=0 // pred_check_branch
    %11 = sbr.rel (0) target = $region9
  $region8: #{generator_forward.11} parent=0 // pred_region
    _
  $region9: #{generator_forward.11} parent=0 // pred_fallthru
    _
  // Predicated region
  $region10: #{generator_forward.11} parent=0 // pred_check
    _
  $region11: #{generator_forward.11} parent=0 // pred_check_branch
    %13 = sbr.rel (0) target = $region13
  $region12: #{generator_forward.11} parent=0 // pred_region
    _
  $region13: #{generator_forward.11} parent=0 // pred_fallthru
    _
  %v15 = vld [vmem:[%s0] sm:$0xff]
  %v16 = vld [vmem:[%s0 + $0x8] sm:$0xf]
  %v17 = vld [vmem:[%s1] sm:$0xff]
  %v18 = vld [vmem:[%s1 + $0x8] sm:$0xff]
  %v19 = vld [vmem:[%s1 + $0x10] sm:$0xff]
  %v20 = vld [vmem:[%s1 + $0x18] sm:$0xff]
  %v21 = vld [vmem:[%s1 + $0x20] sm:$0xff]
  %v22 = vld [vmem:[%s1 + $0x28] sm:$0xff]
  %v23 = vld [vmem:[%s1 + $0x30] sm:$0xff]
  %v24 = vld [vmem:[%s1 + $0x38] sm:$0xff]
  %v25 = vld [vmem:[%s1 + $0x40] sm:$0xff]
  %v26 = vld [vmem:[%s1 + $0x48] sm:$0xff]
  %v27 = vld [vmem:[%s1 + $0x50] sm:$0xff]
  %v28 = vld [vmem:[%s1 + $0x58] sm:$0xff]
  %v29 = vld [vmem:[%s1 + $0x60] sm:$0xff]
  %v30 = vld [vmem:[%s1 + $0x68] sm:$0xff]
  %v31 = vld [vmem:[%s1 + $0x70] sm:$0xff]
  %v32 = vld [vmem:[%s1 + $0x78] sm:$0xff]
  %v33 = vld [vmem:[%s1 + $0x80] sm:$0xff]
  %v34 = vld [vmem:[%s1 + $0x88] sm:$0xff]
  %v35 = vld [vmem:[%s1 + $0x90] sm:$0xff]
  %v36 = vld [vmem:[%s1 + $0x98] sm:$0xff]
  %v37 = vld [vmem:[%s1 + $0xa0] sm:$0xff]
  %v38 = vld [vmem:[%s1 + $0xa8] sm:$0xff]
  %v39 = vld [vmem:[%s1 + $0xb0] sm:$0xff]
  %v40 = vld [vmem:[%s1 + $0xb8] sm:$0xff]
  %v41 = vld [vmem:[%s1 + $0xc0] sm:$0xff]
  %v42 = vld [vmem:[%s1 + $0xc8] sm:$0xff]
  %v43 = vld [vmem:[%s1 + $0xd0] sm:$0xff]
  %v44 = vld [vmem:[%s1 + $0xd8] sm:$0xff]
  %v45 = vld [vmem:[%s1 + $0xe0] sm:$0xff]
  %v46 = vld [vmem:[%s1 + $0xe8] sm:$0xff]
  %v47 = vld [vmem:[%s1 + $0xf0] sm:$0xff]
  %v48 = vld [vmem:[%s1 + $0xf8] sm:$0xff]
  %v49 = vld [vmem:[%s1 + $0x100] sm:$0xff]
  %v50 = vld [vmem:[%s1 + $0x108] sm:$0xff]
  %v51 = vld [vmem:[%s1 + $0x110] sm:$0xff]
  %v52 = vld [vmem:[%s1 + $0x118] sm:$0xff]
  %v53 = vld [vmem:[%s1 + $0x120] sm:$0xff]
  %v54 = vld [vmem:[%s1 + $0x128] sm:$0xff]
  %v55 = vld [vmem:[%s1 + $0x130] sm:$0xff]
  %v56 = vld [vmem:[%s1 + $0x138] sm:$0xff]
  %v57 = vld [vmem:[%s1 + $0x140] sm:$0xff]
  %v58 = vld [vmem:[%s1 + $0x148] sm:$0xff]
  %v59 = vld [vmem:[%s1 + $0x150] sm:$0xff]
  %v60 = vld [vmem:[%s1 + $0x158] sm:$0xff]
  %v61 = vld [vmem:[%s1 + $0x160] sm:$0xff]
  %v62 = vld [vmem:[%s1 + $0x168] sm:$0xff]
  %v63 = vld [vmem:[%s1 + $0x170] sm:$0xff]
  %v64 = vld [vmem:[%s1 + $0x178] sm:$0xff]
  %v65 = vld [vmem:[%s1 + $0x180] sm:$0xff]
  %v66 = vld [vmem:[%s1 + $0x188] sm:$0xff]
  %v67 = vld [vmem:[%s1 + $0x190] sm:$0xff]
  %v68 = vld [vmem:[%s1 + $0x198] sm:$0xff]
  %v69 = vld [vmem:[%s1 + $0x1a0] sm:$0xff]
  %v70 = vld [vmem:[%s1 + $0x1a8] sm:$0xff]
  %v71 = vld [vmem:[%s1 + $0x1b0] sm:$0xff]
  %v72 = vld [vmem:[%s1 + $0x1b8] sm:$0xff]
  %v73 = vld [vmem:[%s1 + $0x1c0] sm:$0xff]
  %v74 = vld [vmem:[%s1 + $0x1c8] sm:$0xff]
  %v75 = vld [vmem:[%s1 + $0x1d0] sm:$0xff]
  %v76 = vld [vmem:[%s1 + $0x1d8] sm:$0xff]
  %v77 = vld [vmem:[%s1 + $0x1e0] sm:$0xff]
  %v78 = vld [vmem:[%s1 + $0x1e8] sm:$0xff]
  %v79 = vld [vmem:[%s1 + $0x1f0] sm:$0xff]
  %v80 = vld [vmem:[%s1 + $0x1f8] sm:$0xff]
  %v81 = vld [vmem:[%s1 + $0x200] sm:$0xff]
  %v82 = vld [vmem:[%s1 + $0x208] sm:$0xff]
  %v83 = vld [vmem:[%s1 + $0x210] sm:$0xff]
  %v84 = vld [vmem:[%s1 + $0x218] sm:$0xff]
  %v85 = vld [vmem:[%s1 + $0x220] sm:$0xff]
  %v86 = vld [vmem:[%s1 + $0x228] sm:$0xff]
  %v87 = vld [vmem:[%s1 + $0x230] sm:$0xff]
  %v88 = vld [vmem:[%s1 + $0x238] sm:$0xff]
  %v89 = vld [vmem:[%s2] sm:$0xf]
  %v91 = vlaneseq
  %v92 = vshrl.u32 %v91, 7
  %v93 = vsub.s32 0, %v92
  %v94 = vrot.slane %v89, %v93
  %v95 = vlaneseq
  %v96 = vshrl.u32 %v95, 7
  %v97 = vsub.s32 1, %v96
  %v98 = vrot.slane %v89, %v97
  %v99 = vlaneseq
  %v100 = vshrl.u32 %v99, 7
  %v101 = vsub.s32 2, %v100
  %v102 = vrot.slane %v89, %v101
  %v103 = vlaneseq
  %v104 = vshrl.u32 %v103, 7
  %v105 = vsub.s32 3, %v104
  %v106 = vrot.slane %v89, %v105
  %v113 = vunpack.c.l.b16 %v15
  %v114 = vunpack.c.h.b16 %v15
  %v115 = vunpack.c.l.b16 %v16
  %v116 = vpack.c.b16 %v113, %v113
  %v117 = vpack.c.b16 %v114, %v114
  %v118 = vpack.c.b16 %v115, %v115
  %v193 = vunpack.c.l.b16 %v17
  %v194 = vunpack.c.h.b16 %v17
  %v195 = vunpack.c.l.b16 %v18
  %v196 = vunpack.c.h.b16 %v18
  %v197 = vunpack.c.l.b16 %v19
  %v198 = vunpack.c.h.b16 %v19
  %v199 = vunpack.c.l.b16 %v20
  %v200 = vunpack.c.h.b16 %v20
  %v201 = vunpack.c.l.b16 %v21
  %v202 = vunpack.c.h.b16 %v21
  %v203 = vunpack.c.l.b16 %v22
  %v204 = vunpack.c.h.b16 %v22
  %v205 = vunpack.c.l.b16 %v23
  %v206 = vunpack.c.h.b16 %v23
  %v207 = vunpack.c.l.b16 %v24
  %v208 = vunpack.c.h.b16 %v24
  %v209 = vunpack.c.l.b16 %v25
  %v210 = vunpack.c.h.b16 %v25
  %v211 = vunpack.c.l.b16 %v26
  %v212 = vunpack.c.h.b16 %v26
  %v213 = vunpack.c.l.b16 %v27
  %v214 = vunpack.c.h.b16 %v27
  %v215 = vunpack.c.l.b16 %v28
  %v216 = vunpack.c.h.b16 %v28
  %v217 = vunpack.c.l.b16 %v29
  %v218 = vunpack.c.h.b16 %v29
  %v219 = vunpack.c.l.b16 %v30
  %v220 = vunpack.c.h.b16 %v30
  %v221 = vunpack.c.l.b16 %v31
  %v222 = vunpack.c.h.b16 %v31
  %v223 = vunpack.c.l.b16 %v32
  %v224 = vunpack.c.h.b16 %v32
  %v225 = vunpack.c.l.b16 %v33
  %v226 = vunpack.c.h.b16 %v33
  %v227 = vunpack.c.l.b16 %v34
  %v228 = vunpack.c.h.b16 %v34
  %v229 = vunpack.c.l.b16 %v35
  %v230 = vunpack.c.h.b16 %v35
  %v231 = vunpack.c.l.b16 %v36
  %v232 = vunpack.c.h.b16 %v36
  %v233 = vunpack.c.l.b16 %v37
  %v234 = vunpack.c.h.b16 %v37
  %v235 = vunpack.c.l.b16 %v38
  %v236 = vunpack.c.h.b16 %v38
  %v237 = vunpack.c.l.b16 %v39
  %v238 = vunpack.c.h.b16 %v39
  %v239 = vunpack.c.l.b16 %v40
  %v240 = vunpack.c.h.b16 %v40
  %v241 = vunpack.c.l.b16 %v41
  %v242 = vunpack.c.h.b16 %v41
  %v243 = vunpack.c.l.b16 %v42
  %v244 = vunpack.c.h.b16 %v42
  %v245 = vunpack.c.l.b16 %v43
  %v246 = vunpack.c.h.b16 %v43
  %v247 = vunpack.c.l.b16 %v44
  %v248 = vunpack.c.h.b16 %v44
  %v249 = vunpack.c.l.b16 %v45
  %v250 = vunpack.c.h.b16 %v45
  %v251 = vunpack.c.l.b16 %v46
  %v252 = vunpack.c.h.b16 %v46
  %v253 = vunpack.c.l.b16 %v47
  %v254 = vunpack.c.h.b16 %v47
  %v255 = vunpack.c.l.b16 %v48
  %v256 = vunpack.c.h.b16 %v48
  %v257 = vunpack.c.l.b16 %v49
  %v258 = vunpack.c.h.b16 %v49
  %v259 = vunpack.c.l.b16 %v50
  %v260 = vunpack.c.h.b16 %v50
  %v261 = vunpack.c.l.b16 %v51
  %v262 = vunpack.c.h.b16 %v51
  %v263 = vunpack.c.l.b16 %v52
  %v264 = vunpack.c.h.b16 %v52
  %v265 = vunpack.c.l.b16 %v53
  %v266 = vunpack.c.h.b16 %v53
  %v267 = vunpack.c.l.b16 %v54
  %v268 = vunpack.c.h.b16 %v54
  %v269 = vunpack.c.l.b16 %v55
  %v270 = vunpack.c.h.b16 %v55
  %v271 = vunpack.c.l.b16 %v56
  %v272 = vunpack.c.h.b16 %v56
  %v273 = vunpack.c.l.b16 %v57
  %v274 = vunpack.c.h.b16 %v57
  %v275 = vunpack.c.l.b16 %v58
  %v276 = vunpack.c.h.b16 %v58
  %v277 = vunpack.c.l.b16 %v59
  %v278 = vunpack.c.h.b16 %v59
  %v279 = vunpack.c.l.b16 %v60
  %v280 = vunpack.c.h.b16 %v60
  %v281 = vunpack.c.l.b16 %v61
  %v282 = vunpack.c.h.b16 %v61
  %v283 = vunpack.c.l.b16 %v62
  %v284 = vunpack.c.h.b16 %v62
  %v285 = vunpack.c.l.b16 %v63
  %v286 = vunpack.c.h.b16 %v63
  %v287 = vunpack.c.l.b16 %v64
  %v288 = vunpack.c.h.b16 %v64
  %v289 = vunpack.c.l.b16 %v65
  %v290 = vunpack.c.h.b16 %v65
  %v291 = vunpack.c.l.b16 %v66
  %v292 = vunpack.c.h.b16 %v66
  %v293 = vunpack.c.l.b16 %v67
  %v294 = vunpack.c.h.b16 %v67
  %v295 = vunpack.c.l.b16 %v68
  %v296 = vunpack.c.h.b16 %v68
  %v297 = vunpack.c.l.b16 %v69
  %v298 = vunpack.c.h.b16 %v69
  %v299 = vunpack.c.l.b16 %v70
  %v300 = vunpack.c.h.b16 %v70
  %v301 = vunpack.c.l.b16 %v71
  %v302 = vunpack.c.h.b16 %v71
  %v303 = vunpack.c.l.b16 %v72
  %v304 = vunpack.c.h.b16 %v72
  %v305 = vunpack.c.l.b16 %v73
  %v306 = vunpack.c.h.b16 %v73
  %v307 = vunpack.c.l.b16 %v74
  %v308 = vunpack.c.h.b16 %v74
  %v309 = vunpack.c.l.b16 %v75
  %v310 = vunpack.c.h.b16 %v75
  %v311 = vunpack.c.l.b16 %v76
  %v312 = vunpack.c.h.b16 %v76
  %v313 = vunpack.c.l.b16 %v77
  %v314 = vunpack.c.h.b16 %v77
  %v315 = vunpack.c.l.b16 %v78
  %v316 = vunpack.c.h.b16 %v78
  %v317 = vunpack.c.l.b16 %v79
  %v318 = vunpack.c.h.b16 %v79
  %v319 = vunpack.c.l.b16 %v80
  %v320 = vunpack.c.h.b16 %v80
  %v321 = vunpack.c.l.b16 %v81
  %v322 = vunpack.c.h.b16 %v81
  %v323 = vunpack.c.l.b16 %v82
  %v324 = vunpack.c.h.b16 %v82
  %v325 = vunpack.c.l.b16 %v83
  %v326 = vunpack.c.h.b16 %v83
  %v327 = vunpack.c.l.b16 %v84
  %v328 = vunpack.c.h.b16 %v84
  %v329 = vunpack.c.l.b16 %v85
  %v330 = vunpack.c.h.b16 %v85
  %v331 = vunpack.c.l.b16 %v86
  %v332 = vunpack.c.h.b16 %v86
  %v333 = vunpack.c.l.b16 %v87
  %v334 = vunpack.c.h.b16 %v87
  %v335 = vunpack.c.l.b16 %v88
  %v336 = vunpack.c.h.b16 %v88
  %v337 = vpack.c.b16 %v197, %v193
  %v338 = vpack.c.b16 %v198, %v194
  %v339 = vpack.c.b16 %v199, %v195
  %v340 = vpack.c.b16 %v200, %v196
  %v341 = vpack.c.b16 %v205, %v201
  %v342 = vpack.c.b16 %v206, %v202
  %v343 = vpack.c.b16 %v207, %v203
  %v344 = vpack.c.b16 %v208, %v204
  %v345 = vpack.c.b16 %v213, %v209
  %v346 = vpack.c.b16 %v214, %v210
  %v347 = vpack.c.b16 %v215, %v211
  %v348 = vpack.c.b16 %v216, %v212
  %v349 = vpack.c.b16 %v221, %v217
  %v350 = vpack.c.b16 %v222, %v218
  %v351 = vpack.c.b16 %v223, %v219
  %v352 = vpack.c.b16 %v224, %v220
  %v353 = vpack.c.b16 %v229, %v225
  %v354 = vpack.c.b16 %v230, %v226
  %v355 = vpack.c.b16 %v231, %v227
  %v356 = vpack.c.b16 %v232, %v228
  %v357 = vpack.c.b16 %v237, %v233
  %v358 = vpack.c.b16 %v238, %v234
  %v359 = vpack.c.b16 %v239, %v235
  %v360 = vpack.c.b16 %v240, %v236
  %v361 = vpack.c.b16 %v245, %v241
  %v362 = vpack.c.b16 %v246, %v242
  %v363 = vpack.c.b16 %v247, %v243
  %v364 = vpack.c.b16 %v248, %v244
  %v365 = vpack.c.b16 %v253, %v249
  %v366 = vpack.c.b16 %v254, %v250
  %v367 = vpack.c.b16 %v255, %v251
  %v368 = vpack.c.b16 %v256, %v252
  %v369 = vpack.c.b16 %v261, %v257
  %v370 = vpack.c.b16 %v262, %v258
  %v371 = vpack.c.b16 %v263, %v259
  %v372 = vpack.c.b16 %v264, %v260
  %v373 = vpack.c.b16 %v269, %v265
  %v374 = vpack.c.b16 %v270, %v266
  %v375 = vpack.c.b16 %v271, %v267
  %v376 = vpack.c.b16 %v272, %v268
  %v377 = vpack.c.b16 %v277, %v273
  %v378 = vpack.c.b16 %v278, %v274
  %v379 = vpack.c.b16 %v279, %v275
  %v380 = vpack.c.b16 %v280, %v276
  %v381 = vpack.c.b16 %v285, %v281
  %v382 = vpack.c.b16 %v286, %v282
  %v383 = vpack.c.b16 %v287, %v283
  %v384 = vpack.c.b16 %v288, %v284
  %v385 = vpack.c.b16 %v293, %v289
  %v386 = vpack.c.b16 %v294, %v290
  %v387 = vpack.c.b16 %v295, %v291
  %v388 = vpack.c.b16 %v296, %v292
  %v389 = vpack.c.b16 %v301, %v297
  %v390 = vpack.c.b16 %v302, %v298
  %v391 = vpack.c.b16 %v303, %v299
  %v392 = vpack.c.b16 %v304, %v300
  %v393 = vpack.c.b16 %v309, %v305
  %v394 = vpack.c.b16 %v310, %v306
  %v395 = vpack.c.b16 %v311, %v307
  %v396 = vpack.c.b16 %v312, %v308
  %v397 = vpack.c.b16 %v317, %v313
  %v398 = vpack.c.b16 %v318, %v314
  %v399 = vpack.c.b16 %v319, %v315
  %v400 = vpack.c.b16 %v320, %v316
  %v401 = vpack.c.b16 %v325, %v321
  %v402 = vpack.c.b16 %v326, %v322
  %v403 = vpack.c.b16 %v327, %v323
  %v404 = vpack.c.b16 %v328, %v324
  %v405 = vpack.c.b16 %v333, %v329
  %v406 = vpack.c.b16 %v334, %v330
  %v407 = vpack.c.b16 %v335, %v331
  %v408 = vpack.c.b16 %v336, %v332
  %vm481 = vcmask 261120
  %v483 = vsel %vm481, %v118, 0
  %485 = vmatprep.subr.bf16.mxu0 %v338
  %486 = vmatpush1.bf16.msra.mxu0 %v337
  %487 = vmatprep.subr.bf16.mxu0 %v342
  %488 = vmatpush1.bf16.msra.mxu0 %v341
  %489 = vmatprep.subr.bf16.mxu0 %v346
  %490 = vmatpush1.bf16.msra.mxu0 %v345
  %491 = vmatprep.subr.bf16.mxu0 %v350
  %492 = vmatpush1.bf16.msra.mxu0 %v349
  %493 = vmatprep.subr.bf16.mxu0 %v354
  %494 = vmatpush1.bf16.msra.mxu0 %v353
  %495 = vmatprep.subr.bf16.mxu0 %v358
  %496 = vmatpush1.bf16.msra.mxu0 %v357
  %497 = vmatprep.subr.bf16.mxu0 %v362
  %498 = vmatpush1.bf16.msra.mxu0 %v361
  %499 = vmatprep.subr.bf16.mxu0 %v366
  %500 = vmatpush1.bf16.msra.mxu0 %v365
  %501 = vmatprep.subr.bf16.mxu0 %v370
  %502 = vmatpush1.bf16.msra.mxu0 %v369
  %503 = vmatprep.subr.bf16.mxu0 %v374
  %504 = vmatpush1.bf16.msra.mxu0 %v373
  %505 = vmatprep.subr.bf16.mxu0 %v378
  %506 = vmatpush1.bf16.msra.mxu0 %v377
  %507 = vmatprep.subr.bf16.mxu0 %v382
  %508 = vmatpush1.bf16.msra.mxu0 %v381
  %509 = vmatprep.subr.bf16.mxu0 %v386
  %510 = vmatpush1.bf16.msra.mxu0 %v385
  %511 = vmatprep.subr.bf16.mxu0 %v390
  %512 = vmatpush1.bf16.msra.mxu0 %v389
  %513 = vmatprep.subr.bf16.mxu0 %v394
  %514 = vmatpush1.bf16.msra.mxu0 %v393
  %515 = vmatprep.subr.bf16.mxu0 %v398
  %516 = vmatpush1.bf16.msra.mxu0 %v397
  %517 = vmatprep.mubr.bf16.mxu0 %v117
  %518 = vmatmul.mubr.bf16.gmra.mrb[0].mxu0 %v116
  %v519 = vpop.f32.mrb[0].mxu0
  %v520 = vadd.f32 %v94, %v519
  %v521 = vpop.f32.mrb[0].mxu0
  %v522 = vadd.f32 %v98, %v521
  %v523 = vpop.f32.mrb[0].mxu0
  %v524 = vpop.f32.mrb[0].mxu0
  %525 = vdwg.mxu0
  %526 = vmatprep.subr.bf16.mxu0 %v402
  %527 = vmatpush1.bf16.msra.mxu0 %v401
  %528 = vmatprep.subr.bf16.mxu0 %v406
  %529 = vmatpush1.bf16.msra.mxu0 %v405
  %530 = vmatprep.subr.bf16.mxu0 0
  %531 = vmatpush1.bf16.msra.mxu0 0
  %532 = vmatprep.subr.bf16.mxu0 0
  %533 = vmatpush1.bf16.msra.mxu0 0
  %534 = vmatprep.subr.bf16.mxu0 0
  %535 = vmatpush1.bf16.msra.mxu0 0
  %536 = vmatprep.subr.bf16.mxu0 0
  %537 = vmatpush1.bf16.msra.mxu0 0
  %538 = vmatprep.subr.bf16.mxu0 0
  %539 = vmatpush1.bf16.msra.mxu0 0
  %540 = vmatprep.subr.bf16.mxu0 0
  %541 = vmatpush1.bf16.msra.mxu0 0
  %542 = vmatprep.subr.bf16.mxu0 0
  %543 = vmatpush1.bf16.msra.mxu0 0
  %544 = vmatprep.subr.bf16.mxu0 0
  %545 = vmatpush1.bf16.msra.mxu0 0
  %546 = vmatprep.subr.bf16.mxu0 0
  %547 = vmatpush1.bf16.msra.mxu0 0
  %548 = vmatprep.subr.bf16.mxu0 0
  %549 = vmatpush1.bf16.msra.mxu0 0
  %550 = vmatprep.subr.bf16.mxu0 0
  %551 = vmatpush1.bf16.msra.mxu0 0
  %552 = vmatprep.subr.bf16.mxu0 0
  %553 = vmatpush1.bf16.msra.mxu0 0
  %554 = vmatprep.subr.bf16.mxu0 0
  %555 = vmatpush1.bf16.msra.mxu0 0
  %556 = vmatprep.subr.bf16.mxu0 0
  %557 = vmatpush1.bf16.msra.mxu0 0
  %558 = vmatprep.mubr.bf16.mxu0 0
  %559 = vmatmul.mubr.bf16.gmra.mrb[0].mxu0 %v483
  %v560 = vpop.f32.mrb[0].mxu0
  %v561 = vadd.f32 %v520, %v560
  %v562 = vpop.f32.mrb[0].mxu0
  %v563 = vadd.f32 %v522, %v562
  %v564 = vpop.f32.mrb[0].mxu0
  %v565 = vpop.f32.mrb[0].mxu0
  %566 = vdwg.mxu0
  %567 = vmatprep.subr.bf16.mxu0 %v340
  %568 = vmatpush1.bf16.msra.mxu0 %v339
  %569 = vmatprep.subr.bf16.mxu0 %v344
  %570 = vmatpush1.bf16.msra.mxu0 %v343
  %571 = vmatprep.subr.bf16.mxu0 %v348
  %572 = vmatpush1.bf16.msra.mxu0 %v347
  %573 = vmatprep.subr.bf16.mxu0 %v352
  %574 = vmatpush1.bf16.msra.mxu0 %v351
  %575 = vmatprep.subr.bf16.mxu0 %v356
  %576 = vmatpush1.bf16.msra.mxu0 %v355
  %577 = vmatprep.subr.bf16.mxu0 %v360
  %578 = vmatpush1.bf16.msra.mxu0 %v359
  %579 = vmatprep.subr.bf16.mxu0 %v364
  %580 = vmatpush1.bf16.msra.mxu0 %v363
  %581 = vmatprep.subr.bf16.mxu0 %v368
  %582 = vmatpush1.bf16.msra.mxu0 %v367
  %583 = vmatprep.subr.bf16.mxu0 %v372
  %584 = vmatpush1.bf16.msra.mxu0 %v371
  %585 = vmatprep.subr.bf16.mxu0 %v376
  %586 = vmatpush1.bf16.msra.mxu0 %v375
  %587 = vmatprep.subr.bf16.mxu0 %v380
  %588 = vmatpush1.bf16.msra.mxu0 %v379
  %589 = vmatprep.subr.bf16.mxu0 %v384
  %590 = vmatpush1.bf16.msra.mxu0 %v383
  %591 = vmatprep.subr.bf16.mxu0 %v388
  %592 = vmatpush1.bf16.msra.mxu0 %v387
  %593 = vmatprep.subr.bf16.mxu0 %v392
  %594 = vmatpush1.bf16.msra.mxu0 %v391
  %595 = vmatprep.subr.bf16.mxu0 %v396
  %596 = vmatpush1.bf16.msra.mxu0 %v395
  %597 = vmatprep.subr.bf16.mxu0 %v400
  %598 = vmatpush1.bf16.msra.mxu0 %v399
  %599 = vmatprep.mubr.bf16.mxu0 %v117
  %600 = vmatmul.mubr.bf16.gmra.mrb[0].mxu0 %v116
  %v601 = vpop.f32.mrb[0].mxu0
  %v602 = vadd.f32 %v102, %v601
  %v603 = vpop.f32.mrb[0].mxu0
  %v604 = vadd.f32 %v106, %v603
  %v605 = vpop.f32.mrb[0].mxu0
  %v606 = vpop.f32.mrb[0].mxu0
  %607 = vdwg.mxu0
  %608 = vmatprep.subr.bf16.mxu0 %v404
  %609 = vmatpush1.bf16.msra.mxu0 %v403
  %610 = vmatprep.subr.bf16.mxu0 %v408
  %611 = vmatpush1.bf16.msra.mxu0 %v407
  %612 = vmatprep.subr.bf16.mxu0 0
  %613 = vmatpush1.bf16.msra.mxu0 0
  %614 = vmatprep.subr.bf16.mxu0 0
  %615 = vmatpush1.bf16.msra.mxu0 0
  %616 = vmatprep.subr.bf16.mxu0 0
  %617 = vmatpush1.bf16.msra.mxu0 0
  %618 = vmatprep.subr.bf16.mxu0 0
  %619 = vmatpush1.bf16.msra.mxu0 0
  %620 = vmatprep.subr.bf16.mxu0 0
  %621 = vmatpush1.bf16.msra.mxu0 0
  %622 = vmatprep.subr.bf16.mxu0 0
  %623 = vmatpush1.bf16.msra.mxu0 0
  %624 = vmatprep.subr.bf16.mxu0 0
  %625 = vmatpush1.bf16.msra.mxu0 0
  %626 = vmatprep.subr.bf16.mxu0 0
  %627 = vmatpush1.bf16.msra.mxu0 0
  %628 = vmatprep.subr.bf16.mxu0 0
  %629 = vmatpush1.bf16.msra.mxu0 0
  %630 = vmatprep.subr.bf16.mxu0 0
  %631 = vmatpush1.bf16.msra.mxu0 0
  %632 = vmatprep.subr.bf16.mxu0 0
  %633 = vmatpush1.bf16.msra.mxu0 0
  %634 = vmatprep.subr.bf16.mxu0 0
  %635 = vmatpush1.bf16.msra.mxu0 0
  %636 = vmatprep.subr.bf16.mxu0 0
  %637 = vmatpush1.bf16.msra.mxu0 0
  %638 = vmatprep.subr.bf16.mxu0 0
  %639 = vmatpush1.bf16.msra.mxu0 0
  %640 = vmatprep.mubr.bf16.mxu0 0
  %641 = vmatmul.mubr.bf16.gmra.mrb[0].mxu0 %v483
  %v642 = vpop.f32.mrb[0].mxu0
  %v643 = vadd.f32 %v602, %v642
  %v644 = vpop.f32.mrb[0].mxu0
  %v645 = vadd.f32 %v604, %v644
  %v646 = vpop.f32.mrb[0].mxu0
  %v647 = vpop.f32.mrb[0].mxu0
  %648 = vdwg.mxu0
  %v649 = vmax.f32 %v561, 0.0
  %v650 = vmax.f32 %v563, 0.0
  %v651 = vmax.f32 %v643, 0.0
  %v652 = vmax.f32 %v645, 0.0
  %653 = vst [vmem:[%s3] sm:$0xff] %v649
  %654 = vst [vmem:[%s3 + $0x8] sm:$0xff] %v650
  %655 = vst [vmem:[%s3 + $0x10] sm:$0xff] %v651
  %656 = vst [vmem:[%s3 + $0x18] sm:$0xff] %v652
  // Predicated region
  $region14: #{generator_forward.11} parent=0 // pred_check
    _
  $region15: #{generator_forward.11} parent=0 // pred_check_branch
    %658 = sbr.rel (0) target = $region17
  $region16: #{generator_forward.11} parent=0 // pred_region
    _
  $region17: #{generator_forward.11} parent=0 // pred_fallthru
    _
  // Predicated region
  $region18: #{generator_forward.11} parent=0 // pred_check
    _
  $region19: #{generator_forward.11} parent=0 // pred_check_branch
    %660 = sbr.rel (0) target = $region21
  $region20: #{generator_forward.11} parent=0 // pred_region
    _
  $region21: #{generator_forward.11} parent=0 // pred_fallthru
    _

// kernel: generator_forward.12
$region0: #{generator_forward.12}
  #allocation0 [shape = 'u32[]', space=smem, size = 0x4, offset = 0x4, fixed_abs, tag = 'smem constant byte address 0x4 - core index']
  #allocation1 [shape = 'u32[144,128]{1,0:T(1,128)}', space=vmem, size = 0x12000, scoped, tag = 'internal scratch']
  %s0 = inlined_call_operand.vmem [shape: bf16[32,144], index: 0, kind: input, shape index: {}]
  %s1 = inlined_call_operand.vmem [shape: bf16[144,512], index: 1, kind: input, shape index: {}]
  %s2 = inlined_call_operand.vmem [shape: f32[1,512], index: 2, kind: input, shape index: {}]
  %s3 = inlined_call_operand.vmem [shape: f32[32,512], index: 3, kind: output, shape index: {}]
  %s4 = sld [smem:[#allocation0]]
  $region22: #{generator_forward.12} parent=0
    _
  %s6 = ssub.s32 1, %s4
  %s7 = scalar_select 0, %s6, %s4
  // Predicated region
  $region2: #{generator_forward.12} parent=0 // pred_check
    _
  $region3: #{generator_forward.12} parent=0 // pred_check_branch
    %9 = sbr.rel (0) target = $region5
  $region4: #{generator_forward.12} parent=0 // pred_region
    _
  $region5: #{generator_forward.12} parent=0 // pred_fallthru
    _
  // Predicated region
  $region6: #{generator_forward.12} parent=0 // pred_check
    _
  $region7: #{generator_forward.12} parent=0 // pred_check_branch
    %11 = sbr.rel (0) target = $region9
  $region8: #{generator_forward.12} parent=0 // pred_region
    _
  $region9: #{generator_forward.12} parent=0 // pred_fallthru
    _
  // Predicated region
  $region10: #{generator_forward.12} parent=0 // pred_check
    _
  $region11: #{generator_forward.12} parent=0 // pred_check_branch
    %13 = sbr.rel (0) target = $region13
  $region12: #{generator_forward.12} parent=0 // pred_region
    _
  $region13: #{generator_forward.12} parent=0 // pred_fallthru
    _
  %v15 = vld [vmem:[%s0] sm:$0xff]
  %v16 = vld [vmem:[%s0 + $0x8] sm:$0xff]
  %v17 = vld [vmem:[%s0 + $0x10] sm:$0xff]
  %v18 = vld [vmem:[%s0 + $0x18] sm:$0xff]
  %v19 = vld [vmem:[%s1] sm:$0xff]
  %v20 = vld [vmem:[%s1 + $0x8] sm:$0xff]
  %v21 = vld [vmem:[%s1 + $0x10] sm:$0xff]
  %v22 = vld [vmem:[%s1 + $0x18] sm:$0xff]
  %v23 = vld [vmem:[%s1 + $0x20] sm:$0xff]
  %v24 = vld [vmem:[%s1 + $0x28] sm:$0xff]
  %v25 = vld [vmem:[%s1 + $0x30] sm:$0xff]
  %v26 = vld [vmem:[%s1 + $0x38] sm:$0xff]
  %v27 = vld [vmem:[%s1 + $0x40] sm:$0xff]
  %v28 = vld [vmem:[%s1 + $0x48] sm:$0xff]
  %v29 = vld [vmem:[%s1 + $0x50] sm:$0xff]
  %v30 = vld [vmem:[%s1 + $0x58] sm:$0xff]
  %v31 = vld [vmem:[%s1 + $0x60] sm:$0xff]
  %v32 = vld [vmem:[%s1 + $0x68] sm:$0xff]
  %v33 = vld [vmem:[%s1 + $0x70] sm:$0xff]
  %v34 = vld [vmem:[%s1 + $0x78] sm:$0xff]
  %v35 = vld [vmem:[%s1 + $0x80] sm:$0xff]
  %v36 = vld [vmem:[%s1 + $0x88] sm:$0xff]
  %v37 = vld [vmem:[%s1 + $0x90] sm:$0xff]
  %v38 = vld [vmem:[%s1 + $0x98] sm:$0xff]
  %v39 = vld [vmem:[%s1 + $0xa0] sm:$0xff]
  %v40 = vld [vmem:[%s1 + $0xa8] sm:$0xff]
  %v41 = vld [vmem:[%s1 + $0xb0] sm:$0xff]
  %v42 = vld [vmem:[%s1 + $0xb8] sm:$0xff]
  %v43 = vld [vmem:[%s1 + $0xc0] sm:$0xff]
  %v44 = vld [vmem:[%s1 + $0xc8] sm:$0xff]
  %v45 = vld [vmem:[%s1 + $0xd0] sm:$0xff]
  %v46 = vld [vmem:[%s1 + $0xd8] sm:$0xff]
  %v47 = vld [vmem:[%s1 + $0xe0] sm:$0xff]
  %v48 = vld [vmem:[%s1 + $0xe8] sm:$0xff]
  %v49 = vld [vmem:[%s1 + $0xf0] sm:$0xff]
  %v50 = vld [vmem:[%s1 + $0xf8] sm:$0xff]
  %v51 = vld [vmem:[%s1 + $0x100] sm:$0xff]
  %v52 = vld [vmem:[%s1 + $0x108] sm:$0xff]
  %v53 = vld [vmem:[%s1 + $0x110] sm:$0xff]
  %v54 = vld [vmem:[%s1 + $0x118] sm:$0xff]
  %v55 = vld [vmem:[%s2] sm:$0xf]
  %v57 = vlaneseq
  %v58 = vshrl.u32 %v57, 7
  %v59 = vsub.s32 0, %v58
  %v60 = vrot.slane %v55, %v59
  %v61 = vlaneseq
  %v62 = vshrl.u32 %v61, 7
  %v63 = vsub.s32 1, %v62
  %v64 = vrot.slane %v55, %v63
  %v65 = vlaneseq
  %v66 = vshrl.u32 %v65, 7
  %v67 = vsub.s32 2, %v66
  %v68 = vrot.slane %v55, %v67
  %v69 = vlaneseq
  %v70 = vshrl.u32 %v69, 7
  %v71 = vsub.s32 3, %v70
  %v72 = vrot.slane %v55, %v71
  %v81 = vunpack.c.l.b16 %v15
  %v82 = vunpack.c.h.b16 %v15
  %v83 = vunpack.c.l.b16 %v16
  %v84 = vunpack.c.h.b16 %v16
  %v85 = vunpack.c.l.b16 %v17
  %v86 = vunpack.c.h.b16 %v17
  %v87 = vunpack.c.l.b16 %v18
  %v88 = vunpack.c.h.b16 %v18
  %v89 = vpack.c.b16 %v83, %v81
  %v90 = vpack.c.b16 %v84, %v82
  %v91 = vpack.c.b16 %v87, %v85
  %v92 = vpack.c.b16 %v88, %v86
  %v131 = vunpack.c.l.b16 %v19
  %v132 = vunpack.c.h.b16 %v19
  %v133 = vunpack.c.l.b16 %v20
  %v134 = vunpack.c.h.b16 %v20
  %v135 = vunpack.c.l.b16 %v21
  %v136 = vunpack.c.h.b16 %v21
  %v137 = vunpack.c.l.b16 %v22
  %v138 = vunpack.c.h.b16 %v22
  %v139 = vunpack.c.l.b16 %v23
  %v140 = vunpack.c.h.b16 %v23
  %v141 = vunpack.c.l.b16 %v24
  %v142 = vunpack.c.h.b16 %v24
  %v143 = vunpack.c.l.b16 %v25
  %v144 = vunpack.c.h.b16 %v25
  %v145 = vunpack.c.l.b16 %v26
  %v146 = vunpack.c.h.b16 %v26
  %v147 = vunpack.c.l.b16 %v27
  %v148 = vunpack.c.h.b16 %v27
  %v149 = vunpack.c.l.b16 %v28
  %v150 = vunpack.c.h.b16 %v28
  %v151 = vunpack.c.l.b16 %v29
  %v152 = vunpack.c.h.b16 %v29
  %v153 = vunpack.c.l.b16 %v30
  %v154 = vunpack.c.h.b16 %v30
  %v155 = vunpack.c.l.b16 %v31
  %v156 = vunpack.c.h.b16 %v31
  %v157 = vunpack.c.l.b16 %v32
  %v158 = vunpack.c.h.b16 %v32
  %v159 = vunpack.c.l.b16 %v33
  %v160 = vunpack.c.h.b16 %v33
  %v161 = vunpack.c.l.b16 %v34
  %v162 = vunpack.c.h.b16 %v34
  %v163 = vunpack.c.l.b16 %v35
  %v164 = vunpack.c.h.b16 %v35
  %v165 = vunpack.c.l.b16 %v36
  %v166 = vunpack.c.h.b16 %v36
  %v167 = vunpack.c.l.b16 %v37
  %v168 = vunpack.c.h.b16 %v37
  %v169 = vunpack.c.l.b16 %v38
  %v170 = vunpack.c.h.b16 %v38
  %v171 = vunpack.c.l.b16 %v39
  %v172 = vunpack.c.h.b16 %v39
  %v173 = vunpack.c.l.b16 %v40
  %v174 = vunpack.c.h.b16 %v40
  %v175 = vunpack.c.l.b16 %v41
  %v176 = vunpack.c.h.b16 %v41
  %v177 = vunpack.c.l.b16 %v42
  %v178 = vunpack.c.h.b16 %v42
  %v179 = vunpack.c.l.b16 %v43
  %v180 = vunpack.c.h.b16 %v43
  %v181 = vunpack.c.l.b16 %v44
  %v182 = vunpack.c.h.b16 %v44
  %v183 = vunpack.c.l.b16 %v45
  %v184 = vunpack.c.h.b16 %v45
  %v185 = vunpack.c.l.b16 %v46
  %v186 = vunpack.c.h.b16 %v46
  %v187 = vunpack.c.l.b16 %v47
  %v188 = vunpack.c.h.b16 %v47
  %v189 = vunpack.c.l.b16 %v48
  %v190 = vunpack.c.h.b16 %v48
  %v191 = vunpack.c.l.b16 %v49
  %v192 = vunpack.c.h.b16 %v49
  %v193 = vunpack.c.l.b16 %v50
  %v194 = vunpack.c.h.b16 %v50
  %v195 = vunpack.c.l.b16 %v51
  %v196 = vunpack.c.h.b16 %v51
  %v197 = vunpack.c.l.b16 %v52
  %v198 = vunpack.c.h.b16 %v52
  %v199 = vunpack.c.l.b16 %v53
  %v200 = vunpack.c.h.b16 %v53
  %v201 = vunpack.c.l.b16 %v54
  %v202 = vunpack.c.h.b16 %v54
  %v203 = vpack.c.b16 %v135, %v131
  %v204 = vpack.c.b16 %v136, %v132
  %v205 = vpack.c.b16 %v137, %v133
  %v206 = vpack.c.b16 %v138, %v134
  %v207 = vpack.c.b16 %v143, %v139
  %v208 = vpack.c.b16 %v144, %v140
  %v209 = vpack.c.b16 %v145, %v141
  %v210 = vpack.c.b16 %v146, %v142
  %v211 = vpack.c.b16 %v151, %v147
  %v212 = vpack.c.b16 %v152, %v148
  %v213 = vpack.c.b16 %v153, %v149
  %v214 = vpack.c.b16 %v154, %v150
  %v215 = vpack.c.b16 %v159, %v155
  %v216 = vpack.c.b16 %v160, %v156
  %v217 = vpack.c.b16 %v161, %v157
  %v218 = vpack.c.b16 %v162, %v158
  %v219 = vpack.c.b16 %v167, %v163
  %v220 = vpack.c.b16 %v168, %v164
  %v221 = vpack.c.b16 %v169, %v165
  %v222 = vpack.c.b16 %v170, %v166
  %v223 = vpack.c.b16 %v175, %v171
  %v224 = vpack.c.b16 %v176, %v172
  %v225 = vpack.c.b16 %v177, %v173
  %v226 = vpack.c.b16 %v178, %v174
  %v227 = vpack.c.b16 %v183, %v179
  %v228 = vpack.c.b16 %v184, %v180
  %v229 = vpack.c.b16 %v185, %v181
  %v230 = vpack.c.b16 %v186, %v182
  %v231 = vpack.c.b16 %v191, %v187
  %v232 = vpack.c.b16 %v192, %v188
  %v233 = vpack.c.b16 %v193, %v189
  %v234 = vpack.c.b16 %v194, %v190
  %v235 = vpack.c.b16 %v199, %v195
  %v236 = vpack.c.b16 %v200, %v196
  %v237 = vpack.c.b16 %v201, %v197
  %v238 = vpack.c.b16 %v202, %v198
  %vm275 = vcmask 130048
  %v277 = vsel %vm275, %v90, 0
  %v280 = vsel %vm275, %v92, 0
  %282 = vmatprep.subr.bf16.mxu0 %v204
  %283 = vmatpush1.bf16.msra.mxu0 %v203
  %284 = vmatprep.subr.bf16.mxu0 %v208
  %285 = vmatpush1.bf16.msra.mxu0 %v207
  %286 = vmatprep.subr.bf16.mxu0 %v212
  %287 = vmatpush1.bf16.msra.mxu0 %v211
  %288 = vmatprep.subr.bf16.mxu0 %v216
  %289 = vmatpush1.bf16.msra.mxu0 %v215
  %290 = vmatprep.subr.bf16.mxu0 %v220
  %291 = vmatpush1.bf16.msra.mxu0 %v219
  %292 = vmatprep.subr.bf16.mxu0 %v224
  %293 = vmatpush1.bf16.msra.mxu0 %v223
  %294 = vmatprep.subr.bf16.mxu0 %v228
  %295 = vmatpush1.bf16.msra.mxu0 %v227
  %296 = vmatprep.subr.bf16.mxu0 %v232
  %297 = vmatpush1.bf16.msra.mxu0 %v231
  %298 = vmatprep.subr.bf16.mxu0 %v236
  %299 = vmatpush1.bf16.msra.mxu0 %v235
  %300 = vmatprep.subr.bf16.mxu0 0
  %301 = vmatpush1.bf16.msra.mxu0 0
  %302 = vmatprep.subr.bf16.mxu0 0
  %303 = vmatpush1.bf16.msra.mxu0 0
  %304 = vmatprep.subr.bf16.mxu0 0
  %305 = vmatpush1.bf16.msra.mxu0 0
  %306 = vmatprep.subr.bf16.mxu0 0
  %307 = vmatpush1.bf16.msra.mxu0 0
  %308 = vmatprep.subr.bf16.mxu0 0
  %309 = vmatpush1.bf16.msra.mxu0 0
  %310 = vmatprep.subr.bf16.mxu0 0
  %311 = vmatpush1.bf16.msra.mxu0 0
  %312 = vmatprep.subr.bf16.mxu0 0
  %313 = vmatpush1.bf16.msra.mxu0 0
  %314 = vmatprep.mubr.bf16.mxu0 %v277
  %315 = vmatmul.mubr.bf16.gmra.mrb[0].mxu0 %v89
  %v316 = vpop.f32.mrb[0].mxu0
  %v317 = vadd.f32 %v60, %v316
  %v318 = vpop.f32.mrb[0].mxu0
  %v319 = vadd.f32 %v64, %v318
  %v320 = vpop.f32.mrb[0].mxu0
  %v321 = vadd.f32 %v60, %v320
  %v322 = vpop.f32.mrb[0].mxu0
  %v323 = vadd.f32 %v64, %v322
  %324 = vmatprep.mubr.bf16.mxu0 %v280
  %325 = vmatmul.mubr.bf16.gmra.mrb[0].mxu0 %v91
  %v326 = vpop.f32.mrb[0].mxu0
  %v327 = vadd.f32 %v60, %v326
  %v328 = vpop.f32.mrb[0].mxu0
  %v329 = vadd.f32 %v64, %v328
  %v330 = vpop.f32.mrb[0].mxu0
  %v331 = vadd.f32 %v60, %v330
  %v332 = vpop.f32.mrb[0].mxu0
  %v333 = vadd.f32 %v64, %v332
  %334 = vdwg.mxu0
  %335 = vmatprep.subr.bf16.mxu0 %v206
  %336 = vmatpush1.bf16.msra.mxu0 %v205
  %337 = vmatprep.subr.bf16.mxu0 %v210
  %338 = vmatpush1.bf16.msra.mxu0 %v209
  %339 = vmatprep.subr.bf16.mxu0 %v214
  %340 = vmatpush1.bf16.msra.mxu0 %v213
  %341 = vmatprep.subr.bf16.mxu0 %v218
  %342 = vmatpush1.bf16.msra.mxu0 %v217
  %343 = vmatprep.subr.bf16.mxu0 %v222
  %344 = vmatpush1.bf16.msra.mxu0 %v221
  %345 = vmatprep.subr.bf16.mxu0 %v226
  %346 = vmatpush1.bf16.msra.mxu0 %v225
  %347 = vmatprep.subr.bf16.mxu0 %v230
  %348 = vmatpush1.bf16.msra.mxu0 %v229
  %349 = vmatprep.subr.bf16.mxu0 %v234
  %350 = vmatpush1.bf16.msra.mxu0 %v233
  %351 = vmatprep.subr.bf16.mxu0 %v238
  %352 = vmatpush1.bf16.msra.mxu0 %v237
  %353 = vmatprep.subr.bf16.mxu0 0
  %354 = vmatpush1.bf16.msra.mxu0 0
  %355 = vmatprep.subr.bf16.mxu0 0
  %356 = vmatpush1.bf16.msra.mxu0 0
  %357 = vmatprep.subr.bf16.mxu0 0
  %358 = vmatpush1.bf16.msra.mxu0 0
  %359 = vmatprep.subr.bf16.mxu0 0
  %360 = vmatpush1.bf16.msra.mxu0 0
  %361 = vmatprep.subr.bf16.mxu0 0
  %362 = vmatpush1.bf16.msra.mxu0 0
  %363 = vmatprep.subr.bf16.mxu0 0
  %364 = vmatpush1.bf16.msra.mxu0 0
  %365 = vmatprep.subr.bf16.mxu0 0
  %366 = vmatpush1.bf16.msra.mxu0 0
  %367 = vmatprep.mubr.bf16.mxu0 %v277
  %368 = vmatmul.mubr.bf16.gmra.mrb[0].mxu0 %v89
  %v369 = vpop.f32.mrb[0].mxu0
  %v370 = vadd.f32 %v68, %v369
  %v371 = vpop.f32.mrb[0].mxu0
  %v372 = vadd.f32 %v72, %v371
  %v373 = vpop.f32.mrb[0].mxu0
  %v374 = vadd.f32 %v68, %v373
  %v375 = vpop.f32.mrb[0].mxu0
  %v376 = vadd.f32 %v72, %v375
  %377 = vmatprep.mubr.bf16.mxu0 %v280
  %378 = vmatmul.mubr.bf16.gmra.mrb[0].mxu0 %v91
  %v379 = vpop.f32.mrb[0].mxu0
  %v380 = vadd.f32 %v68, %v379
  %v381 = vpop.f32.mrb[0].mxu0
  %v382 = vadd.f32 %v72, %v381
  %v383 = vpop.f32.mrb[0].mxu0
  %v384 = vadd.f32 %v68, %v383
  %v385 = vpop.f32.mrb[0].mxu0
  %v386 = vadd.f32 %v72, %v385
  %387 = vdwg.mxu0
  %v388 = vmax.f32 %v317, 0.0
  %v389 = vmax.f32 %v319, 0.0
  %v390 = vmax.f32 %v370, 0.0
  %v391 = vmax.f32 %v372, 0.0
  %v392 = vmax.f32 %v321, 0.0
  %v393 = vmax.f32 %v323, 0.0
  %v394 = vmax.f32 %v374, 0.0
  %v395 = vmax.f32 %v376, 0.0
  %v396 = vmax.f32 %v327, 0.0
  %v397 = vmax.f32 %v329, 0.0
  %v398 = vmax.f32 %v380, 0.0
  %v399 = vmax.f32 %v382, 0.0
  %v400 = vmax.f32 %v331, 0.0
  %v401 = vmax.f32 %v333, 0.0
  %v402 = vmax.f32 %v384, 0.0
  %v403 = vmax.f32 %v386, 0.0
  %404 = vst [vmem:[%s3] sm:$0xff] %v388
  %405 = vst [vmem:[%s3 + $0x8] sm:$0xff] %v389
  %406 = vst [vmem:[%s3 + $0x10] sm:$0xff] %v390
  %407 = vst [vmem:[%s3 + $0x18] sm:$0xff] %v391
  %408 = vst [vmem:[%s3 + $0x20] sm:$0xff] %v392
  %409 = vst [vmem:[%s3 + $0x28] sm:$0xff] %v393
  %410 = vst [vmem:[%s3 + $0x30] sm:$0xff] %v394
  %411 = vst [vmem:[%s3 + $0x38] sm:$0xff] %v395
  %412 = vst [vmem:[%s3 + $0x40] sm:$0xff] %v396
  %413 = vst [vmem:[%s3 + $0x48] sm:$0xff] %v397
  %414 = vst [vmem:[%s3 + $0x50] sm:$0xff] %v398
  %415 = vst [vmem:[%s3 + $0x58] sm:$0xff] %v399
  %416 = vst [vmem:[%s3 + $0x60] sm:$0xff] %v400
  %417 = vst [vmem:[%s3 + $0x68] sm:$0xff] %v401
  %418 = vst [vmem:[%s3 + $0x70] sm:$0xff] %v402
  %419 = vst [vmem:[%s3 + $0x78] sm:$0xff] %v403
  // Predicated region
  $region14: #{generator_forward.12} parent=0 // pred_check
    _
  $region15: #{generator_forward.12} parent=0 // pred_check_branch
    %421 = sbr.rel (0) target = $region17
  $region16: #{generator_forward.12} parent=0 // pred_region
    _
  $region17: #{generator_forward.12} parent=0 // pred_fallthru
    _
  // Predicated region
  $region18: #{generator_forward.12} parent=0 // pred_check
    _
  $region19: #{generator_forward.12} parent=0 // pred_check_branch
    %423 = sbr.rel (0) target = $region21
  $region20: #{generator_forward.12} parent=0 // pred_region
    _
  $region21: #{generator_forward.12} parent=0 // pred_fallthru
    _

// kernel: generator_forward.10
$region0: #{generator_forward.10}
  #allocation0 [shape = 'u32[]', space=smem, size = 0x4, offset = 0x4, fixed_abs, tag = 'smem constant byte address 0x4 - core index']
  #allocation1 [shape = 'u32[144,128]{1,0:T(1,128)}', space=vmem, size = 0x12000, scoped, tag = 'internal scratch']
  %s0 = inlined_call_operand.vmem [shape: f32[2,512], index: 0, kind: input, shape index: {}]
  %s1 = inlined_call_operand.vmem [shape: bf16[2,512,512], index: 1, kind: input, shape index: {}]
  %s2 = inlined_call_operand.vmem [shape: f32[2,1,512], index: 2, kind: input, shape index: {}]
  %s3 = inlined_call_operand.vmem [shape: bf16[2,512,512], index: 3, kind: input, shape index: {}]
  %s4 = inlined_call_operand.vmem [shape: f32[2,1,512], index: 4, kind: input, shape index: {}]
  %s5 = inlined_call_operand.vmem [shape: f32[2,512], index: 5, kind: output, shape index: {}]
  %s6 = sld [smem:[#allocation0]]
  $region30: #{generator_forward.10} parent=0
    _
  %s8 = ssub.s32 1, %s6
  %s9 = scalar_select 0, %s8, %s6
  // Predicated region
  $region2: #{generator_forward.10} parent=0 // pred_check
    _
  $region3: #{generator_forward.10} parent=0 // pred_check_branch
    %11 = sbr.rel (0) target = $region5
  $region4: #{generator_forward.10} parent=0 // pred_region
    _
  $region5: #{generator_forward.10} parent=0 // pred_fallthru
    _
  // Predicated region
  $region6: #{generator_forward.10} parent=0 // pred_check
    _
  $region7: #{generator_forward.10} parent=0 // pred_check_branch
    %13 = sbr.rel (0) target = $region9
  $region8: #{generator_forward.10} parent=0 // pred_region
    _
  $region9: #{generator_forward.10} parent=0 // pred_fallthru
    _
  // Predicated region
  $region10: #{generator_forward.10} parent=0 // pred_check
    _
  $region11: #{generator_forward.10} parent=0 // pred_check_branch
    %15 = sbr.rel (0) target = $region13
  $region12: #{generator_forward.10} parent=0 // pred_region
    _
  $region13: #{generator_forward.10} parent=0 // pred_fallthru
    _
  // Predicated region
  $region14: #{generator_forward.10} parent=0 // pred_check
    _
  $region15: #{generator_forward.10} parent=0 // pred_check_branch
    %17 = sbr.rel (0) target = $region17
  $region16: #{generator_forward.10} parent=0 // pred_region
    _
  $region17: #{generator_forward.10} parent=0 // pred_fallthru
    _
  // Predicated region
  $region18: #{generator_forward.10} parent=0 // pred_check
    _
  $region19: #{generator_forward.10} parent=0 // pred_check_branch
    %19 = sbr.rel (0) target = $region21
  $region20: #{generator_forward.10} parent=0 // pred_region
    _
  $region21: #{generator_forward.10} parent=0 // pred_fallthru
    _
  %v20 = vld [vmem:[%s0] sm:$0xff]
  %v22 = vcombine.high %v20, %v20
  %v24 = vunpack.c.l.s4 1983009808
  %v25 = vunpack.c.0.s8 %v24
  %v26 = vlaneseq
  %v27 = vshrl.u32 %v26, 7
  %v28 = vsub.s32 %v25, %v27
  %v29 = vrot.slane %v20, %v28
  %v31 = vunpack.c.l.s4 1983009808
  %v32 = vunpack.c.0.s8 %v31
  %v33 = vlaneseq
  %v34 = vshrl.u32 %v33, 7
  %v35 = vsub.s32 %v32, %v34
  %v36 = vrot.slane %v22, %v35
  %v37 = vcombine.high %v29, %v29
  %v38 = vcombine.high %v36, %v36
  %v43 = vpack.c.bf16 %v29, %v29
  %v44 = vpack.c.bf16 %v37, %v37
  %v45 = vpack.c.bf16 %v36, %v36
  %v46 = vpack.c.bf16 %v38, %v38
  %v47 = vld [vmem:[%s1] sm:$0xff]
  %v48 = vld [vmem:[%s1 + $0x8] sm:$0xff]
  %v49 = vld [vmem:[%s1 + $0x10] sm:$0xff]
  %v50 = vld [vmem:[%s1 + $0x18] sm:$0xff]
  %v51 = vld [vmem:[%s1 + $0x20] sm:$0xff]
  %v52 = vld [vmem:[%s1 + $0x28] sm:$0xff]
  %v53 = vld [vmem:[%s1 + $0x30] sm:$0xff]
  %v54 = vld [vmem:[%s1 + $0x38] sm:$0xff]
  %v55 = vld [vmem:[%s1 + $0x40] sm:$0xff]
  %v56 = vld [vmem:[%s1 + $0x48] sm:$0xff]
  %v57 = vld [vmem:[%s1 + $0x50] sm:$0xff]
  %v58 = vld [vmem:[%s1 + $0x58] sm:$0xff]
  %v59 = vld [vmem:[%s1 + $0x60] sm:$0xff]
  %v60 = vld [vmem:[%s1 + $0x68] sm:$0xff]
  %v61 = vld [vmem:[%s1 + $0x70] sm:$0xff]
  %v62 = vld [vmem:[%s1 + $0x78] sm:$0xff]
  %v63 = vld [vmem:[%s1 + $0x80] sm:$0xff]
  %v64 = vld [vmem:[%s1 + $0x88] sm:$0xff]
  %v65 = vld [vmem:[%s1 + $0x90] sm:$0xff]
  %v66 = vld [vmem:[%s1 + $0x98] sm:$0xff]
  %v67 = vld [vmem:[%s1 + $0xa0] sm:$0xff]
  %v68 = vld [vmem:[%s1 + $0xa8] sm:$0xff]
  %v69 = vld [vmem:[%s1 + $0xb0] sm:$0xff]
  %v70 = vld [vmem:[%s1 + $0xb8] sm:$0xff]
  %v71 = vld [vmem:[%s1 + $0xc0] sm:$0xff]
  %v72 = vld [vmem:[%s1 + $0xc8] sm:$0xff]
  %v73 = vld [vmem:[%s1 + $0xd0] sm:$0xff]
  %v74 = vld [vmem:[%s1 + $0xd8] sm:$0xff]
  %v75 = vld [vmem:[%s1 + $0xe0] sm:$0xff]
  %v76 = vld [vmem:[%s1 + $0xe8] sm:$0xff]
  %v77 = vld [vmem:[%s1 + $0xf0] sm:$0xff]
  %v78 = vld [vmem:[%s1 + $0xf8] sm:$0xff]
  %v79 = vld [vmem:[%s1 + $0x100] sm:$0xff]
  %v80 = vld [vmem:[%s1 + $0x108] sm:$0xff]
  %v81 = vld [vmem:[%s1 + $0x110] sm:$0xff]
  %v82 = vld [vmem:[%s1 + $0x118] sm:$0xff]
  %v83 = vld [vmem:[%s1 + $0x120] sm:$0xff]
  %v84 = vld [vmem:[%s1 + $0x128] sm:$0xff]
  %v85 = vld [vmem:[%s1 + $0x130] sm:$0xff]
  %v86 = vld [vmem:[%s1 + $0x138] sm:$0xff]
  %v87 = vld [vmem:[%s1 + $0x140] sm:$0xff]
  %v88 = vld [vmem:[%s1 + $0x148] sm:$0xff]
  %v89 = vld [vmem:[%s1 + $0x150] sm:$0xff]
  %v90 = vld [vmem:[%s1 + $0x158] sm:$0xff]
  %v91 = vld [vmem:[%s1 + $0x160] sm:$0xff]
  %v92 = vld [vmem:[%s1 + $0x168] sm:$0xff]
  %v93 = vld [vmem:[%s1 + $0x170] sm:$0xff]
  %v94 = vld [vmem:[%s1 + $0x178] sm:$0xff]
  %v95 = vld [vmem:[%s1 + $0x180] sm:$0xff]
  %v96 = vld [vmem:[%s1 + $0x188] sm:$0xff]
  %v97 = vld [vmem:[%s1 + $0x190] sm:$0xff]
  %v98 = vld [vmem:[%s1 + $0x198] sm:$0xff]
  %v99 = vld [vmem:[%s1 + $0x1a0] sm:$0xff]
  %v100 = vld [vmem:[%s1 + $0x1a8] sm:$0xff]
  %v101 = vld [vmem:[%s1 + $0x1b0] sm:$0xff]
  %v102 = vld [vmem:[%s1 + $0x1b8] sm:$0xff]
  %v103 = vld [vmem:[%s1 + $0x1c0] sm:$0xff]
  %v104 = vld [vmem:[%s1 + $0x1c8] sm:$0xff]
  %v105 = vld [vmem:[%s1 + $0x1d0] sm:$0xff]
  %v106 = vld [vmem:[%s1 + $0x1d8] sm:$0xff]
  %v107 = vld [vmem:[%s1 + $0x1e0] sm:$0xff]
  %v108 = vld [vmem:[%s1 + $0x1e8] sm:$0xff]
  %v109 = vld [vmem:[%s1 + $0x1f0] sm:$0xff]
  %v110 = vld [vmem:[%s1 + $0x1f8] sm:$0xff]
  %v111 = vld [vmem:[%s1 + $0x200] sm:$0xff]
  %v112 = vld [vmem:[%s1 + $0x208] sm:$0xff]
  %v113 = vld [vmem:[%s1 + $0x210] sm:$0xff]
  %v114 = vld [vmem:[%s1 + $0x218] sm:$0xff]
  %v115 = vld [vmem:[%s1 + $0x220] sm:$0xff]
  %v116 = vld [vmem:[%s1 + $0x228] sm:$0xff]
  %v117 = vld [vmem:[%s1 + $0x230] sm:$0xff]
  %v118 = vld [vmem:[%s1 + $0x238] sm:$0xff]
  %v119 = vld [vmem:[%s1 + $0x240] sm:$0xff]
  %v120 = vld [vmem:[%s1 + $0x248] sm:$0xff]
  %v121 = vld [vmem:[%s1 + $0x250] sm:$0xff]
  %v122 = vld [vmem:[%s1 + $0x258] sm:$0xff]
  %v123 = vld [vmem:[%s1 + $0x260] sm:$0xff]
  %v124 = vld [vmem:[%s1 + $0x268] sm:$0xff]
  %v125 = vld [vmem:[%s1 + $0x270] sm:$0xff]
  %v126 = vld [vmem:[%s1 + $0x278] sm:$0xff]
  %v127 = vld [vmem:[%s1 + $0x280] sm:$0xff]
  %v128 = vld [vmem:[%s1 + $0x288] sm:$0xff]
  %v129 = vld [vmem:[%s1 + $0x290] sm:$0xff]
  %v130 = vld [vmem:[%s1 + $0x298] sm:$0xff]
  %v131 = vld [vmem:[%s1 + $0x2a0] sm:$0xff]
  %v132 = vld [vmem:[%s1 + $0x2a8] sm:$0xff]
  %v133 = vld [vmem:[%s1 + $0x2b0] sm:$0xff]
  %v134 = vld [vmem:[%s1 + $0x2b8] sm:$0xff]
  %v135 = vld [vmem:[%s1 + $0x2c0] sm:$0xff]
  %v136 = vld [vmem:[%s1 + $0x2c8] sm:$0xff]
  %v137 = vld [vmem:[%s1 + $0x2d0] sm:$0xff]
  %v138 = vld [vmem:[%s1 + $0x2d8] sm:$0xff]
  %v139 = vld [vmem:[%s1 + $0x2e0] sm:$0xff]
  %v140 = vld [vmem:[%s1 + $0x2e8] sm:$0xff]
  %v141 = vld [vmem:[%s1 + $0x2f0] sm:$0xff]
  %v142 = vld [vmem:[%s1 + $0x2f8] sm:$0xff]
  %v143 = vld [vmem:[%s1 + $0x300] sm:$0xff]
  %v144 = vld [vmem:[%s1 + $0x308] sm:$0xff]
  %v145 = vld [vmem:[%s1 + $0x310] sm:$0xff]
  %v146 = vld [vmem:[%s1 + $0x318] sm:$0xff]
  %v147 = vld [vmem:[%s1 + $0x320] sm:$0xff]
  %v148 = vld [vmem:[%s1 + $0x328] sm:$0xff]
  %v149 = vld [vmem:[%s1 + $0x330] sm:$0xff]
  %v150 = vld [vmem:[%s1 + $0x338] sm:$0xff]
  %v151 = vld [vmem:[%s1 + $0x340] sm:$0xff]
  %v152 = vld [vmem:[%s1 + $0x348] sm:$0xff]
  %v153 = vld [vmem:[%s1 + $0x350] sm:$0xff]
  %v154 = vld [vmem:[%s1 + $0x358] sm:$0xff]
  %v155 = vld [vmem:[%s1 + $0x360] sm:$0xff]
  %v156 = vld [vmem:[%s1 + $0x368] sm:$0xff]
  %v157 = vld [vmem:[%s1 + $0x370] sm:$0xff]
  %v158 = vld [vmem:[%s1 + $0x378] sm:$0xff]
  %v159 = vld [vmem:[%s1 + $0x380] sm:$0xff]
  %v160 = vld [vmem:[%s1 + $0x388] sm:$0xff]
  %v161 = vld [vmem:[%s1 + $0x390] sm:$0xff]
  %v162 = vld [vmem:[%s1 + $0x398] sm:$0xff]
  %v163 = vld [vmem:[%s1 + $0x3a0] sm:$0xff]
  %v164 = vld [vmem:[%s1 + $0x3a8] sm:$0xff]
  %v165 = vld [vmem:[%s1 + $0x3b0] sm:$0xff]
  %v166 = vld [vmem:[%s1 + $0x3b8] sm:$0xff]
  %v167 = vld [vmem:[%s1 + $0x3c0] sm:$0xff]
  %v168 = vld [vmem:[%s1 + $0x3c8] sm:$0xff]
  %v169 = vld [vmem:[%s1 + $0x3d0] sm:$0xff]
  %v170 = vld [vmem:[%s1 + $0x3d8] sm:$0xff]
  %v171 = vld [vmem:[%s1 + $0x3e0] sm:$0xff]
  %v172 = vld [vmem:[%s1 + $0x3e8] sm:$0xff]
  %v173 = vld [vmem:[%s1 + $0x3f0] sm:$0xff]
  %v174 = vld [vmem:[%s1 + $0x3f8] sm:$0xff]
  %v175 = vld [vmem:[%s2] sm:$0xf]
  %v177 = vlaneseq
  %v178 = vshrl.u32 %v177, 7
  %v179 = vsub.s32 0, %v178
  %v180 = vrot.slane %v175, %v179
  %v181 = vlaneseq
  %v182 = vshrl.u32 %v181, 7
  %v183 = vsub.s32 1, %v182
  %v184 = vrot.slane %v175, %v183
  %v185 = vlaneseq
  %v186 = vshrl.u32 %v185, 7
  %v187 = vsub.s32 2, %v186
  %v188 = vrot.slane %v175, %v187
  %v189 = vlaneseq
  %v190 = vshrl.u32 %v189, 7
  %v191 = vsub.s32 3, %v190
  %v192 = vrot.slane %v175, %v191
  %v325 = vunpack.c.l.b16 %v47
  %v326 = vunpack.c.h.b16 %v47
  %v327 = vunpack.c.l.b16 %v48
  %v328 = vunpack.c.h.b16 %v48
  %v329 = vunpack.c.l.b16 %v49
  %v330 = vunpack.c.h.b16 %v49
  %v331 = vunpack.c.l.b16 %v50
  %v332 = vunpack.c.h.b16 %v50
  %v333 = vunpack.c.l.b16 %v51
  %v334 = vunpack.c.h.b16 %v51
  %v335 = vunpack.c.l.b16 %v52
  %v336 = vunpack.c.h.b16 %v52
  %v337 = vunpack.c.l.b16 %v53
  %v338 = vunpack.c.h.b16 %v53
  %v339 = vunpack.c.l.b16 %v54
  %v340 = vunpack.c.h.b16 %v54
  %v341 = vunpack.c.l.b16 %v55
  %v342 = vunpack.c.h.b16 %v55
  %v343 = vunpack.c.l.b16 %v56
  %v344 = vunpack.c.h.b16 %v56
  %v345 = vunpack.c.l.b16 %v57
  %v346 = vunpack.c.h.b16 %v57
  %v347 = vunpack.c.l.b16 %v58
  %v348 = vunpack.c.h.b16 %v58
  %v349 = vunpack.c.l.b16 %v59
  %v350 = vunpack.c.h.b16 %v59
  %v351 = vunpack.c.l.b16 %v60
  %v352 = vunpack.c.h.b16 %v60
  %v353 = vunpack.c.l.b16 %v61
  %v354 = vunpack.c.h.b16 %v61
  %v355 = vunpack.c.l.b16 %v62
  %v356 = vunpack.c.h.b16 %v62
  %v357 = vunpack.c.l.b16 %v63
  %v358 = vunpack.c.h.b16 %v63
  %v359 = vunpack.c.l.b16 %v64
  %v360 = vunpack.c.h.b16 %v64
  %v361 = vunpack.c.l.b16 %v65
  %v362 = vunpack.c.h.b16 %v65
  %v363 = vunpack.c.l.b16 %v66
  %v364 = vunpack.c.h.b16 %v66
  %v365 = vunpack.c.l.b16 %v67
  %v366 = vunpack.c.h.b16 %v67
  %v367 = vunpack.c.l.b16 %v68
  %v368 = vunpack.c.h.b16 %v68
  %v369 = vunpack.c.l.b16 %v69
  %v370 = vunpack.c.h.b16 %v69
  %v371 = vunpack.c.l.b16 %v70
  %v372 = vunpack.c.h.b16 %v70
  %v373 = vunpack.c.l.b16 %v71
  %v374 = vunpack.c.h.b16 %v71
  %v375 = vunpack.c.l.b16 %v72
  %v376 = vunpack.c.h.b16 %v72
  %v377 = vunpack.c.l.b16 %v73
  %v378 = vunpack.c.h.b16 %v73
  %v379 = vunpack.c.l.b16 %v74
  %v380 = vunpack.c.h.b16 %v74
  %v381 = vunpack.c.l.b16 %v75
  %v382 = vunpack.c.h.b16 %v75
  %v383 = vunpack.c.l.b16 %v76
  %v384 = vunpack.c.h.b16 %v76
  %v385 = vunpack.c.l.b16 %v77
  %v386 = vunpack.c.h.b16 %v77
  %v387 = vunpack.c.l.b16 %v78
  %v388 = vunpack.c.h.b16 %v78
  %v389 = vunpack.c.l.b16 %v79
  %v390 = vunpack.c.h.b16 %v79
  %v391 = vunpack.c.l.b16 %v80
  %v392 = vunpack.c.h.b16 %v80
  %v393 = vunpack.c.l.b16 %v81
  %v394 = vunpack.c.h.b16 %v81
  %v395 = vunpack.c.l.b16 %v82
  %v396 = vunpack.c.h.b16 %v82
  %v397 = vunpack.c.l.b16 %v83
  %v398 = vunpack.c.h.b16 %v83
  %v399 = vunpack.c.l.b16 %v84
  %v400 = vunpack.c.h.b16 %v84
  %v401 = vunpack.c.l.b16 %v85
  %v402 = vunpack.c.h.b16 %v85
  %v403 = vunpack.c.l.b16 %v86
  %v404 = vunpack.c.h.b16 %v86
  %v405 = vunpack.c.l.b16 %v87
  %v406 = vunpack.c.h.b16 %v87
  %v407 = vunpack.c.l.b16 %v88
  %v408 = vunpack.c.h.b16 %v88
  %v409 = vunpack.c.l.b16 %v89
  %v410 = vunpack.c.h.b16 %v89
  %v411 = vunpack.c.l.b16 %v90
  %v412 = vunpack.c.h.b16 %v90
  %v413 = vunpack.c.l.b16 %v91
  %v414 = vunpack.c.h.b16 %v91
  %v415 = vunpack.c.l.b16 %v92
  %v416 = vunpack.c.h.b16 %v92
  %v417 = vunpack.c.l.b16 %v93
  %v418 = vunpack.c.h.b16 %v93
  %v419 = vunpack.c.l.b16 %v94
  %v420 = vunpack.c.h.b16 %v94
  %v421 = vunpack.c.l.b16 %v95
  %v422 = vunpack.c.h.b16 %v95
  %v423 = vunpack.c.l.b16 %v96
  %v424 = vunpack.c.h.b16 %v96
  %v425 = vunpack.c.l.b16 %v97
  %v426 = vunpack.c.h.b16 %v97
  %v427 = vunpack.c.l.b16 %v98
  %v428 = vunpack.c.h.b16 %v98
  %v429 = vunpack.c.l.b16 %v99
  %v430 = vunpack.c.h.b16 %v99
  %v431 = vunpack.c.l.b16 %v100
  %v432 = vunpack.c.h.b16 %v100
  %v433 = vunpack.c.l.b16 %v101
  %v434 = vunpack.c.h.b16 %v101
  %v435 = vunpack.c.l.b16 %v102
  %v436 = vunpack.c.h.b16 %v102
  %v437 = vunpack.c.l.b16 %v103
  %v438 = vunpack.c.h.b16 %v103
  %v439 = vunpack.c.l.b16 %v104
  %v440 = vunpack.c.h.b16 %v104
  %v441 = vunpack.c.l.b16 %v105
  %v442 = vunpack.c.h.b16 %v105
  %v443 = vunpack.c.l.b16 %v106
  %v444 = vunpack.c.h.b16 %v106
  %v445 = vunpack.c.l.b16 %v107
  %v446 = vunpack.c.h.b16 %v107
  %v447 = vunpack.c.l.b16 %v108
  %v448 = vunpack.c.h.b16 %v108
  %v449 = vunpack.c.l.b16 %v109
  %v450 = vunpack.c.h.b16 %v109
  %v451 = vunpack.c.l.b16 %v110
  %v452 = vunpack.c.h.b16 %v110
  %v453 = vunpack.c.l.b16 %v111
  %v454 = vunpack.c.h.b16 %v111
  %v455 = vunpack.c.l.b16 %v112
  %v456 = vunpack.c.h.b16 %v112
  %v457 = vunpack.c.l.b16 %v113
  %v458 = vunpack.c.h.b16 %v113
  %v459 = vunpack.c.l.b16 %v114
  %v460 = vunpack.c.h.b16 %v114
  %v461 = vunpack.c.l.b16 %v115
  %v462 = vunpack.c.h.b16 %v115
  %v463 = vunpack.c.l.b16 %v116
  %v464 = vunpack.c.h.b16 %v116
  %v465 = vunpack.c.l.b16 %v117
  %v466 = vunpack.c.h.b16 %v117
  %v467 = vunpack.c.l.b16 %v118
  %v468 = vunpack.c.h.b16 %v118
  %v469 = vunpack.c.l.b16 %v119
  %v470 = vunpack.c.h.b16 %v119
  %v471 = vunpack.c.l.b16 %v120
  %v472 = vunpack.c.h.b16 %v120
  %v473 = vunpack.c.l.b16 %v121
  %v474 = vunpack.c.h.b16 %v121
  %v475 = vunpack.c.l.b16 %v122
  %v476 = vunpack.c.h.b16 %v122
  %v477 = vunpack.c.l.b16 %v123
  %v478 = vunpack.c.h.b16 %v123
  %v479 = vunpack.c.l.b16 %v124
  %v480 = vunpack.c.h.b16 %v124
  %v481 = vunpack.c.l.b16 %v125
  %v482 = vunpack.c.h.b16 %v125
  %v483 = vunpack.c.l.b16 %v126
  %v484 = vunpack.c.h.b16 %v126
  %v485 = vunpack.c.l.b16 %v127
  %v486 = vunpack.c.h.b16 %v127
  %v487 = vunpack.c.l.b16 %v128
  %v488 = vunpack.c.h.b16 %v128
  %v489 = vunpack.c.l.b16 %v129
  %v490 = vunpack.c.h.b16 %v129
  %v491 = vunpack.c.l.b16 %v130
  %v492 = vunpack.c.h.b16 %v130
  %v493 = vunpack.c.l.b16 %v131
  %v494 = vunpack.c.h.b16 %v131
  %v495 = vunpack.c.l.b16 %v132
  %v496 = vunpack.c.h.b16 %v132
  %v497 = vunpack.c.l.b16 %v133
  %v498 = vunpack.c.h.b16 %v133
  %v499 = vunpack.c.l.b16 %v134
  %v500 = vunpack.c.h.b16 %v134
  %v501 = vunpack.c.l.b16 %v135
  %v502 = vunpack.c.h.b16 %v135
  %v503 = vunpack.c.l.b16 %v136
  %v504 = vunpack.c.h.b16 %v136
  %v505 = vunpack.c.l.b16 %v137
  %v506 = vunpack.c.h.b16 %v137
  %v507 = vunpack.c.l.b16 %v138
  %v508 = vunpack.c.h.b16 %v138
  %v509 = vunpack.c.l.b16 %v139
  %v510 = vunpack.c.h.b16 %v139
  %v511 = vunpack.c.l.b16 %v140
  %v512 = vunpack.c.h.b16 %v140
  %v513 = vunpack.c.l.b16 %v141
  %v514 = vunpack.c.h.b16 %v141
  %v515 = vunpack.c.l.b16 %v142
  %v516 = vunpack.c.h.b16 %v142
  %v517 = vunpack.c.l.b16 %v143
  %v518 = vunpack.c.h.b16 %v143
  %v519 = vunpack.c.l.b16 %v144
  %v520 = vunpack.c.h.b16 %v144
  %v521 = vunpack.c.l.b16 %v145
  %v522 = vunpack.c.h.b16 %v145
  %v523 = vunpack.c.l.b16 %v146
  %v524 = vunpack.c.h.b16 %v146
  %v525 = vunpack.c.l.b16 %v147
  %v526 = vunpack.c.h.b16 %v147
  %v527 = vunpack.c.l.b16 %v148
  %v528 = vunpack.c.h.b16 %v148
  %v529 = vunpack.c.l.b16 %v149
  %v530 = vunpack.c.h.b16 %v149
  %v531 = vunpack.c.l.b16 %v150
  %v532 = vunpack.c.h.b16 %v150
  %v533 = vunpack.c.l.b16 %v151
  %v534 = vunpack.c.h.b16 %v151
  %v535 = vunpack.c.l.b16 %v152
  %v536 = vunpack.c.h.b16 %v152
  %v537 = vunpack.c.l.b16 %v153
  %v538 = vunpack.c.h.b16 %v153
  %v539 = vunpack.c.l.b16 %v154
  %v540 = vunpack.c.h.b16 %v154
  %v541 = vunpack.c.l.b16 %v155
  %v542 = vunpack.c.h.b16 %v155
  %v543 = vunpack.c.l.b16 %v156
  %v544 = vunpack.c.h.b16 %v156
  %v545 = vunpack.c.l.b16 %v157
  %v546 = vunpack.c.h.b16 %v157
  %v547 = vunpack.c.l.b16 %v158
  %v548 = vunpack.c.h.b16 %v158
  %v549 = vunpack.c.l.b16 %v159
  %v550 = vunpack.c.h.b16 %v159
  %v551 = vunpack.c.l.b16 %v160
  %v552 = vunpack.c.h.b16 %v160
  %v553 = vunpack.c.l.b16 %v161
  %v554 = vunpack.c.h.b16 %v161
  %v555 = vunpack.c.l.b16 %v162
  %v556 = vunpack.c.h.b16 %v162
  %v557 = vunpack.c.l.b16 %v163
  %v558 = vunpack.c.h.b16 %v163
  %v559 = vunpack.c.l.b16 %v164
  %v560 = vunpack.c.h.b16 %v164
  %v561 = vunpack.c.l.b16 %v165
  %v562 = vunpack.c.h.b16 %v165
  %v563 = vunpack.c.l.b16 %v166
  %v564 = vunpack.c.h.b16 %v166
  %v565 = vunpack.c.l.b16 %v167
  %v566 = vunpack.c.h.b16 %v167
  %v567 = vunpack.c.l.b16 %v168
  %v568 = vunpack.c.h.b16 %v168
  %v569 = vunpack.c.l.b16 %v169
  %v570 = vunpack.c.h.b16 %v169
  %v571 = vunpack.c.l.b16 %v170
  %v572 = vunpack.c.h.b16 %v170
  %v573 = vunpack.c.l.b16 %v171
  %v574 = vunpack.c.h.b16 %v171
  %v575 = vunpack.c.l.b16 %v172
  %v576 = vunpack.c.h.b16 %v172
  %v577 = vunpack.c.l.b16 %v173
  %v578 = vunpack.c.h.b16 %v173
  %v579 = vunpack.c.l.b16 %v174
  %v580 = vunpack.c.h.b16 %v174
  %v581 = vpack.c.b16 %v329, %v325
  %v582 = vpack.c.b16 %v330, %v326
  %v583 = vpack.c.b16 %v331, %v327
  %v584 = vpack.c.b16 %v332, %v328
  %v585 = vpack.c.b16 %v337, %v333
  %v586 = vpack.c.b16 %v338, %v334
  %v587 = vpack.c.b16 %v339, %v335
  %v588 = vpack.c.b16 %v340, %v336
  %v589 = vpack.c.b16 %v345, %v341
  %v590 = vpack.c.b16 %v346, %v342
  %v591 = vpack.c.b16 %v347, %v343
  %v592 = vpack.c.b16 %v348, %v344
  %v593 = vpack.c.b16 %v353, %v349
  %v594 = vpack.c.b16 %v354, %v350
  %v595 = vpack.c.b16 %v355, %v351
  %v596 = vpack.c.b16 %v356, %v352
  %v597 = vpack.c.b16 %v361, %v357
  %v598 = vpack.c.b16 %v362, %v358
  %v599 = vpack.c.b16 %v363, %v359
  %v600 = vpack.c.b16 %v364, %v360
  %v601 = vpack.c.b16 %v369, %v365
  %v602 = vpack.c.b16 %v370, %v366
  %v603 = vpack.c.b16 %v371, %v367
  %v604 = vpack.c.b16 %v372, %v368
  %v605 = vpack.c.b16 %v377, %v373
  %v606 = vpack.c.b16 %v378, %v374
  %v607 = vpack.c.b16 %v379, %v375
  %v608 = vpack.c.b16 %v380, %v376
  %v609 = vpack.c.b16 %v385, %v381
  %v610 = vpack.c.b16 %v386, %v382
  %v611 = vpack.c.b16 %v387, %v383
  %v612 = vpack.c.b16 %v388, %v384
  %v613 = vpack.c.b16 %v393, %v389
  %v614 = vpack.c.b16 %v394, %v390
  %v615 = vpack.c.b16 %v395, %v391
  %v616 = vpack.c.b16 %v396, %v392
  %v617 = vpack.c.b16 %v401, %v397
  %v618 = vpack.c.b16 %v402, %v398
  %v619 = vpack.c.b16 %v403, %v399
  %v620 = vpack.c.b16 %v404, %v400
  %v621 = vpack.c.b16 %v409, %v405
  %v622 = vpack.c.b16 %v410, %v406
  %v623 = vpack.c.b16 %v411, %v407
  %v624 = vpack.c.b16 %v412, %v408
  %v625 = vpack.c.b16 %v417, %v413
  %v626 = vpack.c.b16 %v418, %v414
  %v627 = vpack.c.b16 %v419, %v415
  %v628 = vpack.c.b16 %v420, %v416
  %v629 = vpack.c.b16 %v425, %v421
  %v630 = vpack.c.b16 %v426, %v422
  %v631 = vpack.c.b16 %v427, %v423
  %v632 = vpack.c.b16 %v428, %v424
  %v633 = vpack.c.b16 %v433, %v429
  %v634 = vpack.c.b16 %v434, %v430
  %v635 = vpack.c.b16 %v435, %v431
  %v636 = vpack.c.b16 %v436, %v432
  %v637 = vpack.c.b16 %v441, %v437
  %v638 = vpack.c.b16 %v442, %v438
  %v639 = vpack.c.b16 %v443, %v439
  %v640 = vpack.c.b16 %v444, %v440
  %v641 = vpack.c.b16 %v449, %v445
  %v642 = vpack.c.b16 %v450, %v446
  %v643 = vpack.c.b16 %v451, %v447
  %v644 = vpack.c.b16 %v452, %v448
  %v645 = vpack.c.b16 %v457, %v453
  %v646 = vpack.c.b16 %v458, %v454
  %v647 = vpack.c.b16 %v459, %v455
  %v648 = vpack.c.b16 %v460, %v456
  %v649 = vpack.c.b16 %v465, %v461
  %v650 = vpack.c.b16 %v466, %v462
  %v651 = vpack.c.b16 %v467, %v463
  %v652 = vpack.c.b16 %v468, %v464
  %v653 = vpack.c.b16 %v473, %v469
  %v654 = vpack.c.b16 %v474, %v470
  %v655 = vpack.c.b16 %v475, %v471
  %v656 = vpack.c.b16 %v476, %v472
  %v657 = vpack.c.b16 %v481, %v477
  %v658 = vpack.c.b16 %v482, %v478
  %v659 = vpack.c.b16 %v483, %v479
  %v660 = vpack.c.b16 %v484, %v480
  %v661 = vpack.c.b16 %v489, %v485
  %v662 = vpack.c.b16 %v490, %v486
  %v663 = vpack.c.b16 %v491, %v487
  %v664 = vpack.c.b16 %v492, %v488
  %v665 = vpack.c.b16 %v497, %v493
  %v666 = vpack.c.b16 %v498, %v494
  %v667 = vpack.c.b16 %v499, %v495
  %v668 = vpack.c.b16 %v500, %v496
  %v669 = vpack.c.b16 %v505, %v501
  %v670 = vpack.c.b16 %v506, %v502
  %v671 = vpack.c.b16 %v507, %v503
  %v672 = vpack.c.b16 %v508, %v504
  %v673 = vpack.c.b16 %v513, %v509
  %v674 = vpack.c.b16 %v514, %v510
  %v675 = vpack.c.b16 %v515, %v511
  %v676 = vpack.c.b16 %v516, %v512
  %v677 = vpack.c.b16 %v521, %v517
  %v678 = vpack.c.b16 %v522, %v518
  %v679 = vpack.c.b16 %v523, %v519
  %v680 = vpack.c.b16 %v524, %v520
  %v681 = vpack.c.b16 %v529, %v525
  %v682 = vpack.c.b16 %v530, %v526
  %v683 = vpack.c.b16 %v531, %v527
  %v684 = vpack.c.b16 %v532, %v528
  %v685 = vpack.c.b16 %v537, %v533
  %v686 = vpack.c.b16 %v538, %v534
  %v687 = vpack.c.b16 %v539, %v535
  %v688 = vpack.c.b16 %v540, %v536
  %v689 = vpack.c.b16 %v545, %v541
  %v690 = vpack.c.b16 %v546, %v542
  %v691 = vpack.c.b16 %v547, %v543
  %v692 = vpack.c.b16 %v548, %v544
  %v693 = vpack.c.b16 %v553, %v549
  %v694 = vpack.c.b16 %v554, %v550
  %v695 = vpack.c.b16 %v555, %v551
  %v696 = vpack.c.b16 %v556, %v552
  %v697 = vpack.c.b16 %v561, %v557
  %v698 = vpack.c.b16 %v562, %v558
  %v699 = vpack.c.b16 %v563, %v559
  %v700 = vpack.c.b16 %v564, %v560
  %v701 = vpack.c.b16 %v569, %v565
  %v702 = vpack.c.b16 %v570, %v566
  %v703 = vpack.c.b16 %v571, %v567
  %v704 = vpack.c.b16 %v572, %v568
  %v705 = vpack.c.b16 %v577, %v573
  %v706 = vpack.c.b16 %v578, %v574
  %v707 = vpack.c.b16 %v579, %v575
  %v708 = vpack.c.b16 %v580, %v576
  %837 = vmatprep.subr.bf16.mxu0 %v582
  %838 = vmatpush1.bf16.msra.mxu0 %v581
  %839 = vmatprep.subr.bf16.mxu0 %v586
  %840 = vmatpush1.bf16.msra.mxu0 %v585
  %841 = vmatprep.subr.bf16.mxu0 %v590
  %842 = vmatpush1.bf16.msra.mxu0 %v589
  %843 = vmatprep.subr.bf16.mxu0 %v594
  %844 = vmatpush1.bf16.msra.mxu0 %v593
  %845 = vmatprep.subr.bf16.mxu0 %v598
  %846 = vmatpush1.bf16.msra.mxu0 %v597
  %847 = vmatprep.subr.bf16.mxu0 %v602
  %848 = vmatpush1.bf16.msra.mxu0 %v601
  %849 = vmatprep.subr.bf16.mxu0 %v606
  %850 = vmatpush1.bf16.msra.mxu0 %v605
  %851 = vmatprep.subr.bf16.mxu0 %v610
  %852 = vmatpush1.bf16.msra.mxu0 %v609
  %853 = vmatprep.subr.bf16.mxu0 %v614
  %854 = vmatpush1.bf16.msra.mxu0 %v613
  %855 = vmatprep.subr.bf16.mxu0 %v618
  %856 = vmatpush1.bf16.msra.mxu0 %v617
  %857 = vmatprep.subr.bf16.mxu0 %v622
  %858 = vmatpush1.bf16.msra.mxu0 %v621
  %859 = vmatprep.subr.bf16.mxu0 %v626
  %860 = vmatpush1.bf16.msra.mxu0 %v625
  %861 = vmatprep.subr.bf16.mxu0 %v630
  %862 = vmatpush1.bf16.msra.mxu0 %v629
  %863 = vmatprep.subr.bf16.mxu0 %v634
  %864 = vmatpush1.bf16.msra.mxu0 %v633
  %865 = vmatprep.subr.bf16.mxu0 %v638
  %866 = vmatpush1.bf16.msra.mxu0 %v637
  %867 = vmatprep.subr.bf16.mxu0 %v642
  %868 = vmatpush1.bf16.msra.mxu0 %v641
  %869 = vmatprep.mubr.bf16.mxu0 %v44
  %870 = vmatmul.mubr.bf16.gmra.mrb[0].mxu0 %v43
  %v871 = vpop.f32.mrb[0].mxu0
  %v872 = vadd.f32 %v180, %v871
  %v873 = vpop.f32.mrb[0].mxu0
  %v874 = vadd.f32 %v184, %v873
  %v875 = vpop.f32.mrb[0].mxu0
  %v876 = vpop.f32.mrb[0].mxu0
  %877 = vdwg.mxu0
  %878 = vmatprep.subr.bf16.mxu0 %v646
  %879 = vmatpush1.bf16.msra.mxu0 %v645
  %880 = vmatprep.subr.bf16.mxu0 %v650
  %881 = vmatpush1.bf16.msra.mxu0 %v649
  %882 = vmatprep.subr.bf16.mxu0 %v654
  %883 = vmatpush1.bf16.msra.mxu0 %v653
  %884 = vmatprep.subr.bf16.mxu0 %v658
  %885 = vmatpush1.bf16.msra.mxu0 %v657
  %886 = vmatprep.subr.bf16.mxu0 %v662
  %887 = vmatpush1.bf16.msra.mxu0 %v661
  %888 = vmatprep.subr.bf16.mxu0 %v666
  %889 = vmatpush1.bf16.msra.mxu0 %v665
  %890 = vmatprep.subr.bf16.mxu0 %v670
  %891 = vmatpush1.bf16.msra.mxu0 %v669
  %892 = vmatprep.subr.bf16.mxu0 %v674
  %893 = vmatpush1.bf16.msra.mxu0 %v673
  %894 = vmatprep.subr.bf16.mxu0 %v678
  %895 = vmatpush1.bf16.msra.mxu0 %v677
  %896 = vmatprep.subr.bf16.mxu0 %v682
  %897 = vmatpush1.bf16.msra.mxu0 %v681
  %898 = vmatprep.subr.bf16.mxu0 %v686
  %899 = vmatpush1.bf16.msra.mxu0 %v685
  %900 = vmatprep.subr.bf16.mxu0 %v690
  %901 = vmatpush1.bf16.msra.mxu0 %v689
  %902 = vmatprep.subr.bf16.mxu0 %v694
  %903 = vmatpush1.bf16.msra.mxu0 %v693
  %904 = vmatprep.subr.bf16.mxu0 %v698
  %905 = vmatpush1.bf16.msra.mxu0 %v697
  %906 = vmatprep.subr.bf16.mxu0 %v702
  %907 = vmatpush1.bf16.msra.mxu0 %v701
  %908 = vmatprep.subr.bf16.mxu0 %v706
  %909 = vmatpush1.bf16.msra.mxu0 %v705
  %910 = vmatprep.mubr.bf16.mxu0 %v46
  %911 = vmatmul.mubr.bf16.gmra.mrb[0].mxu0 %v45
  %v912 = vpop.f32.mrb[0].mxu0
  %v913 = vadd.f32 %v872, %v912
  %v914 = vpop.f32.mrb[0].mxu0
  %v915 = vadd.f32 %v874, %v914
  %v916 = vpop.f32.mrb[0].mxu0
  %v917 = vpop.f32.mrb[0].mxu0
  %918 = vdwg.mxu0
  %919 = vmatprep.subr.bf16.mxu0 %v584
  %920 = vmatpush1.bf16.msra.mxu0 %v583
  %921 = vmatprep.subr.bf16.mxu0 %v588
  %922 = vmatpush1.bf16.msra.mxu0 %v587
  %923 = vmatprep.subr.bf16.mxu0 %v592
  %924 = vmatpush1.bf16.msra.mxu0 %v591
  %925 = vmatprep.subr.bf16.mxu0 %v596
  %926 = vmatpush1.bf16.msra.mxu0 %v595
  %927 = vmatprep.subr.bf16.mxu0 %v600
  %928 = vmatpush1.bf16.msra.mxu0 %v599
  %929 = vmatprep.subr.bf16.mxu0 %v604
  %930 = vmatpush1.bf16.msra.mxu0 %v603
  %931 = vmatprep.subr.bf16.mxu0 %v608
  %932 = vmatpush1.bf16.msra.mxu0 %v607
  %933 = vmatprep.subr.bf16.mxu0 %v612
  %934 = vmatpush1.bf16.msra.mxu0 %v611
  %935 = vmatprep.subr.bf16.mxu0 %v616
  %936 = vmatpush1.bf16.msra.mxu0 %v615
  %937 = vmatprep.subr.bf16.mxu0 %v620
  %938 = vmatpush1.bf16.msra.mxu0 %v619
  %939 = vmatprep.subr.bf16.mxu0 %v624
  %940 = vmatpush1.bf16.msra.mxu0 %v623
  %941 = vmatprep.subr.bf16.mxu0 %v628
  %942 = vmatpush1.bf16.msra.mxu0 %v627
  %943 = vmatprep.subr.bf16.mxu0 %v632
  %944 = vmatpush1.bf16.msra.mxu0 %v631
  %945 = vmatprep.subr.bf16.mxu0 %v636
  %946 = vmatpush1.bf16.msra.mxu0 %v635
  %947 = vmatprep.subr.bf16.mxu0 %v640
  %948 = vmatpush1.bf16.msra.mxu0 %v639
  %949 = vmatprep.subr.bf16.mxu0 %v644
  %950 = vmatpush1.bf16.msra.mxu0 %v643
  %951 = vmatprep.mubr.bf16.mxu0 %v44
  %952 = vmatmul.mubr.bf16.gmra.mrb[0].mxu0 %v43
  %v953 = vpop.f32.mrb[0].mxu0
  %v954 = vadd.f32 %v188, %v953
  %v955 = vpop.f32.mrb[0].mxu0
  %v956 = vadd.f32 %v192, %v955
  %v957 = vpop.f32.mrb[0].mxu0
  %v958 = vpop.f32.mrb[0].mxu0
  %959 = vdwg.mxu0
  %960 = vmatprep.subr.bf16.mxu0 %v648
  %961 = vmatpush1.bf16.msra.mxu0 %v647
  %962 = vmatprep.subr.bf16.mxu0 %v652
  %963 = vmatpush1.bf16.msra.mxu0 %v651
  %964 = vmatprep.subr.bf16.mxu0 %v656
  %965 = vmatpush1.bf16.msra.mxu0 %v655
  %966 = vmatprep.subr.bf16.mxu0 %v660
  %967 = vmatpush1.bf16.msra.mxu0 %v659
  %968 = vmatprep.subr.bf16.mxu0 %v664
  %969 = vmatpush1.bf16.msra.mxu0 %v663
  %970 = vmatprep.subr.bf16.mxu0 %v668
  %971 = vmatpush1.bf16.msra.mxu0 %v667
  %972 = vmatprep.subr.bf16.mxu0 %v672
  %973 = vmatpush1.bf16.msra.mxu0 %v671
  %974 = vmatprep.subr.bf16.mxu0 %v676
  %975 = vmatpush1.bf16.msra.mxu0 %v675
  %976 = vmatprep.subr.bf16.mxu0 %v680
  %977 = vmatpush1.bf16.msra.mxu0 %v679
  %978 = vmatprep.subr.bf16.mxu0 %v684
  %979 = vmatpush1.bf16.msra.mxu0 %v683
  %980 = vmatprep.subr.bf16.mxu0 %v688
  %981 = vmatpush1.bf16.msra.mxu0 %v687
  %982 = vmatprep.subr.bf16.mxu0 %v692
  %983 = vmatpush1.bf16.msra.mxu0 %v691
  %984 = vmatprep.subr.bf16.mxu0 %v696
  %985 = vmatpush1.bf16.msra.mxu0 %v695
  %986 = vmatprep.subr.bf16.mxu0 %v700
  %987 = vmatpush1.bf16.msra.mxu0 %v699
  %988 = vmatprep.subr.bf16.mxu0 %v704
  %989 = vmatpush1.bf16.msra.mxu0 %v703
  %990 = vmatprep.subr.bf16.mxu0 %v708
  %991 = vmatpush1.bf16.msra.mxu0 %v707
  %992 = vmatprep.mubr.bf16.mxu0 %v46
  %993 = vmatmul.mubr.bf16.gmra.mrb[0].mxu0 %v45
  %v994 = vpop.f32.mrb[0].mxu0
  %v995 = vadd.f32 %v954, %v994
  %v996 = vpop.f32.mrb[0].mxu0
  %v997 = vadd.f32 %v956, %v996
  %v998 = vpop.f32.mrb[0].mxu0
  %v999 = vpop.f32.mrb[0].mxu0
  %1000 = vdwg.mxu0
  %v1001 = vmax.f32 %v913, 0.0
  %v1002 = vmax.f32 %v915, 0.0
  %v1003 = vmax.f32 %v995, 0.0
  %v1004 = vmax.f32 %v997, 0.0
  %v1005 = vpack.c.bf16 %v1001, %v1001
  %v1006 = vpack.c.bf16 %v1002, %v1002
  %v1007 = vpack.c.bf16 %v1003, %v1003
  %v1008 = vpack.c.bf16 %v1004, %v1004
  %v1009 = vld [vmem:[%s3] sm:$0xff]
  %v1010 = vld [vmem:[%s3 + $0x8] sm:$0xff]
  %v1011 = vld [vmem:[%s3 + $0x10] sm:$0xff]
  %v1012 = vld [vmem:[%s3 + $0x18] sm:$0xff]
  %v1013 = vld [vmem:[%s3 + $0x20] sm:$0xff]
  %v1014 = vld [vmem:[%s3 + $0x28] sm:$0xff]
  %v1015 = vld [vmem:[%s3 + $0x30] sm:$0xff]
  %v1016 = vld [vmem:[%s3 + $0x38] sm:$0xff]
  %v1017 = vld [vmem:[%s3 + $0x40] sm:$0xff]
  %v1018 = vld [vmem:[%s3 + $0x48] sm:$0xff]
  %v1019 = vld [vmem:[%s3 + $0x50] sm:$0xff]
  %v1020 = vld [vmem:[%s3 + $0x58] sm:$0xff]
  %v1021 = vld [vmem:[%s3 + $0x60] sm:$0xff]
  %v1022 = vld [vmem:[%s3 + $0x68] sm:$0xff]
  %v1023 = vld [vmem:[%s3 + $0x70] sm:$0xff]
  %v1024 = vld [vmem:[%s3 + $0x78] sm:$0xff]
  %v1025 = vld [vmem:[%s3 + $0x80] sm:$0xff]
  %v1026 = vld [vmem:[%s3 + $0x88] sm:$0xff]
  %v1027 = vld [vmem:[%s3 + $0x90] sm:$0xff]
  %v1028 = vld [vmem:[%s3 + $0x98] sm:$0xff]
  %v1029 = vld [vmem:[%s3 + $0xa0] sm:$0xff]
  %v1030 = vld [vmem:[%s3 + $0xa8] sm:$0xff]
  %v1031 = vld [vmem:[%s3 + $0xb0] sm:$0xff]
  %v1032 = vld [vmem:[%s3 + $0xb8] sm:$0xff]
  %v1033 = vld [vmem:[%s3 + $0xc0] sm:$0xff]
  %v1034 = vld [vmem:[%s3 + $0xc8] sm:$0xff]
  %v1035 = vld [vmem:[%s3 + $0xd0] sm:$0xff]
  %v1036 = vld [vmem:[%s3 + $0xd8] sm:$0xff]
  %v1037 = vld [vmem:[%s3 + $0xe0] sm:$0xff]
  %v1038 = vld [vmem:[%s3 + $0xe8] sm:$0xff]
  %v1039 = vld [vmem:[%s3 + $0xf0] sm:$0xff]
  %v1040 = vld [vmem:[%s3 + $0xf8] sm:$0xff]
  %v1041 = vld [vmem:[%s3 + $0x100] sm:$0xff]
  %v1042 = vld [vmem:[%s3 + $0x108] sm:$0xff]
  %v1043 = vld [vmem:[%s3 + $0x110] sm:$0xff]
  %v1044 = vld [vmem:[%s3 + $0x118] sm:$0xff]
  %v1045 = vld [vmem:[%s3 + $0x120] sm:$0xff]
  %v1046 = vld [vmem:[%s3 + $0x128] sm:$0xff]
  %v1047 = vld [vmem:[%s3 + $0x130] sm:$0xff]
  %v1048 = vld [vmem:[%s3 + $0x138] sm:$0xff]
  %v1049 = vld [vmem:[%s3 + $0x140] sm:$0xff]
  %v1050 = vld [vmem:[%s3 + $0x148] sm:$0xff]
  %v1051 = vld [vmem:[%s3 + $0x150] sm:$0xff]
  %v1052 = vld [vmem:[%s3 + $0x158] sm:$0xff]
  %v1053 = vld [vmem:[%s3 + $0x160] sm:$0xff]
  %v1054 = vld [vmem:[%s3 + $0x168] sm:$0xff]
  %v1055 = vld [vmem:[%s3 + $0x170] sm:$0xff]
  %v1056 = vld [vmem:[%s3 + $0x178] sm:$0xff]
  %v1057 = vld [vmem:[%s3 + $0x180] sm:$0xff]
  %v1058 = vld [vmem:[%s3 + $0x188] sm:$0xff]
  %v1059 = vld [vmem:[%s3 + $0x190] sm:$0xff]
  %v1060 = vld [vmem:[%s3 + $0x198] sm:$0xff]
  %v1061 = vld [vmem:[%s3 + $0x1a0] sm:$0xff]
  %v1062 = vld [vmem:[%s3 + $0x1a8] sm:$0xff]
  %v1063 = vld [vmem:[%s3 + $0x1b0] sm:$0xff]
  %v1064 = vld [vmem:[%s3 + $0x1b8] sm:$0xff]
  %v1065 = vld [vmem:[%s3 + $0x1c0] sm:$0xff]
  %v1066 = vld [vmem:[%s3 + $0x1c8] sm:$0xff]
  %v1067 = vld [vmem:[%s3 + $0x1d0] sm:$0xff]
  %v1068 = vld [vmem:[%s3 + $0x1d8] sm:$0xff]
  %v1069 = vld [vmem:[%s3 + $0x1e0] sm:$0xff]
  %v1070 = vld [vmem:[%s3 + $0x1e8] sm:$0xff]
  %v1071 = vld [vmem:[%s3 + $0x1f0] sm:$0xff]
  %v1072 = vld [vmem:[%s3 + $0x1f8] sm:$0xff]
  %v1073 = vld [vmem:[%s3 + $0x200] sm:$0xff]
  %v1074 = vld [vmem:[%s3 + $0x208] sm:$0xff]
  %v1075 = vld [vmem:[%s3 + $0x210] sm:$0xff]
  %v1076 = vld [vmem:[%s3 + $0x218] sm:$0xff]
  %v1077 = vld [vmem:[%s3 + $0x220] sm:$0xff]
  %v1078 = vld [vmem:[%s3 + $0x228] sm:$0xff]
  %v1079 = vld [vmem:[%s3 + $0x230] sm:$0xff]
  %v1080 = vld [vmem:[%s3 + $0x238] sm:$0xff]
  %v1081 = vld [vmem:[%s3 + $0x240] sm:$0xff]
  %v1082 = vld [vmem:[%s3 + $0x248] sm:$0xff]
  %v1083 = vld [vmem:[%s3 + $0x250] sm:$0xff]
  %v1084 = vld [vmem:[%s3 + $0x258] sm:$0xff]
  %v1085 = vld [vmem:[%s3 + $0x260] sm:$0xff]
  %v1086 = vld [vmem:[%s3 + $0x268] sm:$0xff]
  %v1087 = vld [vmem:[%s3 + $0x270] sm:$0xff]
  %v1088 = vld [vmem:[%s3 + $0x278] sm:$0xff]
  %v1089 = vld [vmem:[%s3 + $0x280] sm:$0xff]
  %v1090 = vld [vmem:[%s3 + $0x288] sm:$0xff]
  %v1091 = vld [vmem:[%s3 + $0x290] sm:$0xff]
  %v1092 = vld [vmem:[%s3 + $0x298] sm:$0xff]
  %v1093 = vld [vmem:[%s3 + $0x2a0] sm:$0xff]
  %v1094 = vld [vmem:[%s3 + $0x2a8] sm:$0xff]
  %v1095 = vld [vmem:[%s3 + $0x2b0] sm:$0xff]
  %v1096 = vld [vmem:[%s3 + $0x2b8] sm:$0xff]
  %v1097 = vld [vmem:[%s3 + $0x2c0] sm:$0xff]
  %v1098 = vld [vmem:[%s3 + $0x2c8] sm:$0xff]
  %v1099 = vld [vmem:[%s3 + $0x2d0] sm:$0xff]
  %v1100 = vld [vmem:[%s3 + $0x2d8] sm:$0xff]
  %v1101 = vld [vmem:[%s3 + $0x2e0] sm:$0xff]
  %v1102 = vld [vmem:[%s3 + $0x2e8] sm:$0xff]
  %v1103 = vld [vmem:[%s3 + $0x2f0] sm:$0xff]
  %v1104 = vld [vmem:[%s3 + $0x2f8] sm:$0xff]
  %v1105 = vld [vmem:[%s3 + $0x300] sm:$0xff]
  %v1106 = vld [vmem:[%s3 + $0x308] sm:$0xff]
  %v1107 = vld [vmem:[%s3 + $0x310] sm:$0xff]
  %v1108 = vld [vmem:[%s3 + $0x318] sm:$0xff]
  %v1109 = vld [vmem:[%s3 + $0x320] sm:$0xff]
  %v1110 = vld [vmem:[%s3 + $0x328] sm:$0xff]
  %v1111 = vld [vmem:[%s3 + $0x330] sm:$0xff]
  %v1112 = vld [vmem:[%s3 + $0x338] sm:$0xff]
  %v1113 = vld [vmem:[%s3 + $0x340] sm:$0xff]
  %v1114 = vld [vmem:[%s3 + $0x348] sm:$0xff]
  %v1115 = vld [vmem:[%s3 + $0x350] sm:$0xff]
  %v1116 = vld [vmem:[%s3 + $0x358] sm:$0xff]
  %v1117 = vld [vmem:[%s3 + $0x360] sm:$0xff]
  %v1118 = vld [vmem:[%s3 + $0x368] sm:$0xff]
  %v1119 = vld [vmem:[%s3 + $0x370] sm:$0xff]
  %v1120 = vld [vmem:[%s3 + $0x378] sm:$0xff]
  %v1121 = vld [vmem:[%s3 + $0x380] sm:$0xff]
  %v1122 = vld [vmem:[%s3 + $0x388] sm:$0xff]
  %v1123 = vld [vmem:[%s3 + $0x390] sm:$0xff]
  %v1124 = vld [vmem:[%s3 + $0x398] sm:$0xff]
  %v1125 = vld [vmem:[%s3 + $0x3a0] sm:$0xff]
  %v1126 = vld [vmem:[%s3 + $0x3a8] sm:$0xff]
  %v1127 = vld [vmem:[%s3 + $0x3b0] sm:$0xff]
  %v1128 = vld [vmem:[%s3 + $0x3b8] sm:$0xff]
  %v1129 = vld [vmem:[%s3 + $0x3c0] sm:$0xff]
  %v1130 = vld [vmem:[%s3 + $0x3c8] sm:$0xff]
  %v1131 = vld [vmem:[%s3 + $0x3d0] sm:$0xff]
  %v1132 = vld [vmem:[%s3 + $0x3d8] sm:$0xff]
  %v1133 = vld [vmem:[%s3 + $0x3e0] sm:$0xff]
  %v1134 = vld [vmem:[%s3 + $0x3e8] sm:$0xff]
  %v1135 = vld [vmem:[%s3 + $0x3f0] sm:$0xff]
  %v1136 = vld [vmem:[%s3 + $0x3f8] sm:$0xff]
  %v1265 = vunpack.c.l.b16 %v1009
  %v1266 = vunpack.c.h.b16 %v1009
  %v1267 = vunpack.c.l.b16 %v1010
  %v1268 = vunpack.c.h.b16 %v1010
  %v1269 = vunpack.c.l.b16 %v1011
  %v1270 = vunpack.c.h.b16 %v1011
  %v1271 = vunpack.c.l.b16 %v1012
  %v1272 = vunpack.c.h.b16 %v1012
  %v1273 = vunpack.c.l.b16 %v1013
  %v1274 = vunpack.c.h.b16 %v1013
  %v1275 = vunpack.c.l.b16 %v1014
  %v1276 = vunpack.c.h.b16 %v1014
  %v1277 = vunpack.c.l.b16 %v1015
  %v1278 = vunpack.c.h.b16 %v1015
  %v1279 = vunpack.c.l.b16 %v1016
  %v1280 = vunpack.c.h.b16 %v1016
  %v1281 = vunpack.c.l.b16 %v1017
  %v1282 = vunpack.c.h.b16 %v1017
  %v1283 = vunpack.c.l.b16 %v1018
  %v1284 = vunpack.c.h.b16 %v1018
  %v1285 = vunpack.c.l.b16 %v1019
  %v1286 = vunpack.c.h.b16 %v1019
  %v1287 = vunpack.c.l.b16 %v1020
  %v1288 = vunpack.c.h.b16 %v1020
  %v1289 = vunpack.c.l.b16 %v1021
  %v1290 = vunpack.c.h.b16 %v1021
  %v1291 = vunpack.c.l.b16 %v1022
  %v1292 = vunpack.c.h.b16 %v1022
  %v1293 = vunpack.c.l.b16 %v1023
  %v1294 = vunpack.c.h.b16 %v1023
  %v1295 = vunpack.c.l.b16 %v1024
  %v1296 = vunpack.c.h.b16 %v1024
  %v1297 = vunpack.c.l.b16 %v1025
  %v1298 = vunpack.c.h.b16 %v1025
  %v1299 = vunpack.c.l.b16 %v1026
  %v1300 = vunpack.c.h.b16 %v1026
  %v1301 = vunpack.c.l.b16 %v1027
  %v1302 = vunpack.c.h.b16 %v1027
  %v1303 = vunpack.c.l.b16 %v1028
  %v1304 = vunpack.c.h.b16 %v1028
  %v1305 = vunpack.c.l.b16 %v1029
  %v1306 = vunpack.c.h.b16 %v1029
  %v1307 = vunpack.c.l.b16 %v1030
  %v1308 = vunpack.c.h.b16 %v1030
  %v1309 = vunpack.c.l.b16 %v1031
  %v1310 = vunpack.c.h.b16 %v1031
  %v1311 = vunpack.c.l.b16 %v1032
  %v1312 = vunpack.c.h.b16 %v1032
  %v1313 = vunpack.c.l.b16 %v1033
  %v1314 = vunpack.c.h.b16 %v1033
  %v1315 = vunpack.c.l.b16 %v1034
  %v1316 = vunpack.c.h.b16 %v1034
  %v1317 = vunpack.c.l.b16 %v1035
  %v1318 = vunpack.c.h.b16 %v1035
  %v1319 = vunpack.c.l.b16 %v1036
  %v1320 = vunpack.c.h.b16 %v1036
  %v1321 = vunpack.c.l.b16 %v1037
  %v1322 = vunpack.c.h.b16 %v1037
  %v1323 = vunpack.c.l.b16 %v1038
  %v1324 = vunpack.c.h.b16 %v1038
  %v1325 = vunpack.c.l.b16 %v1039
  %v1326 = vunpack.c.h.b16 %v1039
  %v1327 = vunpack.c.l.b16 %v1040
  %v1328 = vunpack.c.h.b16 %v1040
  %v1329 = vunpack.c.l.b16 %v1041
  %v1330 = vunpack.c.h.b16 %v1041
  %v1331 = vunpack.c.l.b16 %v1042
  %v1332 = vunpack.c.h.b16 %v1042
  %v1333 = vunpack.c.l.b16 %v1043
  %v1334 = vunpack.c.h.b16 %v1043
  %v1335 = vunpack.c.l.b16 %v1044
  %v1336 = vunpack.c.h.b16 %v1044
  %v1337 = vunpack.c.l.b16 %v1045
  %v1338 = vunpack.c.h.b16 %v1045
  %v1339 = vunpack.c.l.b16 %v1046
  %v1340 = vunpack.c.h.b16 %v1046
  %v1341 = vunpack.c.l.b16 %v1047
  %v1342 = vunpack.c.h.b16 %v1047
  %v1343 = vunpack.c.l.b16 %v1048
  %v1344 = vunpack.c.h.b16 %v1048
  %v1345 = vunpack.c.l.b16 %v1049
  %v1346 = vunpack.c.h.b16 %v1049
  %v1347 = vunpack.c.l.b16 %v1050
  %v1348 = vunpack.c.h.b16 %v1050
  %v1349 = vunpack.c.l.b16 %v1051
  %v1350 = vunpack.c.h.b16 %v1051
  %v1351 = vunpack.c.l.b16 %v1052
  %v1352 = vunpack.c.h.b16 %v1052
  %v1353 = vunpack.c.l.b16 %v1053
  %v1354 = vunpack.c.h.b16 %v1053
  %v1355 = vunpack.c.l.b16 %v1054
  %v1356 = vunpack.c.h.b16 %v1054
  %v1357 = vunpack.c.l.b16 %v1055
  %v1358 = vunpack.c.h.b16 %v1055
  %v1359 = vunpack.c.l.b16 %v1056
  %v1360 = vunpack.c.h.b16 %v1056
  %v1361 = vunpack.c.l.b16 %v1057
  %v1362 = vunpack.c.h.b16 %v1057
  %v1363 = vunpack.c.l.b16 %v1058
  %v1364 = vunpack.c.h.b16 %v1058
  %v1365 = vunpack.c.l.b16 %v1059
  %v1366 = vunpack.c.h.b16 %v1059
  %v1367 = vunpack.c.l.b16 %v1060
  %v1368 = vunpack.c.h.b16 %v1060
  %v1369 = vunpack.c.l.b16 %v1061
  %v1370 = vunpack.c.h.b16 %v1061
  %v1371 = vunpack.c.l.b16 %v1062
  %v1372 = vunpack.c.h.b16 %v1062
  %v1373 = vunpack.c.l.b16 %v1063
  %v1374 = vunpack.c.h.b16 %v1063
  %v1375 = vunpack.c.l.b16 %v1064
  %v1376 = vunpack.c.h.b16 %v1064
  %v1377 = vunpack.c.l.b16 %v1065
  %v1378 = vunpack.c.h.b16 %v1065
  %v1379 = vunpack.c.l.b16 %v1066
  %v1380 = vunpack.c.h.b16 %v1066
  %v1381 = vunpack.c.l.b16 %v1067
  %v1382 = vunpack.c.h.b16 %v1067
  %v1383 = vunpack.c.l.b16 %v1068
  %v1384 = vunpack.c.h.b16 %v1068
  %v1385 = vunpack.c.l.b16 %v1069
  %v1386 = vunpack.c.h.b16 %v1069
  %v1387 = vunpack.c.l.b16 %v1070
  %v1388 = vunpack.c.h.b16 %v1070
  %v1389 = vunpack.c.l.b16 %v1071
  %v1390 = vunpack.c.h.b16 %v1071
  %v1391 = vunpack.c.l.b16 %v1072
  %v1392 = vunpack.c.h.b16 %v1072
  %v1393 = vunpack.c.l.b16 %v1073
  %v1394 = vunpack.c.h.b16 %v1073
  %v1395 = vunpack.c.l.b16 %v1074
  %v1396 = vunpack.c.h.b16 %v1074
  %v1397 = vunpack.c.l.b16 %v1075
  %v1398 = vunpack.c.h.b16 %v1075
  %v1399 = vunpack.c.l.b16 %v1076
  %v1400 = vunpack.c.h.b16 %v1076
  %v1401 = vunpack.c.l.b16 %v1077
  %v1402 = vunpack.c.h.b16 %v1077
  %v1403 = vunpack.c.l.b16 %v1078
  %v1404 = vunpack.c.h.b16 %v1078
  %v1405 = vunpack.c.l.b16 %v1079
  %v1406 = vunpack.c.h.b16 %v1079
  %v1407 = vunpack.c.l.b16 %v1080
  %v1408 = vunpack.c.h.b16 %v1080
  %v1409 = vunpack.c.l.b16 %v1081
  %v1410 = vunpack.c.h.b16 %v1081
  %v1411 = vunpack.c.l.b16 %v1082
  %v1412 = vunpack.c.h.b16 %v1082
  %v1413 = vunpack.c.l.b16 %v1083
  %v1414 = vunpack.c.h.b16 %v1083
  %v1415 = vunpack.c.l.b16 %v1084
  %v1416 = vunpack.c.h.b16 %v1084
  %v1417 = vunpack.c.l.b16 %v1085
  %v1418 = vunpack.c.h.b16 %v1085
  %v1419 = vunpack.c.l.b16 %v1086
  %v1420 = vunpack.c.h.b16 %v1086
  %v1421 = vunpack.c.l.b16 %v1087
  %v1422 = vunpack.c.h.b16 %v1087
  %v1423 = vunpack.c.l.b16 %v1088
  %v1424 = vunpack.c.h.b16 %v1088
  %v1425 = vunpack.c.l.b16 %v1089
  %v1426 = vunpack.c.h.b16 %v1089
  %v1427 = vunpack.c.l.b16 %v1090
  %v1428 = vunpack.c.h.b16 %v1090
  %v1429 = vunpack.c.l.b16 %v1091
  %v1430 = vunpack.c.h.b16 %v1091
  %v1431 = vunpack.c.l.b16 %v1092
  %v1432 = vunpack.c.h.b16 %v1092
  %v1433 = vunpack.c.l.b16 %v1093
  %v1434 = vunpack.c.h.b16 %v1093
  %v1435 = vunpack.c.l.b16 %v1094
  %v1436 = vunpack.c.h.b16 %v1094
  %v1437 = vunpack.c.l.b16 %v1095
  %v1438 = vunpack.c.h.b16 %v1095
  %v1439 = vunpack.c.l.b16 %v1096
  %v1440 = vunpack.c.h.b16 %v1096
  %v1441 = vunpack.c.l.b16 %v1097
  %v1442 = vunpack.c.h.b16 %v1097
  %v1443 = vunpack.c.l.b16 %v1098
  %v1444 = vunpack.c.h.b16 %v1098
  %v1445 = vunpack.c.l.b16 %v1099
  %v1446 = vunpack.c.h.b16 %v1099
  %v1447 = vunpack.c.l.b16 %v1100
  %v1448 = vunpack.c.h.b16 %v1100
  %v1449 = vunpack.c.l.b16 %v1101
  %v1450 = vunpack.c.h.b16 %v1101
  %v1451 = vunpack.c.l.b16 %v1102
  %v1452 = vunpack.c.h.b16 %v1102
  %v1453 = vunpack.c.l.b16 %v1103
  %v1454 = vunpack.c.h.b16 %v1103
  %v1455 = vunpack.c.l.b16 %v1104
  %v1456 = vunpack.c.h.b16 %v1104
  %v1457 = vunpack.c.l.b16 %v1105
  %v1458 = vunpack.c.h.b16 %v1105
  %v1459 = vunpack.c.l.b16 %v1106
  %v1460 = vunpack.c.h.b16 %v1106
  %v1461 = vunpack.c.l.b16 %v1107
  %v1462 = vunpack.c.h.b16 %v1107
  %v1463 = vunpack.c.l.b16 %v1108
  %v1464 = vunpack.c.h.b16 %v1108
  %v1465 = vunpack.c.l.b16 %v1109
  %v1466 = vunpack.c.h.b16 %v1109
  %v1467 = vunpack.c.l.b16 %v1110
  %v1468 = vunpack.c.h.b16 %v1110
  %v1469 = vunpack.c.l.b16 %v1111
  %v1470 = vunpack.c.h.b16 %v1111
  %v1471 = vunpack.c.l.b16 %v1112
  %v1472 = vunpack.c.h.b16 %v1112
  %v1473 = vunpack.c.l.b16 %v1113
  %v1474 = vunpack.c.h.b16 %v1113
  %v1475 = vunpack.c.l.b16 %v1114
  %v1476 = vunpack.c.h.b16 %v1114
  %v1477 = vunpack.c.l.b16 %v1115
  %v1478 = vunpack.c.h.b16 %v1115
  %v1479 = vunpack.c.l.b16 %v1116
  %v1480 = vunpack.c.h.b16 %v1116
  %v1481 = vunpack.c.l.b16 %v1117
  %v1482 = vunpack.c.h.b16 %v1117
  %v1483 = vunpack.c.l.b16 %v1118
  %v1484 = vunpack.c.h.b16 %v1118
  %v1485 = vunpack.c.l.b16 %v1119
  %v1486 = vunpack.c.h.b16 %v1119
  %v1487 = vunpack.c.l.b16 %v1120
  %v1488 = vunpack.c.h.b16 %v1120
  %v1489 = vunpack.c.l.b16 %v1121
  %v1490 = vunpack.c.h.b16 %v1121
  %v1491 = vunpack.c.l.b16 %v1122
  %v1492 = vunpack.c.h.b16 %v1122
  %v1493 = vunpack.c.l.b16 %v1123
  %v1494 = vunpack.c.h.b16 %v1123
  %v1495 = vunpack.c.l.b16 %v1124
  %v1496 = vunpack.c.h.b16 %v1124
  %v1497 = vunpack.c.l.b16 %v1125
  %v1498 = vunpack.c.h.b16 %v1125
  %v1499 = vunpack.c.l.b16 %v1126
  %v1500 = vunpack.c.h.b16 %v1126
  %v1501 = vunpack.c.l.b16 %v1127
  %v1502 = vunpack.c.h.b16 %v1127
  %v1503 = vunpack.c.l.b16 %v1128
  %v1504 = vunpack.c.h.b16 %v1128
  %v1505 = vunpack.c.l.b16 %v1129
  %v1506 = vunpack.c.h.b16 %v1129
  %v1507 = vunpack.c.l.b16 %v1130
  %v1508 = vunpack.c.h.b16 %v1130
  %v1509 = vunpack.c.l.b16 %v1131
  %v1510 = vunpack.c.h.b16 %v1131
  %v1511 = vunpack.c.l.b16 %v1132
  %v1512 = vunpack.c.h.b16 %v1132
  %v1513 = vunpack.c.l.b16 %v1133
  %v1514 = vunpack.c.h.b16 %v1133
  %v1515 = vunpack.c.l.b16 %v1134
  %v1516 = vunpack.c.h.b16 %v1134
  %v1517 = vunpack.c.l.b16 %v1135
  %v1518 = vunpack.c.h.b16 %v1135
  %v1519 = vunpack.c.l.b16 %v1136
  %v1520 = vunpack.c.h.b16 %v1136
  %v1521 = vpack.c.b16 %v1269, %v1265
  %v1522 = vpack.c.b16 %v1270, %v1266
  %v1523 = vpack.c.b16 %v1271, %v1267
  %v1524 = vpack.c.b16 %v1272, %v1268
  %v1525 = vpack.c.b16 %v1277, %v1273
  %v1526 = vpack.c.b16 %v1278, %v1274
  %v1527 = vpack.c.b16 %v1279, %v1275
  %v1528 = vpack.c.b16 %v1280, %v1276
  %v1529 = vpack.c.b16 %v1285, %v1281
  %v1530 = vpack.c.b16 %v1286, %v1282
  %v1531 = vpack.c.b16 %v1287, %v1283
  %v1532 = vpack.c.b16 %v1288, %v1284
  %v1533 = vpack.c.b16 %v1293, %v1289
  %v1534 = vpack.c.b16 %v1294, %v1290
  %v1535 = vpack.c.b16 %v1295, %v1291
  %v1536 = vpack.c.b16 %v1296, %v1292
  %v1537 = vpack.c.b16 %v1301, %v1297
  %v1538 = vpack.c.b16 %v1302, %v1298
  %v1539 = vpack.c.b16 %v1303, %v1299
  %v1540 = vpack.c.b16 %v1304, %v1300
  %v1541 = vpack.c.b16 %v1309, %v1305
  %v1542 = vpack.c.b16 %v1310, %v1306
  %v1543 = vpack.c.b16 %v1311, %v1307
  %v1544 = vpack.c.b16 %v1312, %v1308
  %v1545 = vpack.c.b16 %v1317, %v1313
  %v1546 = vpack.c.b16 %v1318, %v1314
  %v1547 = vpack.c.b16 %v1319, %v1315
  %v1548 = vpack.c.b16 %v1320, %v1316
  %v1549 = vpack.c.b16 %v1325, %v1321
  %v1550 = vpack.c.b16 %v1326, %v1322
  %v1551 = vpack.c.b16 %v1327, %v1323
  %v1552 = vpack.c.b16 %v1328, %v1324
  %v1553 = vpack.c.b16 %v1333, %v1329
  %v1554 = vpack.c.b16 %v1334, %v1330
  %v1555 = vpack.c.b16 %v1335, %v1331
  %v1556 = vpack.c.b16 %v1336, %v1332
  %v1557 = vpack.c.b16 %v1341, %v1337
  %v1558 = vpack.c.b16 %v1342, %v1338
  %v1559 = vpack.c.b16 %v1343, %v1339
  %v1560 = vpack.c.b16 %v1344, %v1340
  %v1561 = vpack.c.b16 %v1349, %v1345
  %v1562 = vpack.c.b16 %v1350, %v1346
  %v1563 = vpack.c.b16 %v1351, %v1347
  %v1564 = vpack.c.b16 %v1352, %v1348
  %v1565 = vpack.c.b16 %v1357, %v1353
  %v1566 = vpack.c.b16 %v1358, %v1354
  %v1567 = vpack.c.b16 %v1359, %v1355
  %v1568 = vpack.c.b16 %v1360, %v1356
  %v1569 = vpack.c.b16 %v1365, %v1361
  %v1570 = vpack.c.b16 %v1366, %v1362
  %v1571 = vpack.c.b16 %v1367, %v1363
  %v1572 = vpack.c.b16 %v1368, %v1364
  %v1573 = vpack.c.b16 %v1373, %v1369
  %v1574 = vpack.c.b16 %v1374, %v1370
  %v1575 = vpack.c.b16 %v1375, %v1371
  %v1576 = vpack.c.b16 %v1376, %v1372
  %v1577 = vpack.c.b16 %v1381, %v1377
  %v1578 = vpack.c.b16 %v1382, %v1378
  %v1579 = vpack.c.b16 %v1383, %v1379
  %v1580 = vpack.c.b16 %v1384, %v1380
  %v1581 = vpack.c.b16 %v1389, %v1385
  %v1582 = vpack.c.b16 %v1390, %v1386
  %v1583 = vpack.c.b16 %v1391, %v1387
  %v1584 = vpack.c.b16 %v1392, %v1388
  %v1585 = vpack.c.b16 %v1397, %v1393
  %v1586 = vpack.c.b16 %v1398, %v1394
  %v1587 = vpack.c.b16 %v1399, %v1395
  %v1588 = vpack.c.b16 %v1400, %v1396
  %v1589 = vpack.c.b16 %v1405, %v1401
  %v1590 = vpack.c.b16 %v1406, %v1402
  %v1591 = vpack.c.b16 %v1407, %v1403
  %v1592 = vpack.c.b16 %v1408, %v1404
  %v1593 = vpack.c.b16 %v1413, %v1409
  %v1594 = vpack.c.b16 %v1414, %v1410
  %v1595 = vpack.c.b16 %v1415, %v1411
  %v1596 = vpack.c.b16 %v1416, %v1412
  %v1597 = vpack.c.b16 %v1421, %v1417
  %v1598 = vpack.c.b16 %v1422, %v1418
  %v1599 = vpack.c.b16 %v1423, %v1419
  %v1600 = vpack.c.b16 %v1424, %v1420
  %v1601 = vpack.c.b16 %v1429, %v1425
  %v1602 = vpack.c.b16 %v1430, %v1426
  %v1603 = vpack.c.b16 %v1431, %v1427
  %v1604 = vpack.c.b16 %v1432, %v1428
  %v1605 = vpack.c.b16 %v1437, %v1433
  %v1606 = vpack.c.b16 %v1438, %v1434
  %v1607 = vpack.c.b16 %v1439, %v1435
  %v1608 = vpack.c.b16 %v1440, %v1436
  %v1609 = vpack.c.b16 %v1445, %v1441
  %v1610 = vpack.c.b16 %v1446, %v1442
  %v1611 = vpack.c.b16 %v1447, %v1443
  %v1612 = vpack.c.b16 %v1448, %v1444
  %v1613 = vpack.c.b16 %v1453, %v1449
  %v1614 = vpack.c.b16 %v1454, %v1450
  %v1615 = vpack.c.b16 %v1455, %v1451
  %v1616 = vpack.c.b16 %v1456, %v1452
  %v1617 = vpack.c.b16 %v1461, %v1457
  %v1618 = vpack.c.b16 %v1462, %v1458
  %v1619 = vpack.c.b16 %v1463, %v1459
  %v1620 = vpack.c.b16 %v1464, %v1460
  %v1621 = vpack.c.b16 %v1469, %v1465
  %v1622 = vpack.c.b16 %v1470, %v1466
  %v1623 = vpack.c.b16 %v1471, %v1467
  %v1624 = vpack.c.b16 %v1472, %v1468
  %v1625 = vpack.c.b16 %v1477, %v1473
  %v1626 = vpack.c.b16 %v1478, %v1474
  %v1627 = vpack.c.b16 %v1479, %v1475
  %v1628 = vpack.c.b16 %v1480, %v1476
  %v1629 = vpack.c.b16 %v1485, %v1481
  %v1630 = vpack.c.b16 %v1486, %v1482
  %v1631 = vpack.c.b16 %v1487, %v1483
  %v1632 = vpack.c.b16 %v1488, %v1484
  %v1633 = vpack.c.b16 %v1493, %v1489
  %v1634 = vpack.c.b16 %v1494, %v1490
  %v1635 = vpack.c.b16 %v1495, %v1491
  %v1636 = vpack.c.b16 %v1496, %v1492
  %v1637 = vpack.c.b16 %v1501, %v1497
  %v1638 = vpack.c.b16 %v1502, %v1498
  %v1639 = vpack.c.b16 %v1503, %v1499
  %v1640 = vpack.c.b16 %v1504, %v1500
  %v1641 = vpack.c.b16 %v1509, %v1505
  %v1642 = vpack.c.b16 %v1510, %v1506
  %v1643 = vpack.c.b16 %v1511, %v1507
  %v1644 = vpack.c.b16 %v1512, %v1508
  %v1645 = vpack.c.b16 %v1517, %v1513
  %v1646 = vpack.c.b16 %v1518, %v1514
  %v1647 = vpack.c.b16 %v1519, %v1515
  %v1648 = vpack.c.b16 %v1520, %v1516
  %1777 = vmatprep.subr.bf16.mxu0 %v1522
  %1778 = vmatpush1.bf16.msra.mxu0 %v1521
  %1779 = vmatprep.subr.bf16.mxu0 %v1526
  %1780 = vmatpush1.bf16.msra.mxu0 %v1525
  %1781 = vmatprep.subr.bf16.mxu0 %v1530
  %1782 = vmatpush1.bf16.msra.mxu0 %v1529
  %1783 = vmatprep.subr.bf16.mxu0 %v1534
  %1784 = vmatpush1.bf16.msra.mxu0 %v1533
  %1785 = vmatprep.subr.bf16.mxu0 %v1538
  %1786 = vmatpush1.bf16.msra.mxu0 %v1537
  %1787 = vmatprep.subr.bf16.mxu0 %v1542
  %1788 = vmatpush1.bf16.msra.mxu0 %v1541
  %1789 = vmatprep.subr.bf16.mxu0 %v1546
  %1790 = vmatpush1.bf16.msra.mxu0 %v1545
  %1791 = vmatprep.subr.bf16.mxu0 %v1550
  %1792 = vmatpush1.bf16.msra.mxu0 %v1549
  %1793 = vmatprep.subr.bf16.mxu0 %v1554
  %1794 = vmatpush1.bf16.msra.mxu0 %v1553
  %1795 = vmatprep.subr.bf16.mxu0 %v1558
  %1796 = vmatpush1.bf16.msra.mxu0 %v1557
  %1797 = vmatprep.subr.bf16.mxu0 %v1562
  %1798 = vmatpush1.bf16.msra.mxu0 %v1561
  %1799 = vmatprep.subr.bf16.mxu0 %v1566
  %1800 = vmatpush1.bf16.msra.mxu0 %v1565
  %1801 = vmatprep.subr.bf16.mxu0 %v1570
  %1802 = vmatpush1.bf16.msra.mxu0 %v1569
  %1803 = vmatprep.subr.bf16.mxu0 %v1574
  %1804 = vmatpush1.bf16.msra.mxu0 %v1573
  %1805 = vmatprep.subr.bf16.mxu0 %v1578
  %1806 = vmatpush1.bf16.msra.mxu0 %v1577
  %1807 = vmatprep.subr.bf16.mxu0 %v1582
  %1808 = vmatpush1.bf16.msra.mxu0 %v1581
  %1809 = vmatprep.mubr.bf16.mxu0 %v1006
  %1810 = vmatmul.mubr.bf16.gmra.mrb[0].mxu0 %v1005
  %v1811 = vpop.f32.mrb[0].mxu0
  %v1812 = vadd.f32 0.0, %v1811
  %v1813 = vpop.f32.mrb[0].mxu0
  %v1814 = vadd.f32 0.0, %v1813
  %v1815 = vpop.f32.mrb[0].mxu0
  %v1816 = vpop.f32.mrb[0].mxu0
  %1817 = vdwg.mxu0
  %1818 = vmatprep.subr.bf16.mxu0 %v1586
  %1819 = vmatpush1.bf16.msra.mxu0 %v1585
  %1820 = vmatprep.subr.bf16.mxu0 %v1590
  %1821 = vmatpush1.bf16.msra.mxu0 %v1589
  %1822 = vmatprep.subr.bf16.mxu0 %v1594
  %1823 = vmatpush1.bf16.msra.mxu0 %v1593
  %1824 = vmatprep.subr.bf16.mxu0 %v1598
  %1825 = vmatpush1.bf16.msra.mxu0 %v1597
  %1826 = vmatprep.subr.bf16.mxu0 %v1602
  %1827 = vmatpush1.bf16.msra.mxu0 %v1601
  %1828 = vmatprep.subr.bf16.mxu0 %v1606
  %1829 = vmatpush1.bf16.msra.mxu0 %v1605
  %1830 = vmatprep.subr.bf16.mxu0 %v1610
  %1831 = vmatpush1.bf16.msra.mxu0 %v1609
  %1832 = vmatprep.subr.bf16.mxu0 %v1614
  %1833 = vmatpush1.bf16.msra.mxu0 %v1613
  %1834 = vmatprep.subr.bf16.mxu0 %v1618
  %1835 = vmatpush1.bf16.msra.mxu0 %v1617
  %1836 = vmatprep.subr.bf16.mxu0 %v1622
  %1837 = vmatpush1.bf16.msra.mxu0 %v1621
  %1838 = vmatprep.subr.bf16.mxu0 %v1626
  %1839 = vmatpush1.bf16.msra.mxu0 %v1625
  %1840 = vmatprep.subr.bf16.mxu0 %v1630
  %1841 = vmatpush1.bf16.msra.mxu0 %v1629
  %1842 = vmatprep.subr.bf16.mxu0 %v1634
  %1843 = vmatpush1.bf16.msra.mxu0 %v1633
  %1844 = vmatprep.subr.bf16.mxu0 %v1638
  %1845 = vmatpush1.bf16.msra.mxu0 %v1637
  %1846 = vmatprep.subr.bf16.mxu0 %v1642
  %1847 = vmatpush1.bf16.msra.mxu0 %v1641
  %1848 = vmatprep.subr.bf16.mxu0 %v1646
  %1849 = vmatpush1.bf16.msra.mxu0 %v1645
  %1850 = vmatprep.mubr.bf16.mxu0 %v1008
  %1851 = vmatmul.mubr.bf16.gmra.mrb[0].mxu0 %v1007
  %v1852 = vpop.f32.mrb[0].mxu0
  %v1853 = vadd.f32 %v1812, %v1852
  %v1854 = vpop.f32.mrb[0].mxu0
  %v1855 = vadd.f32 %v1814, %v1854
  %v1856 = vpop.f32.mrb[0].mxu0
  %v1857 = vpop.f32.mrb[0].mxu0
  %1858 = vdwg.mxu0
  %1859 = vmatprep.subr.bf16.mxu0 %v1524
  %1860 = vmatpush1.bf16.msra.mxu0 %v1523
  %1861 = vmatprep.subr.bf16.mxu0 %v1528
  %1862 = vmatpush1.bf16.msra.mxu0 %v1527
  %1863 = vmatprep.subr.bf16.mxu0 %v1532
  %1864 = vmatpush1.bf16.msra.mxu0 %v1531
  %1865 = vmatprep.subr.bf16.mxu0 %v1536
  %1866 = vmatpush1.bf16.msra.mxu0 %v1535
  %1867 = vmatprep.subr.bf16.mxu0 %v1540
  %1868 = vmatpush1.bf16.msra.mxu0 %v1539
  %1869 = vmatprep.subr.bf16.mxu0 %v1544
  %1870 = vmatpush1.bf16.msra.mxu0 %v1543
  %1871 = vmatprep.subr.bf16.mxu0 %v1548
  %1872 = vmatpush1.bf16.msra.mxu0 %v1547
  %1873 = vmatprep.subr.bf16.mxu0 %v1552
  %1874 = vmatpush1.bf16.msra.mxu0 %v1551
  %1875 = vmatprep.subr.bf16.mxu0 %v1556
  %1876 = vmatpush1.bf16.msra.mxu0 %v1555
  %1877 = vmatprep.subr.bf16.mxu0 %v1560
  %1878 = vmatpush1.bf16.msra.mxu0 %v1559
  %1879 = vmatprep.subr.bf16.mxu0 %v1564
  %1880 = vmatpush1.bf16.msra.mxu0 %v1563
  %1881 = vmatprep.subr.bf16.mxu0 %v1568
  %1882 = vmatpush1.bf16.msra.mxu0 %v1567
  %1883 = vmatprep.subr.bf16.mxu0 %v1572
  %1884 = vmatpush1.bf16.msra.mxu0 %v1571
  %1885 = vmatprep.subr.bf16.mxu0 %v1576
  %1886 = vmatpush1.bf16.msra.mxu0 %v1575
  %1887 = vmatprep.subr.bf16.mxu0 %v1580
  %1888 = vmatpush1.bf16.msra.mxu0 %v1579
  %1889 = vmatprep.subr.bf16.mxu0 %v1584
  %1890 = vmatpush1.bf16.msra.mxu0 %v1583
  %1891 = vmatprep.mubr.bf16.mxu0 %v1006
  %1892 = vmatmul.mubr.bf16.gmra.mrb[0].mxu0 %v1005
  %v1893 = vpop.f32.mrb[0].mxu0
  %v1894 = vadd.f32 0.0, %v1893
  %v1895 = vpop.f32.mrb[0].mxu0
  %v1896 = vadd.f32 0.0, %v1895
  %v1897 = vpop.f32.mrb[0].mxu0
  %v1898 = vpop.f32.mrb[0].mxu0
  %1899 = vdwg.mxu0
  %1900 = vmatprep.subr.bf16.mxu0 %v1588
  %1901 = vmatpush1.bf16.msra.mxu0 %v1587
  %1902 = vmatprep.subr.bf16.mxu0 %v1592
  %1903 = vmatpush1.bf16.msra.mxu0 %v1591
  %1904 = vmatprep.subr.bf16.mxu0 %v1596
  %1905 = vmatpush1.bf16.msra.mxu0 %v1595
  %1906 = vmatprep.subr.bf16.mxu0 %v1600
  %1907 = vmatpush1.bf16.msra.mxu0 %v1599
  %1908 = vmatprep.subr.bf16.mxu0 %v1604
  %1909 = vmatpush1.bf16.msra.mxu0 %v1603
  %1910 = vmatprep.subr.bf16.mxu0 %v1608
  %1911 = vmatpush1.bf16.msra.mxu0 %v1607
  %1912 = vmatprep.subr.bf16.mxu0 %v1612
  %1913 = vmatpush1.bf16.msra.mxu0 %v1611
  %1914 = vmatprep.subr.bf16.mxu0 %v1616
  %1915 = vmatpush1.bf16.msra.mxu0 %v1615
  %1916 = vmatprep.subr.bf16.mxu0 %v1620
  %1917 = vmatpush1.bf16.msra.mxu0 %v1619
  %1918 = vmatprep.subr.bf16.mxu0 %v1624
  %1919 = vmatpush1.bf16.msra.mxu0 %v1623
  %1920 = vmatprep.subr.bf16.mxu0 %v1628
  %1921 = vmatpush1.bf16.msra.mxu0 %v1627
  %1922 = vmatprep.subr.bf16.mxu0 %v1632
  %1923 = vmatpush1.bf16.msra.mxu0 %v1631
  %1924 = vmatprep.subr.bf16.mxu0 %v1636
  %1925 = vmatpush1.bf16.msra.mxu0 %v1635
  %1926 = vmatprep.subr.bf16.mxu0 %v1640
  %1927 = vmatpush1.bf16.msra.mxu0 %v1639
  %1928 = vmatprep.subr.bf16.mxu0 %v1644
  %1929 = vmatpush1.bf16.msra.mxu0 %v1643
  %1930 = vmatprep.subr.bf16.mxu0 %v1648
  %1931 = vmatpush1.bf16.msra.mxu0 %v1647
  %1932 = vmatprep.mubr.bf16.mxu0 %v1008
  %1933 = vmatmul.mubr.bf16.gmra.mrb[0].mxu0 %v1007
  %v1934 = vpop.f32.mrb[0].mxu0
  %v1935 = vadd.f32 %v1894, %v1934
  %v1936 = vpop.f32.mrb[0].mxu0
  %v1937 = vadd.f32 %v1896, %v1936
  %v1938 = vpop.f32.mrb[0].mxu0
  %v1939 = vpop.f32.mrb[0].mxu0
  %1940 = vdwg.mxu0
  %v1945 = vcombine.low %v1853, %v1855
  %v1946 = vcombine.low %v1935, %v1937
  %v1948 = vunpack.c.l.s4 1983009808
  %v1949 = vunpack.c.0.s8 %v1948
  %v1950 = vlaneseq
  %v1951 = vshrl.u32 %v1950, 7
  %v1952 = vsub.s32 %v1949, %v1951
  %v1953 = vrot.slane %v1945, %v1952
  %v1955 = vunpack.c.l.s4 1983009808
  %v1956 = vunpack.c.0.s8 %v1955
  %v1957 = vlaneseq
  %v1958 = vshrl.u32 %v1957, 7
  %v1959 = vsub.s32 %v1956, %v1958
  %v1960 = vrot.slane %v1946, %v1959
  %v1961 = vcombine.low %v1953, %v1960
  %v1963 = vadd.f32 %v20, %v1961
  %v1964 = vld [vmem:[%s4] sm:$0xf]
  %v1966 = vlaneseq
  %v1967 = vshrl.u32 %v1966, 7
  %v1968 = vsub.s32 0, %v1967
  %v1969 = vrot.slane %v1964, %v1968
  %v1970 = vlaneseq
  %v1971 = vshrl.u32 %v1970, 7
  %v1972 = vsub.s32 1, %v1971
  %v1973 = vrot.slane %v1964, %v1972
  %v1974 = vlaneseq
  %v1975 = vshrl.u32 %v1974, 7
  %v1976 = vsub.s32 2, %v1975
  %v1977 = vrot.slane %v1964, %v1976
  %v1978 = vlaneseq
  %v1979 = vshrl.u32 %v1978, 7
  %v1980 = vsub.s32 3, %v1979
  %v1981 = vrot.slane %v1964, %v1980
  %v1982 = vcombine.low %v1969, %v1973
  %v1983 = vcombine.low %v1977, %v1981
  %v1985 = vunpack.c.l.s4 1983009808
  %v1986 = vunpack.c.0.s8 %v1985
  %v1987 = vlaneseq
  %v1988 = vshrl.u32 %v1987, 7
  %v1989 = vsub.s32 %v1986, %v1988
  %v1990 = vrot.slane %v1982, %v1989
  %v1992 = vunpack.c.l.s4 1983009808
  %v1993 = vunpack.c.0.s8 %v1992
  %v1994 = vlaneseq
  %v1995 = vshrl.u32 %v1994, 7
  %v1996 = vsub.s32 %v1993, %v1995
  %v1997 = vrot.slane %v1983, %v1996
  %v1998 = vcombine.low %v1990, %v1997
  %v2000 = vadd.f32 %v1963, %v1998
  %v2002 = vcombine.high %v2000, %v2000
  %v2004 = vunpack.c.l.s4 1983009808
  %v2005 = vunpack.c.0.s8 %v2004
  %v2006 = vlaneseq
  %v2007 = vshrl.u32 %v2006, 7
  %v2008 = vsub.s32 %v2005, %v2007
  %v2009 = vrot.slane %v2000, %v2008
  %v2011 = vunpack.c.l.s4 1983009808
  %v2012 = vunpack.c.0.s8 %v2011
  %v2013 = vlaneseq
  %v2014 = vshrl.u32 %v2013, 7
  %v2015 = vsub.s32 %v2012, %v2014
  %v2016 = vrot.slane %v2002, %v2015
  %v2017 = vcombine.high %v2009, %v2009
  %v2018 = vcombine.high %v2016, %v2016
  %v2023 = vpack.c.bf16 %v2009, %v2009
  %v2024 = vpack.c.bf16 %v2017, %v2017
  %v2025 = vpack.c.bf16 %v2016, %v2016
  %v2026 = vpack.c.bf16 %v2018, %v2018
  %s2027 = scalar_lea.vmem %s1, 1024
  %v2028 = vld [vmem:[%s2027] sm:$0xff]
  %v2029 = vld [vmem:[%s2027 + $0x8] sm:$0xff]
  %v2030 = vld [vmem:[%s2027 + $0x10] sm:$0xff]
  %v2031 = vld [vmem:[%s2027 + $0x18] sm:$0xff]
  %v2032 = vld [vmem:[%s2027 + $0x20] sm:$0xff]
  %v2033 = vld [vmem:[%s2027 + $0x28] sm:$0xff]
  %v2034 = vld [vmem:[%s2027 + $0x30] sm:$0xff]
  %v2035 = vld [vmem:[%s2027 + $0x38] sm:$0xff]
  %v2036 = vld [vmem:[%s2027 + $0x40] sm:$0xff]
  %v2037 = vld [vmem:[%s2027 + $0x48] sm:$0xff]
  %v2038 = vld [vmem:[%s2027 + $0x50] sm:$0xff]
  %v2039 = vld [vmem:[%s2027 + $0x58] sm:$0xff]
  %v2040 = vld [vmem:[%s2027 + $0x60] sm:$0xff]
  %v2041 = vld [vmem:[%s2027 + $0x68] sm:$0xff]
  %v2042 = vld [vmem:[%s2027 + $0x70] sm:$0xff]
  %v2043 = vld [vmem:[%s2027 + $0x78] sm:$0xff]
  %v2044 = vld [vmem:[%s2027 + $0x80] sm:$0xff]
  %v2045 = vld [vmem:[%s2027 + $0x88] sm:$0xff]
  %v2046 = vld [vmem:[%s2027 + $0x90] sm:$0xff]
  %v2047 = vld [vmem:[%s2027 + $0x98] sm:$0xff]
  %v2048 = vld [vmem:[%s2027 + $0xa0] sm:$0xff]
  %v2049 = vld [vmem:[%s2027 + $0xa8] sm:$0xff]
  %v2050 = vld [vmem:[%s2027 + $0xb0] sm:$0xff]
  %v2051 = vld [vmem:[%s2027 + $0xb8] sm:$0xff]
  %v2052 = vld [vmem:[%s2027 + $0xc0] sm:$0xff]
  %v2053 = vld [vmem:[%s2027 + $0xc8] sm:$0xff]
  %v2054 = vld [vmem:[%s2027 + $0xd0] sm:$0xff]
  %v2055 = vld [vmem:[%s2027 + $0xd8] sm:$0xff]
  %v2056 = vld [vmem:[%s2027 + $0xe0] sm:$0xff]
  %v2057 = vld [vmem:[%s2027 + $0xe8] sm:$0xff]
  %v2058 = vld [vmem:[%s2027 + $0xf0] sm:$0xff]
  %v2059 = vld [vmem:[%s2027 + $0xf8] sm:$0xff]
  %v2060 = vld [vmem:[%s2027 + $0x100] sm:$0xff]
  %v2061 = vld [vmem:[%s2027 + $0x108] sm:$0xff]
  %v2062 = vld [vmem:[%s2027 + $0x110] sm:$0xff]
  %v2063 = vld [vmem:[%s2027 + $0x118] sm:$0xff]
  %v2064 = vld [vmem:[%s2027 + $0x120] sm:$0xff]
  %v2065 = vld [vmem:[%s2027 + $0x128] sm:$0xff]
  %v2066 = vld [vmem:[%s2027 + $0x130] sm:$0xff]
  %v2067 = vld [vmem:[%s2027 + $0x138] sm:$0xff]
  %v2068 = vld [vmem:[%s2027 + $0x140] sm:$0xff]
  %v2069 = vld [vmem:[%s2027 + $0x148] sm:$0xff]
  %v2070 = vld [vmem:[%s2027 + $0x150] sm:$0xff]
  %v2071 = vld [vmem:[%s2027 + $0x158] sm:$0xff]
  %v2072 = vld [vmem:[%s2027 + $0x160] sm:$0xff]
  %v2073 = vld [vmem:[%s2027 + $0x168] sm:$0xff]
  %v2074 = vld [vmem:[%s2027 + $0x170] sm:$0xff]
  %v2075 = vld [vmem:[%s2027 + $0x178] sm:$0xff]
  %v2076 = vld [vmem:[%s2027 + $0x180] sm:$0xff]
  %v2077 = vld [vmem:[%s2027 + $0x188] sm:$0xff]
  %v2078 = vld [vmem:[%s2027 + $0x190] sm:$0xff]
  %v2079 = vld [vmem:[%s2027 + $0x198] sm:$0xff]
  %v2080 = vld [vmem:[%s2027 + $0x1a0] sm:$0xff]
  %v2081 = vld [vmem:[%s2027 + $0x1a8] sm:$0xff]
  %v2082 = vld [vmem:[%s2027 + $0x1b0] sm:$0xff]
  %v2083 = vld [vmem:[%s2027 + $0x1b8] sm:$0xff]
  %v2084 = vld [vmem:[%s2027 + $0x1c0] sm:$0xff]
  %v2085 = vld [vmem:[%s2027 + $0x1c8] sm:$0xff]
  %v2086 = vld [vmem:[%s2027 + $0x1d0] sm:$0xff]
  %v2087 = vld [vmem:[%s2027 + $0x1d8] sm:$0xff]
  %v2088 = vld [vmem:[%s2027 + $0x1e0] sm:$0xff]
  %v2089 = vld [vmem:[%s2027 + $0x1e8] sm:$0xff]
  %v2090 = vld [vmem:[%s2027 + $0x1f0] sm:$0xff]
  %v2091 = vld [vmem:[%s2027 + $0x1f8] sm:$0xff]
  %v2092 = vld [vmem:[%s2027 + $0x200] sm:$0xff]
  %v2093 = vld [vmem:[%s2027 + $0x208] sm:$0xff]
  %v2094 = vld [vmem:[%s2027 + $0x210] sm:$0xff]
  %v2095 = vld [vmem:[%s2027 + $0x218] sm:$0xff]
  %v2096 = vld [vmem:[%s2027 + $0x220] sm:$0xff]
  %v2097 = vld [vmem:[%s2027 + $0x228] sm:$0xff]
  %v2098 = vld [vmem:[%s2027 + $0x230] sm:$0xff]
  %v2099 = vld [vmem:[%s2027 + $0x238] sm:$0xff]
  %v2100 = vld [vmem:[%s2027 + $0x240] sm:$0xff]
  %v2101 = vld [vmem:[%s2027 + $0x248] sm:$0xff]
  %v2102 = vld [vmem:[%s2027 + $0x250] sm:$0xff]
  %v2103 = vld [vmem:[%s2027 + $0x258] sm:$0xff]
  %v2104 = vld [vmem:[%s2027 + $0x260] sm:$0xff]
  %v2105 = vld [vmem:[%s2027 + $0x268] sm:$0xff]
  %v2106 = vld [vmem:[%s2027 + $0x270] sm:$0xff]
  %v2107 = vld [vmem:[%s2027 + $0x278] sm:$0xff]
  %v2108 = vld [vmem:[%s2027 + $0x280] sm:$0xff]
  %v2109 = vld [vmem:[%s2027 + $0x288] sm:$0xff]
  %v2110 = vld [vmem:[%s2027 + $0x290] sm:$0xff]
  %v2111 = vld [vmem:[%s2027 + $0x298] sm:$0xff]
  %v2112 = vld [vmem:[%s2027 + $0x2a0] sm:$0xff]
  %v2113 = vld [vmem:[%s2027 + $0x2a8] sm:$0xff]
  %v2114 = vld [vmem:[%s2027 + $0x2b0] sm:$0xff]
  %v2115 = vld [vmem:[%s2027 + $0x2b8] sm:$0xff]
  %v2116 = vld [vmem:[%s2027 + $0x2c0] sm:$0xff]
  %v2117 = vld [vmem:[%s2027 + $0x2c8] sm:$0xff]
  %v2118 = vld [vmem:[%s2027 + $0x2d0] sm:$0xff]
  %v2119 = vld [vmem:[%s2027 + $0x2d8] sm:$0xff]
  %v2120 = vld [vmem:[%s2027 + $0x2e0] sm:$0xff]
  %v2121 = vld [vmem:[%s2027 + $0x2e8] sm:$0xff]
  %v2122 = vld [vmem:[%s2027 + $0x2f0] sm:$0xff]
  %v2123 = vld [vmem:[%s2027 + $0x2f8] sm:$0xff]
  %v2124 = vld [vmem:[%s2027 + $0x300] sm:$0xff]
  %v2125 = vld [vmem:[%s2027 + $0x308] sm:$0xff]
  %v2126 = vld [vmem:[%s2027 + $0x310] sm:$0xff]
  %v2127 = vld [vmem:[%s2027 + $0x318] sm:$0xff]
  %v2128 = vld [vmem:[%s2027 + $0x320] sm:$0xff]
  %v2129 = vld [vmem:[%s2027 + $0x328] sm:$0xff]
  %v2130 = vld [vmem:[%s2027 + $0x330] sm:$0xff]
  %v2131 = vld [vmem:[%s2027 + $0x338] sm:$0xff]
  %v2132 = vld [vmem:[%s2027 + $0x340] sm:$0xff]
  %v2133 = vld [vmem:[%s2027 + $0x348] sm:$0xff]
  %v2134 = vld [vmem:[%s2027 + $0x350] sm:$0xff]
  %v2135 = vld [vmem:[%s2027 + $0x358] sm:$0xff]
  %v2136 = vld [vmem:[%s2027 + $0x360] sm:$0xff]
  %v2137 = vld [vmem:[%s2027 + $0x368] sm:$0xff]
  %v2138 = vld [vmem:[%s2027 + $0x370] sm:$0xff]
  %v2139 = vld [vmem:[%s2027 + $0x378] sm:$0xff]
  %v2140 = vld [vmem:[%s2027 + $0x380] sm:$0xff]
  %v2141 = vld [vmem:[%s2027 + $0x388] sm:$0xff]
  %v2142 = vld [vmem:[%s2027 + $0x390] sm:$0xff]
  %v2143 = vld [vmem:[%s2027 + $0x398] sm:$0xff]
  %v2144 = vld [vmem:[%s2027 + $0x3a0] sm:$0xff]
  %v2145 = vld [vmem:[%s2027 + $0x3a8] sm:$0xff]
  %v2146 = vld [vmem:[%s2027 + $0x3b0] sm:$0xff]
  %v2147 = vld [vmem:[%s2027 + $0x3b8] sm:$0xff]
  %v2148 = vld [vmem:[%s2027 + $0x3c0] sm:$0xff]
  %v2149 = vld [vmem:[%s2027 + $0x3c8] sm:$0xff]
  %v2150 = vld [vmem:[%s2027 + $0x3d0] sm:$0xff]
  %v2151 = vld [vmem:[%s2027 + $0x3d8] sm:$0xff]
  %v2152 = vld [vmem:[%s2027 + $0x3e0] sm:$0xff]
  %v2153 = vld [vmem:[%s2027 + $0x3e8] sm:$0xff]
  %v2154 = vld [vmem:[%s2027 + $0x3f0] sm:$0xff]
  %v2155 = vld [vmem:[%s2027 + $0x3f8] sm:$0xff]
  %s2156 = scalar_lea.vmem %s2, 4
  %v2157 = vld [vmem:[%s2156] sm:$0xf]
  %v2159 = vlaneseq
  %v2160 = vshrl.u32 %v2159, 7
  %v2161 = vsub.s32 0, %v2160
  %v2162 = vrot.slane %v2157, %v2161
  %v2163 = vlaneseq
  %v2164 = vshrl.u32 %v2163, 7
  %v2165 = vsub.s32 1, %v2164
  %v2166 = vrot.slane %v2157, %v2165
  %v2167 = vlaneseq
  %v2168 = vshrl.u32 %v2167, 7
  %v2169 = vsub.s32 2, %v2168
  %v2170 = vrot.slane %v2157, %v2169
  %v2171 = vlaneseq
  %v2172 = vshrl.u32 %v2171, 7
  %v2173 = vsub.s32 3, %v2172
  %v2174 = vrot.slane %v2157, %v2173
  %v2307 = vunpack.c.l.b16 %v2028
  %v2308 = vunpack.c.h.b16 %v2028
  %v2309 = vunpack.c.l.b16 %v2029
  %v2310 = vunpack.c.h.b16 %v2029
  %v2311 = vunpack.c.l.b16 %v2030
  %v2312 = vunpack.c.h.b16 %v2030
  %v2313 = vunpack.c.l.b16 %v2031
  %v2314 = vunpack.c.h.b16 %v2031
  %v2315 = vunpack.c.l.b16 %v2032
  %v2316 = vunpack.c.h.b16 %v2032
  %v2317 = vunpack.c.l.b16 %v2033
  %v2318 = vunpack.c.h.b16 %v2033
  %v2319 = vunpack.c.l.b16 %v2034
  %v2320 = vunpack.c.h.b16 %v2034
  %v2321 = vunpack.c.l.b16 %v2035
  %v2322 = vunpack.c.h.b16 %v2035
  %v2323 = vunpack.c.l.b16 %v2036
  %v2324 = vunpack.c.h.b16 %v2036
  %v2325 = vunpack.c.l.b16 %v2037
  %v2326 = vunpack.c.h.b16 %v2037
  %v2327 = vunpack.c.l.b16 %v2038
  %v2328 = vunpack.c.h.b16 %v2038
  %v2329 = vunpack.c.l.b16 %v2039
  %v2330 = vunpack.c.h.b16 %v2039
  %v2331 = vunpack.c.l.b16 %v2040
  %v2332 = vunpack.c.h.b16 %v2040
  %v2333 = vunpack.c.l.b16 %v2041
  %v2334 = vunpack.c.h.b16 %v2041
  %v2335 = vunpack.c.l.b16 %v2042
  %v2336 = vunpack.c.h.b16 %v2042
  %v2337 = vunpack.c.l.b16 %v2043
  %v2338 = vunpack.c.h.b16 %v2043
  %v2339 = vunpack.c.l.b16 %v2044
  %v2340 = vunpack.c.h.b16 %v2044
  %v2341 = vunpack.c.l.b16 %v2045
  %v2342 = vunpack.c.h.b16 %v2045
  %v2343 = vunpack.c.l.b16 %v2046
  %v2344 = vunpack.c.h.b16 %v2046
  %v2345 = vunpack.c.l.b16 %v2047
  %v2346 = vunpack.c.h.b16 %v2047
  %v2347 = vunpack.c.l.b16 %v2048
  %v2348 = vunpack.c.h.b16 %v2048
  %v2349 = vunpack.c.l.b16 %v2049
  %v2350 = vunpack.c.h.b16 %v2049
  %v2351 = vunpack.c.l.b16 %v2050
  %v2352 = vunpack.c.h.b16 %v2050
  %v2353 = vunpack.c.l.b16 %v2051
  %v2354 = vunpack.c.h.b16 %v2051
  %v2355 = vunpack.c.l.b16 %v2052
  %v2356 = vunpack.c.h.b16 %v2052
  %v2357 = vunpack.c.l.b16 %v2053
  %v2358 = vunpack.c.h.b16 %v2053
  %v2359 = vunpack.c.l.b16 %v2054
  %v2360 = vunpack.c.h.b16 %v2054
  %v2361 = vunpack.c.l.b16 %v2055
  %v2362 = vunpack.c.h.b16 %v2055
  %v2363 = vunpack.c.l.b16 %v2056
  %v2364 = vunpack.c.h.b16 %v2056
  %v2365 = vunpack.c.l.b16 %v2057
  %v2366 = vunpack.c.h.b16 %v2057
  %v2367 = vunpack.c.l.b16 %v2058
  %v2368 = vunpack.c.h.b16 %v2058
  %v2369 = vunpack.c.l.b16 %v2059
  %v2370 = vunpack.c.h.b16 %v2059
  %v2371 = vunpack.c.l.b16 %v2060
  %v2372 = vunpack.c.h.b16 %v2060
  %v2373 = vunpack.c.l.b16 %v2061
  %v2374 = vunpack.c.h.b16 %v2061
  %v2375 = vunpack.c.l.b16 %v2062
  %v2376 = vunpack.c.h.b16 %v2062
  %v2377 = vunpack.c.l.b16 %v2063
  %v2378 = vunpack.c.h.b16 %v2063
  %v2379 = vunpack.c.l.b16 %v2064
  %v2380 = vunpack.c.h.b16 %v2064
  %v2381 = vunpack.c.l.b16 %v2065
  %v2382 = vunpack.c.h.b16 %v2065
  %v2383 = vunpack.c.l.b16 %v2066
  %v2384 = vunpack.c.h.b16 %v2066
  %v2385 = vunpack.c.l.b16 %v2067
  %v2386 = vunpack.c.h.b16 %v2067
  %v2387 = vunpack.c.l.b16 %v2068
  %v2388 = vunpack.c.h.b16 %v2068
  %v2389 = vunpack.c.l.b16 %v2069
  %v2390 = vunpack.c.h.b16 %v2069
  %v2391 = vunpack.c.l.b16 %v2070
  %v2392 = vunpack.c.h.b16 %v2070
  %v2393 = vunpack.c.l.b16 %v2071
  %v2394 = vunpack.c.h.b16 %v2071
  %v2395 = vunpack.c.l.b16 %v2072
  %v2396 = vunpack.c.h.b16 %v2072
  %v2397 = vunpack.c.l.b16 %v2073
  %v2398 = vunpack.c.h.b16 %v2073
  %v2399 = vunpack.c.l.b16 %v2074
  %v2400 = vunpack.c.h.b16 %v2074
  %v2401 = vunpack.c.l.b16 %v2075
  %v2402 = vunpack.c.h.b16 %v2075
  %v2403 = vunpack.c.l.b16 %v2076
  %v2404 = vunpack.c.h.b16 %v2076
  %v2405 = vunpack.c.l.b16 %v2077
  %v2406 = vunpack.c.h.b16 %v2077
  %v2407 = vunpack.c.l.b16 %v2078
  %v2408 = vunpack.c.h.b16 %v2078
  %v2409 = vunpack.c.l.b16 %v2079
  %v2410 = vunpack.c.h.b16 %v2079
  %v2411 = vunpack.c.l.b16 %v2080
  %v2412 = vunpack.c.h.b16 %v2080
  %v2413 = vunpack.c.l.b16 %v2081
  %v2414 = vunpack.c.h.b16 %v2081
  %v2415 = vunpack.c.l.b16 %v2082
  %v2416 = vunpack.c.h.b16 %v2082
  %v2417 = vunpack.c.l.b16 %v2083
  %v2418 = vunpack.c.h.b16 %v2083
  %v2419 = vunpack.c.l.b16 %v2084
  %v2420 = vunpack.c.h.b16 %v2084
  %v2421 = vunpack.c.l.b16 %v2085
  %v2422 = vunpack.c.h.b16 %v2085
  %v2423 = vunpack.c.l.b16 %v2086
  %v2424 = vunpack.c.h.b16 %v2086
  %v2425 = vunpack.c.l.b16 %v2087
  %v2426 = vunpack.c.h.b16 %v2087
  %v2427 = vunpack.c.l.b16 %v2088
  %v2428 = vunpack.c.h.b16 %v2088
  %v2429 = vunpack.c.l.b16 %v2089
  %v2430 = vunpack.c.h.b16 %v2089
  %v2431 = vunpack.c.l.b16 %v2090
  %v2432 = vunpack.c.h.b16 %v2090
  %v2433 = vunpack.c.l.b16 %v2091
  %v2434 = vunpack.c.h.b16 %v2091
  %v2435 = vunpack.c.l.b16 %v2092
  %v2436 = vunpack.c.h.b16 %v2092
  %v2437 = vunpack.c.l.b16 %v2093
  %v2438 = vunpack.c.h.b16 %v2093
  %v2439 = vunpack.c.l.b16 %v2094
  %v2440 = vunpack.c.h.b16 %v2094
  %v2441 = vunpack.c.l.b16 %v2095
  %v2442 = vunpack.c.h.b16 %v2095
  %v2443 = vunpack.c.l.b16 %v2096
  %v2444 = vunpack.c.h.b16 %v2096
  %v2445 = vunpack.c.l.b16 %v2097
  %v2446 = vunpack.c.h.b16 %v2097
  %v2447 = vunpack.c.l.b16 %v2098
  %v2448 = vunpack.c.h.b16 %v2098
  %v2449 = vunpack.c.l.b16 %v2099
  %v2450 = vunpack.c.h.b16 %v2099
  %v2451 = vunpack.c.l.b16 %v2100
  %v2452 = vunpack.c.h.b16 %v2100
  %v2453 = vunpack.c.l.b16 %v2101
  %v2454 = vunpack.c.h.b16 %v2101
  %v2455 = vunpack.c.l.b16 %v2102
  %v2456 = vunpack.c.h.b16 %v2102
  %v2457 = vunpack.c.l.b16 %v2103
  %v2458 = vunpack.c.h.b16 %v2103
  %v2459 = vunpack.c.l.b16 %v2104
  %v2460 = vunpack.c.h.b16 %v2104
  %v2461 = vunpack.c.l.b16 %v2105
  %v2462 = vunpack.c.h.b16 %v2105
  %v2463 = vunpack.c.l.b16 %v2106
  %v2464 = vunpack.c.h.b16 %v2106
  %v2465 = vunpack.c.l.b16 %v2107
  %v2466 = vunpack.c.h.b16 %v2107
  %v2467 = vunpack.c.l.b16 %v2108
  %v2468 = vunpack.c.h.b16 %v2108
  %v2469 = vunpack.c.l.b16 %v2109
  %v2470 = vunpack.c.h.b16 %v2109
  %v2471 = vunpack.c.l.b16 %v2110
  %v2472 = vunpack.c.h.b16 %v2110
  %v2473 = vunpack.c.l.b16 %v2111
  %v2474 = vunpack.c.h.b16 %v2111
  %v2475 = vunpack.c.l.b16 %v2112
  %v2476 = vunpack.c.h.b16 %v2112
  %v2477 = vunpack.c.l.b16 %v2113
  %v2478 = vunpack.c.h.b16 %v2113
  %v2479 = vunpack.c.l.b16 %v2114
  %v2480 = vunpack.c.h.b16 %v2114
  %v2481 = vunpack.c.l.b16 %v2115
  %v2482 = vunpack.c.h.b16 %v2115
  %v2483 = vunpack.c.l.b16 %v2116
  %v2484 = vunpack.c.h.b16 %v2116
  %v2485 = vunpack.c.l.b16 %v2117
  %v2486 = vunpack.c.h.b16 %v2117
  %v2487 = vunpack.c.l.b16 %v2118
  %v2488 = vunpack.c.h.b16 %v2118
  %v2489 = vunpack.c.l.b16 %v2119
  %v2490 = vunpack.c.h.b16 %v2119
  %v2491 = vunpack.c.l.b16 %v2120
  %v2492 = vunpack.c.h.b16 %v2120
  %v2493 = vunpack.c.l.b16 %v2121
  %v2494 = vunpack.c.h.b16 %v2121
  %v2495 = vunpack.c.l.b16 %v2122
  %v2496 = vunpack.c.h.b16 %v2122
  %v2497 = vunpack.c.l.b16 %v2123
  %v2498 = vunpack.c.h.b16 %v2123
  %v2499 = vunpack.c.l.b16 %v2124
  %v2500 = vunpack.c.h.b16 %v2124
  %v2501 = vunpack.c.l.b16 %v2125
  %v2502 = vunpack.c.h.b16 %v2125
  %v2503 = vunpack.c.l.b16 %v2126
  %v2504 = vunpack.c.h.b16 %v2126
  %v2505 = vunpack.c.l.b16 %v2127
  %v2506 = vunpack.c.h.b16 %v2127
  %v2507 = vunpack.c.l.b16 %v2128
  %v2508 = vunpack.c.h.b16 %v2128
  %v2509 = vunpack.c.l.b16 %v2129
  %v2510 = vunpack.c.h.b16 %v2129
  %v2511 = vunpack.c.l.b16 %v2130
  %v2512 = vunpack.c.h.b16 %v2130
  %v2513 = vunpack.c.l.b16 %v2131
  %v2514 = vunpack.c.h.b16 %v2131
  %v2515 = vunpack.c.l.b16 %v2132
  %v2516 = vunpack.c.h.b16 %v2132
  %v2517 = vunpack.c.l.b16 %v2133
  %v2518 = vunpack.c.h.b16 %v2133
  %v2519 = vunpack.c.l.b16 %v2134
  %v2520 = vunpack.c.h.b16 %v2134
  %v2521 = vunpack.c.l.b16 %v2135
  %v2522 = vunpack.c.h.b16 %v2135
  %v2523 = vunpack.c.l.b16 %v2136
  %v2524 = vunpack.c.h.b16 %v2136
  %v2525 = vunpack.c.l.b16 %v2137
  %v2526 = vunpack.c.h.b16 %v2137
  %v2527 = vunpack.c.l.b16 %v2138
  %v2528 = vunpack.c.h.b16 %v2138
  %v2529 = vunpack.c.l.b16 %v2139
  %v2530 = vunpack.c.h.b16 %v2139
  %v2531 = vunpack.c.l.b16 %v2140
  %v2532 = vunpack.c.h.b16 %v2140
  %v2533 = vunpack.c.l.b16 %v2141
  %v2534 = vunpack.c.h.b16 %v2141
  %v2535 = vunpack.c.l.b16 %v2142
  %v2536 = vunpack.c.h.b16 %v2142
  %v2537 = vunpack.c.l.b16 %v2143
  %v2538 = vunpack.c.h.b16 %v2143
  %v2539 = vunpack.c.l.b16 %v2144
  %v2540 = vunpack.c.h.b16 %v2144
  %v2541 = vunpack.c.l.b16 %v2145
  %v2542 = vunpack.c.h.b16 %v2145
  %v2543 = vunpack.c.l.b16 %v2146
  %v2544 = vunpack.c.h.b16 %v2146
  %v2545 = vunpack.c.l.b16 %v2147
  %v2546 = vunpack.c.h.b16 %v2147
  %v2547 = vunpack.c.l.b16 %v2148
  %v2548 = vunpack.c.h.b16 %v2148
  %v2549 = vunpack.c.l.b16 %v2149
  %v2550 = vunpack.c.h.b16 %v2149
  %v2551 = vunpack.c.l.b16 %v2150
  %v2552 = vunpack.c.h.b16 %v2150
  %v2553 = vunpack.c.l.b16 %v2151
  %v2554 = vunpack.c.h.b16 %v2151
  %v2555 = vunpack.c.l.b16 %v2152
  %v2556 = vunpack.c.h.b16 %v2152
  %v2557 = vunpack.c.l.b16 %v2153
  %v2558 = vunpack.c.h.b16 %v2153
  %v2559 = vunpack.c.l.b16 %v2154
  %v2560 = vunpack.c.h.b16 %v2154
  %v2561 = vunpack.c.l.b16 %v2155
  %v2562 = vunpack.c.h.b16 %v2155
  %v2563 = vpack.c.b16 %v2311, %v2307
  %v2564 = vpack.c.b16 %v2312, %v2308
  %v2565 = vpack.c.b16 %v2313, %v2309
  %v2566 = vpack.c.b16 %v2314, %v2310
  %v2567 = vpack.c.b16 %v2319, %v2315
  %v2568 = vpack.c.b16 %v2320, %v2316
  %v2569 = vpack.c.b16 %v2321, %v2317
  %v2570 = vpack.c.b16 %v2322, %v2318
  %v2571 = vpack.c.b16 %v2327, %v2323
  %v2572 = vpack.c.b16 %v2328, %v2324
  %v2573 = vpack.c.b16 %v2329, %v2325
  %v2574 = vpack.c.b16 %v2330, %v2326
  %v2575 = vpack.c.b16 %v2335, %v2331
  %v2576 = vpack.c.b16 %v2336, %v2332
  %v2577 = vpack.c.b16 %v2337, %v2333
  %v2578 = vpack.c.b16 %v2338, %v2334
  %v2579 = vpack.c.b16 %v2343, %v2339
  %v2580 = vpack.c.b16 %v2344, %v2340
  %v2581 = vpack.c.b16 %v2345, %v2341
  %v2582 = vpack.c.b16 %v2346, %v2342
  %v2583 = vpack.c.b16 %v2351, %v2347
  %v2584 = vpack.c.b16 %v2352, %v2348
  %v2585 = vpack.c.b16 %v2353, %v2349
  %v2586 = vpack.c.b16 %v2354, %v2350
  %v2587 = vpack.c.b16 %v2359, %v2355
  %v2588 = vpack.c.b16 %v2360, %v2356
  %v2589 = vpack.c.b16 %v2361, %v2357
  %v2590 = vpack.c.b16 %v2362, %v2358
  %v2591 = vpack.c.b16 %v2367, %v2363
  %v2592 = vpack.c.b16 %v2368, %v2364
  %v2593 = vpack.c.b16 %v2369, %v2365
  %v2594 = vpack.c.b16 %v2370, %v2366
  %v2595 = vpack.c.b16 %v2375, %v2371
  %v2596 = vpack.c.b16 %v2376, %v2372
  %v2597 = vpack.c.b16 %v2377, %v2373
  %v2598 = vpack.c.b16 %v2378, %v2374
  %v2599 = vpack.c.b16 %v2383, %v2379
  %v2600 = vpack.c.b16 %v2384, %v2380
  %v2601 = vpack.c.b16 %v2385, %v2381
  %v2602 = vpack.c.b16 %v2386, %v2382
  %v2603 = vpack.c.b16 %v2391, %v2387
  %v2604 = vpack.c.b16 %v2392, %v2388
  %v2605 = vpack.c.b16 %v2393, %v2389
  %v2606 = vpack.c.b16 %v2394, %v2390
  %v2607 = vpack.c.b16 %v2399, %v2395
  %v2608 = vpack.c.b16 %v2400, %v2396
  %v2609 = vpack.c.b16 %v2401, %v2397
  %v2610 = vpack.c.b16 %v2402, %v2398
  %v2611 = vpack.c.b16 %v2407, %v2403
  %v2612 = vpack.c.b16 %v2408, %v2404
  %v2613 = vpack.c.b16 %v2409, %v2405
  %v2614 = vpack.c.b16 %v2410, %v2406
  %v2615 = vpack.c.b16 %v2415, %v2411
  %v2616 = vpack.c.b16 %v2416, %v2412
  %v2617 = vpack.c.b16 %v2417, %v2413
  %v2618 = vpack.c.b16 %v2418, %v2414
  %v2619 = vpack.c.b16 %v2423, %v2419
  %v2620 = vpack.c.b16 %v2424, %v2420
  %v2621 = vpack.c.b16 %v2425, %v2421
  %v2622 = vpack.c.b16 %v2426, %v2422
  %v2623 = vpack.c.b16 %v2431, %v2427
  %v2624 = vpack.c.b16 %v2432, %v2428
  %v2625 = vpack.c.b16 %v2433, %v2429
  %v2626 = vpack.c.b16 %v2434, %v2430
  %v2627 = vpack.c.b16 %v2439, %v2435
  %v2628 = vpack.c.b16 %v2440, %v2436
  %v2629 = vpack.c.b16 %v2441, %v2437
  %v2630 = vpack.c.b16 %v2442, %v2438
  %v2631 = vpack.c.b16 %v2447, %v2443
  %v2632 = vpack.c.b16 %v2448, %v2444
  %v2633 = vpack.c.b16 %v2449, %v2445
  %v2634 = vpack.c.b16 %v2450, %v2446
  %v2635 = vpack.c.b16 %v2455, %v2451
  %v2636 = vpack.c.b16 %v2456, %v2452
  %v2637 = vpack.c.b16 %v2457, %v2453
  %v2638 = vpack.c.b16 %v2458, %v2454
  %v2639 = vpack.c.b16 %v2463, %v2459
  %v2640 = vpack.c.b16 %v2464, %v2460
  %v2641 = vpack.c.b16 %v2465, %v2461
  %v2642 = vpack.c.b16 %v2466, %v2462
  %v2643 = vpack.c.b16 %v2471, %v2467
  %v2644 = vpack.c.b16 %v2472, %v2468
  %v2645 = vpack.c.b16 %v2473, %v2469
  %v2646 = vpack.c.b16 %v2474, %v2470
  %v2647 = vpack.c.b16 %v2479, %v2475
  %v2648 = vpack.c.b16 %v2480, %v2476
  %v2649 = vpack.c.b16 %v2481, %v2477
  %v2650 = vpack.c.b16 %v2482, %v2478
  %v2651 = vpack.c.b16 %v2487, %v2483
  %v2652 = vpack.c.b16 %v2488, %v2484
  %v2653 = vpack.c.b16 %v2489, %v2485
  %v2654 = vpack.c.b16 %v2490, %v2486
  %v2655 = vpack.c.b16 %v2495, %v2491
  %v2656 = vpack.c.b16 %v2496, %v2492
  %v2657 = vpack.c.b16 %v2497, %v2493
  %v2658 = vpack.c.b16 %v2498, %v2494
  %v2659 = vpack.c.b16 %v2503, %v2499
  %v2660 = vpack.c.b16 %v2504, %v2500
  %v2661 = vpack.c.b16 %v2505, %v2501
  %v2662 = vpack.c.b16 %v2506, %v2502
  %v2663 = vpack.c.b16 %v2511, %v2507
  %v2664 = vpack.c.b16 %v2512, %v2508
  %v2665 = vpack.c.b16 %v2513, %v2509
  %v2666 = vpack.c.b16 %v2514, %v2510
  %v2667 = vpack.c.b16 %v2519, %v2515
  %v2668 = vpack.c.b16 %v2520, %v2516
  %v2669 = vpack.c.b16 %v2521, %v2517
  %v2670 = vpack.c.b16 %v2522, %v2518
  %v2671 = vpack.c.b16 %v2527, %v2523
  %v2672 = vpack.c.b16 %v2528, %v2524
  %v2673 = vpack.c.b16 %v2529, %v2525
  %v2674 = vpack.c.b16 %v2530, %v2526
  %v2675 = vpack.c.b16 %v2535, %v2531
  %v2676 = vpack.c.b16 %v2536, %v2532
  %v2677 = vpack.c.b16 %v2537, %v2533
  %v2678 = vpack.c.b16 %v2538, %v2534
  %v2679 = vpack.c.b16 %v2543, %v2539
  %v2680 = vpack.c.b16 %v2544, %v2540
  %v2681 = vpack.c.b16 %v2545, %v2541
  %v2682 = vpack.c.b16 %v2546, %v2542
  %v2683 = vpack.c.b16 %v2551, %v2547
  %v2684 = vpack.c.b16 %v2552, %v2548
  %v2685 = vpack.c.b16 %v2553, %v2549
  %v2686 = vpack.c.b16 %v2554, %v2550
  %v2687 = vpack.c.b16 %v2559, %v2555
  %v2688 = vpack.c.b16 %v2560, %v2556
  %v2689 = vpack.c.b16 %v2561, %v2557
  %v2690 = vpack.c.b16 %v2562, %v2558
  %2819 = vmatprep.subr.bf16.mxu0 %v2564
  %2820 = vmatpush1.bf16.msra.mxu0 %v2563
  %2821 = vmatprep.subr.bf16.mxu0 %v2568
  %2822 = vmatpush1.bf16.msra.mxu0 %v2567
  %2823 = vmatprep.subr.bf16.mxu0 %v2572
  %2824 = vmatpush1.bf16.msra.mxu0 %v2571
  %2825 = vmatprep.subr.bf16.mxu0 %v2576
  %2826 = vmatpush1.bf16.msra.mxu0 %v2575
  %2827 = vmatprep.subr.bf16.mxu0 %v2580
  %2828 = vmatpush1.bf16.msra.mxu0 %v2579
  %2829 = vmatprep.subr.bf16.mxu0 %v2584
  %2830 = vmatpush1.bf16.msra.mxu0 %v2583
  %2831 = vmatprep.subr.bf16.mxu0 %v2588
  %2832 = vmatpush1.bf16.msra.mxu0 %v2587
  %2833 = vmatprep.subr.bf16.mxu0 %v2592
  %2834 = vmatpush1.bf16.msra.mxu0 %v2591
  %2835 = vmatprep.subr.bf16.mxu0 %v2596
  %2836 = vmatpush1.bf16.msra.mxu0 %v2595
  %2837 = vmatprep.subr.bf16.mxu0 %v2600
  %2838 = vmatpush1.bf16.msra.mxu0 %v2599
  %2839 = vmatprep.subr.bf16.mxu0 %v2604
  %2840 = vmatpush1.bf16.msra.mxu0 %v2603
  %2841 = vmatprep.subr.bf16.mxu0 %v2608
  %2842 = vmatpush1.bf16.msra.mxu0 %v2607
  %2843 = vmatprep.subr.bf16.mxu0 %v2612
  %2844 = vmatpush1.bf16.msra.mxu0 %v2611
  %2845 = vmatprep.subr.bf16.mxu0 %v2616
  %2846 = vmatpush1.bf16.msra.mxu0 %v2615
  %2847 = vmatprep.subr.bf16.mxu0 %v2620
  %2848 = vmatpush1.bf16.msra.mxu0 %v2619
  %2849 = vmatprep.subr.bf16.mxu0 %v2624
  %2850 = vmatpush1.bf16.msra.mxu0 %v2623
  %2851 = vmatprep.mubr.bf16.mxu0 %v2024
  %2852 = vmatmul.mubr.bf16.gmra.mrb[0].mxu0 %v2023
  %v2853 = vpop.f32.mrb[0].mxu0
  %v2854 = vadd.f32 %v2162, %v2853
  %v2855 = vpop.f32.mrb[0].mxu0
  %v2856 = vadd.f32 %v2166, %v2855
  %v2857 = vpop.f32.mrb[0].mxu0
  %v2858 = vpop.f32.mrb[0].mxu0
  %2859 = vdwg.mxu0
  %2860 = vmatprep.subr.bf16.mxu0 %v2628
  %2861 = vmatpush1.bf16.msra.mxu0 %v2627
  %2862 = vmatprep.subr.bf16.mxu0 %v2632
  %2863 = vmatpush1.bf16.msra.mxu0 %v2631
  %2864 = vmatprep.subr.bf16.mxu0 %v2636
  %2865 = vmatpush1.bf16.msra.mxu0 %v2635
  %2866 = vmatprep.subr.bf16.mxu0 %v2640
  %2867 = vmatpush1.bf16.msra.mxu0 %v2639
  %2868 = vmatprep.subr.bf16.mxu0 %v2644
  %2869 = vmatpush1.bf16.msra.mxu0 %v2643
  %2870 = vmatprep.subr.bf16.mxu0 %v2648
  %2871 = vmatpush1.bf16.msra.mxu0 %v2647
  %2872 = vmatprep.subr.bf16.mxu0 %v2652
  %2873 = vmatpush1.bf16.msra.mxu0 %v2651
  %2874 = vmatprep.subr.bf16.mxu0 %v2656
  %2875 = vmatpush1.bf16.msra.mxu0 %v2655
  %2876 = vmatprep.subr.bf16.mxu0 %v2660
  %2877 = vmatpush1.bf16.msra.mxu0 %v2659
  %2878 = vmatprep.subr.bf16.mxu0 %v2664
  %2879 = vmatpush1.bf16.msra.mxu0 %v2663
  %2880 = vmatprep.subr.bf16.mxu0 %v2668
  %2881 = vmatpush1.bf16.msra.mxu0 %v2667
  %2882 = vmatprep.subr.bf16.mxu0 %v2672
  %2883 = vmatpush1.bf16.msra.mxu0 %v2671
  %2884 = vmatprep.subr.bf16.mxu0 %v2676
  %2885 = vmatpush1.bf16.msra.mxu0 %v2675
  %2886 = vmatprep.subr.bf16.mxu0 %v2680
  %2887 = vmatpush1.bf16.msra.mxu0 %v2679
  %2888 = vmatprep.subr.bf16.mxu0 %v2684
  %2889 = vmatpush1.bf16.msra.mxu0 %v2683
  %2890 = vmatprep.subr.bf16.mxu0 %v2688
  %2891 = vmatpush1.bf16.msra.mxu0 %v2687
  %2892 = vmatprep.mubr.bf16.mxu0 %v2026
  %2893 = vmatmul.mubr.bf16.gmra.mrb[0].mxu0 %v2025
  %v2894 = vpop.f32.mrb[0].mxu0
  %v2895 = vadd.f32 %v2854, %v2894
  %v2896 = vpop.f32.mrb[0].mxu0
  %v2897 = vadd.f32 %v2856, %v2896
  %v2898 = vpop.f32.mrb[0].mxu0
  %v2899 = vpop.f32.mrb[0].mxu0
  %2900 = vdwg.mxu0
  %2901 = vmatprep.subr.bf16.mxu0 %v2566
  %2902 = vmatpush1.bf16.msra.mxu0 %v2565
  %2903 = vmatprep.subr.bf16.mxu0 %v2570
  %2904 = vmatpush1.bf16.msra.mxu0 %v2569
  %2905 = vmatprep.subr.bf16.mxu0 %v2574
  %2906 = vmatpush1.bf16.msra.mxu0 %v2573
  %2907 = vmatprep.subr.bf16.mxu0 %v2578
  %2908 = vmatpush1.bf16.msra.mxu0 %v2577
  %2909 = vmatprep.subr.bf16.mxu0 %v2582
  %2910 = vmatpush1.bf16.msra.mxu0 %v2581
  %2911 = vmatprep.subr.bf16.mxu0 %v2586
  %2912 = vmatpush1.bf16.msra.mxu0 %v2585
  %2913 = vmatprep.subr.bf16.mxu0 %v2590
  %2914 = vmatpush1.bf16.msra.mxu0 %v2589
  %2915 = vmatprep.subr.bf16.mxu0 %v2594
  %2916 = vmatpush1.bf16.msra.mxu0 %v2593
  %2917 = vmatprep.subr.bf16.mxu0 %v2598
  %2918 = vmatpush1.bf16.msra.mxu0 %v2597
  %2919 = vmatprep.subr.bf16.mxu0 %v2602
  %2920 = vmatpush1.bf16.msra.mxu0 %v2601
  %2921 = vmatprep.subr.bf16.mxu0 %v2606
  %2922 = vmatpush1.bf16.msra.mxu0 %v2605
  %2923 = vmatprep.subr.bf16.mxu0 %v2610
  %2924 = vmatpush1.bf16.msra.mxu0 %v2609
  %2925 = vmatprep.subr.bf16.mxu0 %v2614
  %2926 = vmatpush1.bf16.msra.mxu0 %v2613
  %2927 = vmatprep.subr.bf16.mxu0 %v2618
  %2928 = vmatpush1.bf16.msra.mxu0 %v2617
  %2929 = vmatprep.subr.bf16.mxu0 %v2622
  %2930 = vmatpush1.bf16.msra.mxu0 %v2621
  %2931 = vmatprep.subr.bf16.mxu0 %v2626
  %2932 = vmatpush1.bf16.msra.mxu0 %v2625
  %2933 = vmatprep.mubr.bf16.mxu0 %v2024
  %2934 = vmatmul.mubr.bf16.gmra.mrb[0].mxu0 %v2023
  %v2935 = vpop.f32.mrb[0].mxu0
  %v2936 = vadd.f32 %v2170, %v2935
  %v2937 = vpop.f32.mrb[0].mxu0
  %v2938 = vadd.f32 %v2174, %v2937
  %v2939 = vpop.f32.mrb[0].mxu0
  %v2940 = vpop.f32.mrb[0].mxu0
  %2941 = vdwg.mxu0
  %2942 = vmatprep.subr.bf16.mxu0 %v2630
  %2943 = vmatpush1.bf16.msra.mxu0 %v2629
  %2944 = vmatprep.subr.bf16.mxu0 %v2634
  %2945 = vmatpush1.bf16.msra.mxu0 %v2633
  %2946 = vmatprep.subr.bf16.mxu0 %v2638
  %2947 = vmatpush1.bf16.msra.mxu0 %v2637
  %2948 = vmatprep.subr.bf16.mxu0 %v2642
  %2949 = vmatpush1.bf16.msra.mxu0 %v2641
  %2950 = vmatprep.subr.bf16.mxu0 %v2646
  %2951 = vmatpush1.bf16.msra.mxu0 %v2645
  %2952 = vmatprep.subr.bf16.mxu0 %v2650
  %2953 = vmatpush1.bf16.msra.mxu0 %v2649
  %2954 = vmatprep.subr.bf16.mxu0 %v2654
  %2955 = vmatpush1.bf16.msra.mxu0 %v2653
  %2956 = vmatprep.subr.bf16.mxu0 %v2658
  %2957 = vmatpush1.bf16.msra.mxu0 %v2657
  %2958 = vmatprep.subr.bf16.mxu0 %v2662
  %2959 = vmatpush1.bf16.msra.mxu0 %v2661
  %2960 = vmatprep.subr.bf16.mxu0 %v2666
  %2961 = vmatpush1.bf16.msra.mxu0 %v2665
  %2962 = vmatprep.subr.bf16.mxu0 %v2670
  %2963 = vmatpush1.bf16.msra.mxu0 %v2669
  %2964 = vmatprep.subr.bf16.mxu0 %v2674
  %2965 = vmatpush1.bf16.msra.mxu0 %v2673
  %2966 = vmatprep.subr.bf16.mxu0 %v2678
  %2967 = vmatpush1.bf16.msra.mxu0 %v2677
  %2968 = vmatprep.subr.bf16.mxu0 %v2682
  %2969 = vmatpush1.bf16.msra.mxu0 %v2681
  %2970 = vmatprep.subr.bf16.mxu0 %v2686
  %2971 = vmatpush1.bf16.msra.mxu0 %v2685
  %2972 = vmatprep.subr.bf16.mxu0 %v2690
  %2973 = vmatpush1.bf16.msra.mxu0 %v2689
  %2974 = vmatprep.mubr.bf16.mxu0 %v2026
  %2975 = vmatmul.mubr.bf16.gmra.mrb[0].mxu0 %v2025
  %v2976 = vpop.f32.mrb[0].mxu0
  %v2977 = vadd.f32 %v2936, %v2976
  %v2978 = vpop.f32.mrb[0].mxu0
  %v2979 = vadd.f32 %v2938, %v2978
  %v2980 = vpop.f32.mrb[0].mxu0
  %v2981 = vpop.f32.mrb[0].mxu0
  %2982 = vdwg.mxu0
  %v2983 = vmax.f32 %v2895, 0.0
  %v2984 = vmax.f32 %v2897, 0.0
  %v2985 = vmax.f32 %v2977, 0.0
  %v2986 = vmax.f32 %v2979, 0.0
  %v2987 = vpack.c.bf16 %v2983, %v2983
  %v2988 = vpack.c.bf16 %v2984, %v2984
  %v2989 = vpack.c.bf16 %v2985, %v2985
  %v2990 = vpack.c.bf16 %v2986, %v2986
  %s2991 = scalar_lea.vmem %s3, 1024
  %v2992 = vld [vmem:[%s2991] sm:$0xff]
  %v2993 = vld [vmem:[%s2991 + $0x8] sm:$0xff]
  %v2994 = vld [vmem:[%s2991 + $0x10] sm:$0xff]
  %v2995 = vld [vmem:[%s2991 + $0x18] sm:$0xff]
  %v2996 = vld [vmem:[%s2991 + $0x20] sm:$0xff]
  %v2997 = vld [vmem:[%s2991 + $0x28] sm:$0xff]
  %v2998 = vld [vmem:[%s2991 + $0x30] sm:$0xff]
  %v2999 = vld [vmem:[%s2991 + $0x38] sm:$0xff]
  %v3000 = vld [vmem:[%s2991 + $0x40] sm:$0xff]
  %v3001 = vld [vmem:[%s2991 + $0x48] sm:$0xff]
  %v3002 = vld [vmem:[%s2991 + $0x50] sm:$0xff]
  %v3003 = vld [vmem:[%s2991 + $0x58] sm:$0xff]
  %v3004 = vld [vmem:[%s2991 + $0x60] sm:$0xff]
  %v3005 = vld [vmem:[%s2991 + $0x68] sm:$0xff]
  %v3006 = vld [vmem:[%s2991 + $0x70] sm:$0xff]
  %v3007 = vld [vmem:[%s2991 + $0x78] sm:$0xff]
  %v3008 = vld [vmem:[%s2991 + $0x80] sm:$0xff]
  %v3009 = vld [vmem:[%s2991 + $0x88] sm:$0xff]
  %v3010 = vld [vmem:[%s2991 + $0x90] sm:$0xff]
  %v3011 = vld [vmem:[%s2991 + $0x98] sm:$0xff]
  %v3012 = vld [vmem:[%s2991 + $0xa0] sm:$0xff]
  %v3013 = vld [vmem:[%s2991 + $0xa8] sm:$0xff]
  %v3014 = vld [vmem:[%s2991 + $0xb0] sm:$0xff]
  %v3015 = vld [vmem:[%s2991 + $0xb8] sm:$0xff]
  %v3016 = vld [vmem:[%s2991 + $0xc0] sm:$0xff]
  %v3017 = vld [vmem:[%s2991 + $0xc8] sm:$0xff]
  %v3018 = vld [vmem:[%s2991 + $0xd0] sm:$0xff]
  %v3019 = vld [vmem:[%s2991 + $0xd8] sm:$0xff]
  %v3020 = vld [vmem:[%s2991 + $0xe0] sm:$0xff]
  %v3021 = vld [vmem:[%s2991 + $0xe8] sm:$0xff]
  %v3022 = vld [vmem:[%s2991 + $0xf0] sm:$0xff]
  %v3023 = vld [vmem:[%s2991 + $0xf8] sm:$0xff]
  %v3024 = vld [vmem:[%s2991 + $0x100] sm:$0xff]
  %v3025 = vld [vmem:[%s2991 + $0x108] sm:$0xff]
  %v3026 = vld [vmem:[%s2991 + $0x110] sm:$0xff]
  %v3027 = vld [vmem:[%s2991 + $0x118] sm:$0xff]
  %v3028 = vld [vmem:[%s2991 + $0x120] sm:$0xff]
  %v3029 = vld [vmem:[%s2991 + $0x128] sm:$0xff]
  %v3030 = vld [vmem:[%s2991 + $0x130] sm:$0xff]
  %v3031 = vld [vmem:[%s2991 + $0x138] sm:$0xff]
  %v3032 = vld [vmem:[%s2991 + $0x140] sm:$0xff]
  %v3033 = vld [vmem:[%s2991 + $0x148] sm:$0xff]
  %v3034 = vld [vmem:[%s2991 + $0x150] sm:$0xff]
  %v3035 = vld [vmem:[%s2991 + $0x158] sm:$0xff]
  %v3036 = vld [vmem:[%s2991 + $0x160] sm:$0xff]
  %v3037 = vld [vmem:[%s2991 + $0x168] sm:$0xff]
  %v3038 = vld [vmem:[%s2991 + $0x170] sm:$0xff]
  %v3039 = vld [vmem:[%s2991 + $0x178] sm:$0xff]
  %v3040 = vld [vmem:[%s2991 + $0x180] sm:$0xff]
  %v3041 = vld [vmem:[%s2991 + $0x188] sm:$0xff]
  %v3042 = vld [vmem:[%s2991 + $0x190] sm:$0xff]
  %v3043 = vld [vmem:[%s2991 + $0x198] sm:$0xff]
  %v3044 = vld [vmem:[%s2991 + $0x1a0] sm:$0xff]
  %v3045 = vld [vmem:[%s2991 + $0x1a8] sm:$0xff]
  %v3046 = vld [vmem:[%s2991 + $0x1b0] sm:$0xff]
  %v3047 = vld [vmem:[%s2991 + $0x1b8] sm:$0xff]
  %v3048 = vld [vmem:[%s2991 + $0x1c0] sm:$0xff]
  %v3049 = vld [vmem:[%s2991 + $0x1c8] sm:$0xff]
  %v3050 = vld [vmem:[%s2991 + $0x1d0] sm:$0xff]
  %v3051 = vld [vmem:[%s2991 + $0x1d8] sm:$0xff]
  %v3052 = vld [vmem:[%s2991 + $0x1e0] sm:$0xff]
  %v3053 = vld [vmem:[%s2991 + $0x1e8] sm:$0xff]
  %v3054 = vld [vmem:[%s2991 + $0x1f0] sm:$0xff]
  %v3055 = vld [vmem:[%s2991 + $0x1f8] sm:$0xff]
  %v3056 = vld [vmem:[%s2991 + $0x200] sm:$0xff]
  %v3057 = vld [vmem:[%s2991 + $0x208] sm:$0xff]
  %v3058 = vld [vmem:[%s2991 + $0x210] sm:$0xff]
  %v3059 = vld [vmem:[%s2991 + $0x218] sm:$0xff]
  %v3060 = vld [vmem:[%s2991 + $0x220] sm:$0xff]
  %v3061 = vld [vmem:[%s2991 + $0x228] sm:$0xff]
  %v3062 = vld [vmem:[%s2991 + $0x230] sm:$0xff]
  %v3063 = vld [vmem:[%s2991 + $0x238] sm:$0xff]
  %v3064 = vld [vmem:[%s2991 + $0x240] sm:$0xff]
  %v3065 = vld [vmem:[%s2991 + $0x248] sm:$0xff]
  %v3066 = vld [vmem:[%s2991 + $0x250] sm:$0xff]
  %v3067 = vld [vmem:[%s2991 + $0x258] sm:$0xff]
  %v3068 = vld [vmem:[%s2991 + $0x260] sm:$0xff]
  %v3069 = vld [vmem:[%s2991 + $0x268] sm:$0xff]
  %v3070 = vld [vmem:[%s2991 + $0x270] sm:$0xff]
  %v3071 = vld [vmem:[%s2991 + $0x278] sm:$0xff]
  %v3072 = vld [vmem:[%s2991 + $0x280] sm:$0xff]
  %v3073 = vld [vmem:[%s2991 + $0x288] sm:$0xff]
  %v3074 = vld [vmem:[%s2991 + $0x290] sm:$0xff]
  %v3075 = vld [vmem:[%s2991 + $0x298] sm:$0xff]
  %v3076 = vld [vmem:[%s2991 + $0x2a0] sm:$0xff]
  %v3077 = vld [vmem:[%s2991 + $0x2a8] sm:$0xff]
  %v3078 = vld [vmem:[%s2991 + $0x2b0] sm:$0xff]
  %v3079 = vld [vmem:[%s2991 + $0x2b8] sm:$0xff]
  %v3080 = vld [vmem:[%s2991 + $0x2c0] sm:$0xff]
  %v3081 = vld [vmem:[%s2991 + $0x2c8] sm:$0xff]
  %v3082 = vld [vmem:[%s2991 + $0x2d0] sm:$0xff]
  %v3083 = vld [vmem:[%s2991 + $0x2d8] sm:$0xff]
  %v3084 = vld [vmem:[%s2991 + $0x2e0] sm:$0xff]
  %v3085 = vld [vmem:[%s2991 + $0x2e8] sm:$0xff]
  %v3086 = vld [vmem:[%s2991 + $0x2f0] sm:$0xff]
  %v3087 = vld [vmem:[%s2991 + $0x2f8] sm:$0xff]
  %v3088 = vld [vmem:[%s2991 + $0x300] sm:$0xff]
  %v3089 = vld [vmem:[%s2991 + $0x308] sm:$0xff]
  %v3090 = vld [vmem:[%s2991 + $0x310] sm:$0xff]
  %v3091 = vld [vmem:[%s2991 + $0x318] sm:$0xff]
  %v3092 = vld [vmem:[%s2991 + $0x320] sm:$0xff]
  %v3093 = vld [vmem:[%s2991 + $0x328] sm:$0xff]
  %v3094 = vld [vmem:[%s2991 + $0x330] sm:$0xff]
  %v3095 = vld [vmem:[%s2991 + $0x338] sm:$0xff]
  %v3096 = vld [vmem:[%s2991 + $0x340] sm:$0xff]
  %v3097 = vld [vmem:[%s2991 + $0x348] sm:$0xff]
  %v3098 = vld [vmem:[%s2991 + $0x350] sm:$0xff]
  %v3099 = vld [vmem:[%s2991 + $0x358] sm:$0xff]
  %v3100 = vld [vmem:[%s2991 + $0x360] sm:$0xff]
  %v3101 = vld [vmem:[%s2991 + $0x368] sm:$0xff]
  %v3102 = vld [vmem:[%s2991 + $0x370] sm:$0xff]
  %v3103 = vld [vmem:[%s2991 + $0x378] sm:$0xff]
  %v3104 = vld [vmem:[%s2991 + $0x380] sm:$0xff]
  %v3105 = vld [vmem:[%s2991 + $0x388] sm:$0xff]
  %v3106 = vld [vmem:[%s2991 + $0x390] sm:$0xff]
  %v3107 = vld [vmem:[%s2991 + $0x398] sm:$0xff]
  %v3108 = vld [vmem:[%s2991 + $0x3a0] sm:$0xff]
  %v3109 = vld [vmem:[%s2991 + $0x3a8] sm:$0xff]
  %v3110 = vld [vmem:[%s2991 + $0x3b0] sm:$0xff]
  %v3111 = vld [vmem:[%s2991 + $0x3b8] sm:$0xff]
  %v3112 = vld [vmem:[%s2991 + $0x3c0] sm:$0xff]
  %v3113 = vld [vmem:[%s2991 + $0x3c8] sm:$0xff]
  %v3114 = vld [vmem:[%s2991 + $0x3d0] sm:$0xff]
  %v3115 = vld [vmem:[%s2991 + $0x3d8] sm:$0xff]
  %v3116 = vld [vmem:[%s2991 + $0x3e0] sm:$0xff]
  %v3117 = vld [vmem:[%s2991 + $0x3e8] sm:$0xff]
  %v3118 = vld [vmem:[%s2991 + $0x3f0] sm:$0xff]
  %v3119 = vld [vmem:[%s2991 + $0x3f8] sm:$0xff]
  %v3248 = vunpack.c.l.b16 %v2992
  %v3249 = vunpack.c.h.b16 %v2992
  %v3250 = vunpack.c.l.b16 %v2993
  %v3251 = vunpack.c.h.b16 %v2993
  %v3252 = vunpack.c.l.b16 %v2994
  %v3253 = vunpack.c.h.b16 %v2994
  %v3254 = vunpack.c.l.b16 %v2995
  %v3255 = vunpack.c.h.b16 %v2995
  %v3256 = vunpack.c.l.b16 %v2996
  %v3257 = vunpack.c.h.b16 %v2996
  %v3258 = vunpack.c.l.b16 %v2997
  %v3259 = vunpack.c.h.b16 %v2997
  %v3260 = vunpack.c.l.b16 %v2998
  %v3261 = vunpack.c.h.b16 %v2998
  %v3262 = vunpack.c.l.b16 %v2999
  %v3263 = vunpack.c.h.b16 %v2999
  %v3264 = vunpack.c.l.b16 %v3000
  %v3265 = vunpack.c.h.b16 %v3000
  %v3266 = vunpack.c.l.b16 %v3001
  %v3267 = vunpack.c.h.b16 %v3001
  %v3268 = vunpack.c.l.b16 %v3002
  %v3269 = vunpack.c.h.b16 %v3002
  %v3270 = vunpack.c.l.b16 %v3003
  %v3271 = vunpack.c.h.b16 %v3003
  %v3272 = vunpack.c.l.b16 %v3004
  %v3273 = vunpack.c.h.b16 %v3004
  %v3274 = vunpack.c.l.b16 %v3005
  %v3275 = vunpack.c.h.b16 %v3005
  %v3276 = vunpack.c.l.b16 %v3006
  %v3277 = vunpack.c.h.b16 %v3006
  %v3278 = vunpack.c.l.b16 %v3007
  %v3279 = vunpack.c.h.b16 %v3007
  %v3280 = vunpack.c.l.b16 %v3008
  %v3281 = vunpack.c.h.b16 %v3008
  %v3282 = vunpack.c.l.b16 %v3009
  %v3283 = vunpack.c.h.b16 %v3009
  %v3284 = vunpack.c.l.b16 %v3010
  %v3285 = vunpack.c.h.b16 %v3010
  %v3286 = vunpack.c.l.b16 %v3011
  %v3287 = vunpack.c.h.b16 %v3011
  %v3288 = vunpack.c.l.b16 %v3012
  %v3289 = vunpack.c.h.b16 %v3012
  %v3290 = vunpack.c.l.b16 %v3013
  %v3291 = vunpack.c.h.b16 %v3013
  %v3292 = vunpack.c.l.b16 %v3014
  %v3293 = vunpack.c.h.b16 %v3014
  %v3294 = vunpack.c.l.b16 %v3015
  %v3295 = vunpack.c.h.b16 %v3015
  %v3296 = vunpack.c.l.b16 %v3016
  %v3297 = vunpack.c.h.b16 %v3016
  %v3298 = vunpack.c.l.b16 %v3017
  %v3299 = vunpack.c.h.b16 %v3017
  %v3300 = vunpack.c.l.b16 %v3018
  %v3301 = vunpack.c.h.b16 %v3018
  %v3302 = vunpack.c.l.b16 %v3019
  %v3303 = vunpack.c.h.b16 %v3019
  %v3304 = vunpack.c.l.b16 %v3020
  %v3305 = vunpack.c.h.b16 %v3020
  %v3306 = vunpack.c.l.b16 %v3021
  %v3307 = vunpack.c.h.b16 %v3021
  %v3308 = vunpack.c.l.b16 %v3022
  %v3309 = vunpack.c.h.b16 %v3022
  %v3310 = vunpack.c.l.b16 %v3023
  %v3311 = vunpack.c.h.b16 %v3023
  %v3312 = vunpack.c.l.b16 %v3024
  %v3313 = vunpack.c.h.b16 %v3024
  %v3314 = vunpack.c.l.b16 %v3025
  %v3315 = vunpack.c.h.b16 %v3025
  %v3316 = vunpack.c.l.b16 %v3026
  %v3317 = vunpack.c.h.b16 %v3026
  %v3318 = vunpack.c.l.b16 %v3027
  %v3319 = vunpack.c.h.b16 %v3027
  %v3320 = vunpack.c.l.b16 %v3028
  %v3321 = vunpack.c.h.b16 %v3028
  %v3322 = vunpack.c.l.b16 %v3029
  %v3323 = vunpack.c.h.b16 %v3029
  %v3324 = vunpack.c.l.b16 %v3030
  %v3325 = vunpack.c.h.b16 %v3030
  %v3326 = vunpack.c.l.b16 %v3031
  %v3327 = vunpack.c.h.b16 %v3031
  %v3328 = vunpack.c.l.b16 %v3032
  %v3329 = vunpack.c.h.b16 %v3032
  %v3330 = vunpack.c.l.b16 %v3033
  %v3331 = vunpack.c.h.b16 %v3033
  %v3332 = vunpack.c.l.b16 %v3034
  %v3333 = vunpack.c.h.b16 %v3034
  %v3334 = vunpack.c.l.b16 %v3035
  %v3335 = vunpack.c.h.b16 %v3035
  %v3336 = vunpack.c.l.b16 %v3036
  %v3337 = vunpack.c.h.b16 %v3036
  %v3338 = vunpack.c.l.b16 %v3037
  %v3339 = vunpack.c.h.b16 %v3037
  %v3340 = vunpack.c.l.b16 %v3038
  %v3341 = vunpack.c.h.b16 %v3038
  %v3342 = vunpack.c.l.b16 %v3039
  %v3343 = vunpack.c.h.b16 %v3039
  %v3344 = vunpack.c.l.b16 %v3040
  %v3345 = vunpack.c.h.b16 %v3040
  %v3346 = vunpack.c.l.b16 %v3041
  %v3347 = vunpack.c.h.b16 %v3041
  %v3348 = vunpack.c.l.b16 %v3042
  %v3349 = vunpack.c.h.b16 %v3042
  %v3350 = vunpack.c.l.b16 %v3043
  %v3351 = vunpack.c.h.b16 %v3043
  %v3352 = vunpack.c.l.b16 %v3044
  %v3353 = vunpack.c.h.b16 %v3044
  %v3354 = vunpack.c.l.b16 %v3045
  %v3355 = vunpack.c.h.b16 %v3045
  %v3356 = vunpack.c.l.b16 %v3046
  %v3357 = vunpack.c.h.b16 %v3046
  %v3358 = vunpack.c.l.b16 %v3047
  %v3359 = vunpack.c.h.b16 %v3047
  %v3360 = vunpack.c.l.b16 %v3048
  %v3361 = vunpack.c.h.b16 %v3048
  %v3362 = vunpack.c.l.b16 %v3049
  %v3363 = vunpack.c.h.b16 %v3049
  %v3364 = vunpack.c.l.b16 %v3050
  %v3365 = vunpack.c.h.b16 %v3050
  %v3366 = vunpack.c.l.b16 %v3051
  %v3367 = vunpack.c.h.b16 %v3051
  %v3368 = vunpack.c.l.b16 %v3052
  %v3369 = vunpack.c.h.b16 %v3052
  %v3370 = vunpack.c.l.b16 %v3053
  %v3371 = vunpack.c.h.b16 %v3053
  %v3372 = vunpack.c.l.b16 %v3054
  %v3373 = vunpack.c.h.b16 %v3054
  %v3374 = vunpack.c.l.b16 %v3055
  %v3375 = vunpack.c.h.b16 %v3055
  %v3376 = vunpack.c.l.b16 %v3056
  %v3377 = vunpack.c.h.b16 %v3056
  %v3378 = vunpack.c.l.b16 %v3057
  %v3379 = vunpack.c.h.b16 %v3057
  %v3380 = vunpack.c.l.b16 %v3058
  %v3381 = vunpack.c.h.b16 %v3058
  %v3382 = vunpack.c.l.b16 %v3059
  %v3383 = vunpack.c.h.b16 %v3059
  %v3384 = vunpack.c.l.b16 %v3060
  %v3385 = vunpack.c.h.b16 %v3060
  %v3386 = vunpack.c.l.b16 %v3061
  %v3387 = vunpack.c.h.b16 %v3061
  %v3388 = vunpack.c.l.b16 %v3062
  %v3389 = vunpack.c.h.b16 %v3062
  %v3390 = vunpack.c.l.b16 %v3063
  %v3391 = vunpack.c.h.b16 %v3063
  %v3392 = vunpack.c.l.b16 %v3064
  %v3393 = vunpack.c.h.b16 %v3064
  %v3394 = vunpack.c.l.b16 %v3065
  %v3395 = vunpack.c.h.b16 %v3065
  %v3396 = vunpack.c.l.b16 %v3066
  %v3397 = vunpack.c.h.b16 %v3066
  %v3398 = vunpack.c.l.b16 %v3067
  %v3399 = vunpack.c.h.b16 %v3067
  %v3400 = vunpack.c.l.b16 %v3068
  %v3401 = vunpack.c.h.b16 %v3068
  %v3402 = vunpack.c.l.b16 %v3069
  %v3403 = vunpack.c.h.b16 %v3069
  %v3404 = vunpack.c.l.b16 %v3070
  %v3405 = vunpack.c.h.b16 %v3070
  %v3406 = vunpack.c.l.b16 %v3071
  %v3407 = vunpack.c.h.b16 %v3071
  %v3408 = vunpack.c.l.b16 %v3072
  %v3409 = vunpack.c.h.b16 %v3072
  %v3410 = vunpack.c.l.b16 %v3073
  %v3411 = vunpack.c.h.b16 %v3073
  %v3412 = vunpack.c.l.b16 %v3074
  %v3413 = vunpack.c.h.b16 %v3074
  %v3414 = vunpack.c.l.b16 %v3075
  %v3415 = vunpack.c.h.b16 %v3075
  %v3416 = vunpack.c.l.b16 %v3076
  %v3417 = vunpack.c.h.b16 %v3076
  %v3418 = vunpack.c.l.b16 %v3077
  %v3419 = vunpack.c.h.b16 %v3077
  %v3420 = vunpack.c.l.b16 %v3078
  %v3421 = vunpack.c.h.b16 %v3078
  %v3422 = vunpack.c.l.b16 %v3079
  %v3423 = vunpack.c.h.b16 %v3079
  %v3424 = vunpack.c.l.b16 %v3080
  %v3425 = vunpack.c.h.b16 %v3080
  %v3426 = vunpack.c.l.b16 %v3081
  %v3427 = vunpack.c.h.b16 %v3081
  %v3428 = vunpack.c.l.b16 %v3082
  %v3429 = vunpack.c.h.b16 %v3082
  %v3430 = vunpack.c.l.b16 %v3083
  %v3431 = vunpack.c.h.b16 %v3083
  %v3432 = vunpack.c.l.b16 %v3084
  %v3433 = vunpack.c.h.b16 %v3084
  %v3434 = vunpack.c.l.b16 %v3085
  %v3435 = vunpack.c.h.b16 %v3085
  %v3436 = vunpack.c.l.b16 %v3086
  %v3437 = vunpack.c.h.b16 %v3086
  %v3438 = vunpack.c.l.b16 %v3087
  %v3439 = vunpack.c.h.b16 %v3087
  %v3440 = vunpack.c.l.b16 %v3088
  %v3441 = vunpack.c.h.b16 %v3088
  %v3442 = vunpack.c.l.b16 %v3089
  %v3443 = vunpack.c.h.b16 %v3089
  %v3444 = vunpack.c.l.b16 %v3090
  %v3445 = vunpack.c.h.b16 %v3090
  %v3446 = vunpack.c.l.b16 %v3091
  %v3447 = vunpack.c.h.b16 %v3091
  %v3448 = vunpack.c.l.b16 %v3092
  %v3449 = vunpack.c.h.b16 %v3092
  %v3450 = vunpack.c.l.b16 %v3093
  %v3451 = vunpack.c.h.b16 %v3093
  %v3452 = vunpack.c.l.b16 %v3094
  %v3453 = vunpack.c.h.b16 %v3094
  %v3454 = vunpack.c.l.b16 %v3095
  %v3455 = vunpack.c.h.b16 %v3095
  %v3456 = vunpack.c.l.b16 %v3096
  %v3457 = vunpack.c.h.b16 %v3096
  %v3458 = vunpack.c.l.b16 %v3097
  %v3459 = vunpack.c.h.b16 %v3097
  %v3460 = vunpack.c.l.b16 %v3098
  %v3461 = vunpack.c.h.b16 %v3098
  %v3462 = vunpack.c.l.b16 %v3099
  %v3463 = vunpack.c.h.b16 %v3099
  %v3464 = vunpack.c.l.b16 %v3100
  %v3465 = vunpack.c.h.b16 %v3100
  %v3466 = vunpack.c.l.b16 %v3101
  %v3467 = vunpack.c.h.b16 %v3101
  %v3468 = vunpack.c.l.b16 %v3102
  %v3469 = vunpack.c.h.b16 %v3102
  %v3470 = vunpack.c.l.b16 %v3103
  %v3471 = vunpack.c.h.b16 %v3103
  %v3472 = vunpack.c.l.b16 %v3104
  %v3473 = vunpack.c.h.b16 %v3104
  %v3474 = vunpack.c.l.b16 %v3105
  %v3475 = vunpack.c.h.b16 %v3105
  %v3476 = vunpack.c.l.b16 %v3106
  %v3477 = vunpack.c.h.b16 %v3106
  %v3478 = vunpack.c.l.b16 %v3107
  %v3479 = vunpack.c.h.b16 %v3107
  %v3480 = vunpack.c.l.b16 %v3108
  %v3481 = vunpack.c.h.b16 %v3108
  %v3482 = vunpack.c.l.b16 %v3109
  %v3483 = vunpack.c.h.b16 %v3109
  %v3484 = vunpack.c.l.b16 %v3110
  %v3485 = vunpack.c.h.b16 %v3110
  %v3486 = vunpack.c.l.b16 %v3111
  %v3487 = vunpack.c.h.b16 %v3111
  %v3488 = vunpack.c.l.b16 %v3112
  %v3489 = vunpack.c.h.b16 %v3112
  %v3490 = vunpack.c.l.b16 %v3113
  %v3491 = vunpack.c.h.b16 %v3113
  %v3492 = vunpack.c.l.b16 %v3114
  %v3493 = vunpack.c.h.b16 %v3114
  %v3494 = vunpack.c.l.b16 %v3115
  %v3495 = vunpack.c.h.b16 %v3115
  %v3496 = vunpack.c.l.b16 %v3116
  %v3497 = vunpack.c.h.b16 %v3116
  %v3498 = vunpack.c.l.b16 %v3117
  %v3499 = vunpack.c.h.b16 %v3117
  %v3500 = vunpack.c.l.b16 %v3118
  %v3501 = vunpack.c.h.b16 %v3118
  %v3502 = vunpack.c.l.b16 %v3119
  %v3503 = vunpack.c.h.b16 %v3119
  %v3504 = vpack.c.b16 %v3252, %v3248
  %v3505 = vpack.c.b16 %v3253, %v3249
  %v3506 = vpack.c.b16 %v3254, %v3250
  %v3507 = vpack.c.b16 %v3255, %v3251
  %v3508 = vpack.c.b16 %v3260, %v3256
  %v3509 = vpack.c.b16 %v3261, %v3257
  %v3510 = vpack.c.b16 %v3262, %v3258
  %v3511 = vpack.c.b16 %v3263, %v3259
  %v3512 = vpack.c.b16 %v3268, %v3264
  %v3513 = vpack.c.b16 %v3269, %v3265
  %v3514 = vpack.c.b16 %v3270, %v3266
  %v3515 = vpack.c.b16 %v3271, %v3267
  %v3516 = vpack.c.b16 %v3276, %v3272
  %v3517 = vpack.c.b16 %v3277, %v3273
  %v3518 = vpack.c.b16 %v3278, %v3274
  %v3519 = vpack.c.b16 %v3279, %v3275
  %v3520 = vpack.c.b16 %v3284, %v3280
  %v3521 = vpack.c.b16 %v3285, %v3281
  %v3522 = vpack.c.b16 %v3286, %v3282
  %v3523 = vpack.c.b16 %v3287, %v3283
  %v3524 = vpack.c.b16 %v3292, %v3288
  %v3525 = vpack.c.b16 %v3293, %v3289
  %v3526 = vpack.c.b16 %v3294, %v3290
  %v3527 = vpack.c.b16 %v3295, %v3291
  %v3528 = vpack.c.b16 %v3300, %v3296
  %v3529 = vpack.c.b16 %v3301, %v3297
  %v3530 = vpack.c.b16 %v3302, %v3298
  %v3531 = vpack.c.b16 %v3303, %v3299
  %v3532 = vpack.c.b16 %v3308, %v3304
  %v3533 = vpack.c.b16 %v3309, %v3305
  %v3534 = vpack.c.b16 %v3310, %v3306
  %v3535 = vpack.c.b16 %v3311, %v3307
  %v3536 = vpack.c.b16 %v3316, %v3312
  %v3537 = vpack.c.b16 %v3317, %v3313
  %v3538 = vpack.c.b16 %v3318, %v3314
  %v3539 = vpack.c.b16 %v3319, %v3315
  %v3540 = vpack.c.b16 %v3324, %v3320
  %v3541 = vpack.c.b16 %v3325, %v3321
  %v3542 = vpack.c.b16 %v3326, %v3322
  %v3543 = vpack.c.b16 %v3327, %v3323
  %v3544 = vpack.c.b16 %v3332, %v3328
  %v3545 = vpack.c.b16 %v3333, %v3329
  %v3546 = vpack.c.b16 %v3334, %v3330
  %v3547 = vpack.c.b16 %v3335, %v3331
  %v3548 = vpack.c.b16 %v3340, %v3336
  %v3549 = vpack.c.b16 %v3341, %v3337
  %v3550 = vpack.c.b16 %v3342, %v3338
  %v3551 = vpack.c.b16 %v3343, %v3339
  %v3552 = vpack.c.b16 %v3348, %v3344
  %v3553 = vpack.c.b16 %v3349, %v3345
  %v3554 = vpack.c.b16 %v3350, %v3346
  %v3555 = vpack.c.b16 %v3351, %v3347
  %v3556 = vpack.c.b16 %v3356, %v3352
  %v3557 = vpack.c.b16 %v3357, %v3353
  %v3558 = vpack.c.b16 %v3358, %v3354
  %v3559 = vpack.c.b16 %v3359, %v3355
  %v3560 = vpack.c.b16 %v3364, %v3360
  %v3561 = vpack.c.b16 %v3365, %v3361
  %v3562 = vpack.c.b16 %v3366, %v3362
  %v3563 = vpack.c.b16 %v3367, %v3363
  %v3564 = vpack.c.b16 %v3372, %v3368
  %v3565 = vpack.c.b16 %v3373, %v3369
  %v3566 = vpack.c.b16 %v3374, %v3370
  %v3567 = vpack.c.b16 %v3375, %v3371
  %v3568 = vpack.c.b16 %v3380, %v3376
  %v3569 = vpack.c.b16 %v3381, %v3377
  %v3570 = vpack.c.b16 %v3382, %v3378
  %v3571 = vpack.c.b16 %v3383, %v3379
  %v3572 = vpack.c.b16 %v3388, %v3384
  %v3573 = vpack.c.b16 %v3389, %v3385
  %v3574 = vpack.c.b16 %v3390, %v3386
  %v3575 = vpack.c.b16 %v3391, %v3387
  %v3576 = vpack.c.b16 %v3396, %v3392
  %v3577 = vpack.c.b16 %v3397, %v3393
  %v3578 = vpack.c.b16 %v3398, %v3394
  %v3579 = vpack.c.b16 %v3399, %v3395
  %v3580 = vpack.c.b16 %v3404, %v3400
  %v3581 = vpack.c.b16 %v3405, %v3401
  %v3582 = vpack.c.b16 %v3406, %v3402
  %v3583 = vpack.c.b16 %v3407, %v3403
  %v3584 = vpack.c.b16 %v3412, %v3408
  %v3585 = vpack.c.b16 %v3413, %v3409
  %v3586 = vpack.c.b16 %v3414, %v3410
  %v3587 = vpack.c.b16 %v3415, %v3411
  %v3588 = vpack.c.b16 %v3420, %v3416
  %v3589 = vpack.c.b16 %v3421, %v3417
  %v3590 = vpack.c.b16 %v3422, %v3418
  %v3591 = vpack.c.b16 %v3423, %v3419
  %v3592 = vpack.c.b16 %v3428, %v3424
  %v3593 = vpack.c.b16 %v3429, %v3425
  %v3594 = vpack.c.b16 %v3430, %v3426
  %v3595 = vpack.c.b16 %v3431, %v3427
  %v3596 = vpack.c.b16 %v3436, %v3432
  %v3597 = vpack.c.b16 %v3437, %v3433
  %v3598 = vpack.c.b16 %v3438, %v3434
  %v3599 = vpack.c.b16 %v3439, %v3435
  %v3600 = vpack.c.b16 %v3444, %v3440
  %v3601 = vpack.c.b16 %v3445, %v3441
  %v3602 = vpack.c.b16 %v3446, %v3442
  %v3603 = vpack.c.b16 %v3447, %v3443
  %v3604 = vpack.c.b16 %v3452, %v3448
  %v3605 = vpack.c.b16 %v3453, %v3449
  %v3606 = vpack.c.b16 %v3454, %v3450
  %v3607 = vpack.c.b16 %v3455, %v3451
  %v3608 = vpack.c.b16 %v3460, %v3456
  %v3609 = vpack.c.b16 %v3461, %v3457
  %v3610 = vpack.c.b16 %v3462, %v3458
  %v3611 = vpack.c.b16 %v3463, %v3459
  %v3612 = vpack.c.b16 %v3468, %v3464
  %v3613 = vpack.c.b16 %v3469, %v3465
  %v3614 = vpack.c.b16 %v3470, %v3466
  %v3615 = vpack.c.b16 %v3471, %v3467
  %v3616 = vpack.c.b16 %v3476, %v3472
  %v3617 = vpack.c.b16 %v3477, %v3473
  %v3618 = vpack.c.b16 %v3478, %v3474
  %v3619 = vpack.c.b16 %v3479, %v3475
  %v3620 = vpack.c.b16 %v3484, %v3480
  %v3621 = vpack.c.b16 %v3485, %v3481
  %v3622 = vpack.c.b16 %v3486, %v3482
  %v3623 = vpack.c.b16 %v3487, %v3483
  %v3624 = vpack.c.b16 %v3492, %v3488
  %v3625 = vpack.c.b16 %v3493, %v3489
  %v3626 = vpack.c.b16 %v3494, %v3490
  %v3627 = vpack.c.b16 %v3495, %v3491
  %v3628 = vpack.c.b16 %v3500, %v3496
  %v3629 = vpack.c.b16 %v3501, %v3497
  %v3630 = vpack.c.b16 %v3502, %v3498
  %v3631 = vpack.c.b16 %v3503, %v3499
  %3760 = vmatprep.subr.bf16.mxu0 %v3505
  %3761 = vmatpush1.bf16.msra.mxu0 %v3504
  %3762 = vmatprep.subr.bf16.mxu0 %v3509
  %3763 = vmatpush1.bf16.msra.mxu0 %v3508
  %3764 = vmatprep.subr.bf16.mxu0 %v3513
  %3765 = vmatpush1.bf16.msra.mxu0 %v3512
  %3766 = vmatprep.subr.bf16.mxu0 %v3517
  %3767 = vmatpush1.bf16.msra.mxu0 %v3516
  %3768 = vmatprep.subr.bf16.mxu0 %v3521
  %3769 = vmatpush1.bf16.msra.mxu0 %v3520
  %3770 = vmatprep.subr.bf16.mxu0 %v3525
  %3771 = vmatpush1.bf16.msra.mxu0 %v3524
  %3772 = vmatprep.subr.bf16.mxu0 %v3529
  %3773 = vmatpush1.bf16.msra.mxu0 %v3528
  %3774 = vmatprep.subr.bf16.mxu0 %v3533
  %3775 = vmatpush1.bf16.msra.mxu0 %v3532
  %3776 = vmatprep.subr.bf16.mxu0 %v3537
  %3777 = vmatpush1.bf16.msra.mxu0 %v3536
  %3778 = vmatprep.subr.bf16.mxu0 %v3541
  %3779 = vmatpush1.bf16.msra.mxu0 %v3540
  %3780 = vmatprep.subr.bf16.mxu0 %v3545
  %3781 = vmatpush1.bf16.msra.mxu0 %v3544
  %3782 = vmatprep.subr.bf16.mxu0 %v3549
  %3783 = vmatpush1.bf16.msra.mxu0 %v3548
  %3784 = vmatprep.subr.bf16.mxu0 %v3553
  %3785 = vmatpush1.bf16.msra.mxu0 %v3552
  %3786 = vmatprep.subr.bf16.mxu0 %v3557
  %3787 = vmatpush1.bf16.msra.mxu0 %v3556
  %3788 = vmatprep.subr.bf16.mxu0 %v3561
  %3789 = vmatpush1.bf16.msra.mxu0 %v3560
  %3790 = vmatprep.subr.bf16.mxu0 %v3565
  %3791 = vmatpush1.bf16.msra.mxu0 %v3564
  %3792 = vmatprep.mubr.bf16.mxu0 %v2988
  %3793 = vmatmul.mubr.bf16.gmra.mrb[0].mxu0 %v2987
  %v3794 = vpop.f32.mrb[0].mxu0
  %v3795 = vadd.f32 0.0, %v3794
  %v3796 = vpop.f32.mrb[0].mxu0
  %v3797 = vadd.f32 0.0, %v3796
  %v3798 = vpop.f32.mrb[0].mxu0
  %v3799 = vpop.f32.mrb[0].mxu0
  %3800 = vdwg.mxu0
  %3801 = vmatprep.subr.bf16.mxu0 %v3569
  %3802 = vmatpush1.bf16.msra.mxu0 %v3568
  %3803 = vmatprep.subr.bf16.mxu0 %v3573
  %3804 = vmatpush1.bf16.msra.mxu0 %v3572
  %3805 = vmatprep.subr.bf16.mxu0 %v3577
  %3806 = vmatpush1.bf16.msra.mxu0 %v3576
  %3807 = vmatprep.subr.bf16.mxu0 %v3581
  %3808 = vmatpush1.bf16.msra.mxu0 %v3580
  %3809 = vmatprep.subr.bf16.mxu0 %v3585
  %3810 = vmatpush1.bf16.msra.mxu0 %v3584
  %3811 = vmatprep.subr.bf16.mxu0 %v3589
  %3812 = vmatpush1.bf16.msra.mxu0 %v3588
  %3813 = vmatprep.subr.bf16.mxu0 %v3593
  %3814 = vmatpush1.bf16.msra.mxu0 %v3592
  %3815 = vmatprep.subr.bf16.mxu0 %v3597
  %3816 = vmatpush1.bf16.msra.mxu0 %v3596
  %3817 = vmatprep.subr.bf16.mxu0 %v3601
  %3818 = vmatpush1.bf16.msra.mxu0 %v3600
  %3819 = vmatprep.subr.bf16.mxu0 %v3605
  %3820 = vmatpush1.bf16.msra.mxu0 %v3604
  %3821 = vmatprep.subr.bf16.mxu0 %v3609
  %3822 = vmatpush1.bf16.msra.mxu0 %v3608
  %3823 = vmatprep.subr.bf16.mxu0 %v3613
  %3824 = vmatpush1.bf16.msra.mxu0 %v3612
  %3825 = vmatprep.subr.bf16.mxu0 %v3617
  %3826 = vmatpush1.bf16.msra.mxu0 %v3616
  %3827 = vmatprep.subr.bf16.mxu0 %v3621
  %3828 = vmatpush1.bf16.msra.mxu0 %v3620
  %3829 = vmatprep.subr.bf16.mxu0 %v3625
  %3830 = vmatpush1.bf16.msra.mxu0 %v3624
  %3831 = vmatprep.subr.bf16.mxu0 %v3629
  %3832 = vmatpush1.bf16.msra.mxu0 %v3628
  %3833 = vmatprep.mubr.bf16.mxu0 %v2990
  %3834 = vmatmul.mubr.bf16.gmra.mrb[0].mxu0 %v2989
  %v3835 = vpop.f32.mrb[0].mxu0
  %v3836 = vadd.f32 %v3795, %v3835
  %v3837 = vpop.f32.mrb[0].mxu0
  %v3838 = vadd.f32 %v3797, %v3837
  %v3839 = vpop.f32.mrb[0].mxu0
  %v3840 = vpop.f32.mrb[0].mxu0
  %3841 = vdwg.mxu0
  %3842 = vmatprep.subr.bf16.mxu0 %v3507
  %3843 = vmatpush1.bf16.msra.mxu0 %v3506
  %3844 = vmatprep.subr.bf16.mxu0 %v3511
  %3845 = vmatpush1.bf16.msra.mxu0 %v3510
  %3846 = vmatprep.subr.bf16.mxu0 %v3515
  %3847 = vmatpush1.bf16.msra.mxu0 %v3514
  %3848 = vmatprep.subr.bf16.mxu0 %v3519
  %3849 = vmatpush1.bf16.msra.mxu0 %v3518
  %3850 = vmatprep.subr.bf16.mxu0 %v3523
  %3851 = vmatpush1.bf16.msra.mxu0 %v3522
  %3852 = vmatprep.subr.bf16.mxu0 %v3527
  %3853 = vmatpush1.bf16.msra.mxu0 %v3526
  %3854 = vmatprep.subr.bf16.mxu0 %v3531
  %3855 = vmatpush1.bf16.msra.mxu0 %v3530
  %3856 = vmatprep.subr.bf16.mxu0 %v3535
  %3857 = vmatpush1.bf16.msra.mxu0 %v3534
  %3858 = vmatprep.subr.bf16.mxu0 %v3539
  %3859 = vmatpush1.bf16.msra.mxu0 %v3538
  %3860 = vmatprep.subr.bf16.mxu0 %v3543
  %3861 = vmatpush1.bf16.msra.mxu0 %v3542
  %3862 = vmatprep.subr.bf16.mxu0 %v3547
  %3863 = vmatpush1.bf16.msra.mxu0 %v3546
  %3864 = vmatprep.subr.bf16.mxu0 %v3551
  %3865 = vmatpush1.bf16.msra.mxu0 %v3550
  %3866 = vmatprep.subr.bf16.mxu0 %v3555
  %3867 = vmatpush1.bf16.msra.mxu0 %v3554
  %3868 = vmatprep.subr.bf16.mxu0 %v3559
  %3869 = vmatpush1.bf16.msra.mxu0 %v3558
  %3870 = vmatprep.subr.bf16.mxu0 %v3563
  %3871 = vmatpush1.bf16.msra.mxu0 %v3562
  %3872 = vmatprep.subr.bf16.mxu0 %v3567
  %3873 = vmatpush1.bf16.msra.mxu0 %v3566
  %3874 = vmatprep.mubr.bf16.mxu0 %v2988
  %3875 = vmatmul.mubr.bf16.gmra.mrb[0].mxu0 %v2987
  %v3876 = vpop.f32.mrb[0].mxu0
  %v3877 = vadd.f32 0.0, %v3876
  %v3878 = vpop.f32.mrb[0].mxu0
  %v3879 = vadd.f32 0.0, %v3878
  %v3880 = vpop.f32.mrb[0].mxu0
  %v3881 = vpop.f32.mrb[0].mxu0
  %3882 = vdwg.mxu0
  %3883 = vmatprep.subr.bf16.mxu0 %v3571
  %3884 = vmatpush1.bf16.msra.mxu0 %v3570
  %3885 = vmatprep.subr.bf16.mxu0 %v3575
  %3886 = vmatpush1.bf16.msra.mxu0 %v3574
  %3887 = vmatprep.subr.bf16.mxu0 %v3579
  %3888 = vmatpush1.bf16.msra.mxu0 %v3578
  %3889 = vmatprep.subr.bf16.mxu0 %v3583
  %3890 = vmatpush1.bf16.msra.mxu0 %v3582
  %3891 = vmatprep.subr.bf16.mxu0 %v3587
  %3892 = vmatpush1.bf16.msra.mxu0 %v3586
  %3893 = vmatprep.subr.bf16.mxu0 %v3591
  %3894 = vmatpush1.bf16.msra.mxu0 %v3590
  %3895 = vmatprep.subr.bf16.mxu0 %v3595
  %3896 = vmatpush1.bf16.msra.mxu0 %v3594
  %3897 = vmatprep.subr.bf16.mxu0 %v3599
  %3898 = vmatpush1.bf16.msra.mxu0 %v3598
  %3899 = vmatprep.subr.bf16.mxu0 %v3603
  %3900 = vmatpush1.bf16.msra.mxu0 %v3602
  %3901 = vmatprep.subr.bf16.mxu0 %v3607
  %3902 = vmatpush1.bf16.msra.mxu0 %v3606
  %3903 = vmatprep.subr.bf16.mxu0 %v3611
  %3904 = vmatpush1.bf16.msra.mxu0 %v3610
  %3905 = vmatprep.subr.bf16.mxu0 %v3615
  %3906 = vmatpush1.bf16.msra.mxu0 %v3614
  %3907 = vmatprep.subr.bf16.mxu0 %v3619
  %3908 = vmatpush1.bf16.msra.mxu0 %v3618
  %3909 = vmatprep.subr.bf16.mxu0 %v3623
  %3910 = vmatpush1.bf16.msra.mxu0 %v3622
  %3911 = vmatprep.subr.bf16.mxu0 %v3627
  %3912 = vmatpush1.bf16.msra.mxu0 %v3626
  %3913 = vmatprep.subr.bf16.mxu0 %v3631
  %3914 = vmatpush1.bf16.msra.mxu0 %v3630
  %3915 = vmatprep.mubr.bf16.mxu0 %v2990
  %3916 = vmatmul.mubr.bf16.gmra.mrb[0].mxu0 %v2989
  %v3917 = vpop.f32.mrb[0].mxu0
  %v3918 = vadd.f32 %v3877, %v3917
  %v3919 = vpop.f32.mrb[0].mxu0
  %v3920 = vadd.f32 %v3879, %v3919
  %v3921 = vpop.f32.mrb[0].mxu0
  %v3922 = vpop.f32.mrb[0].mxu0
  %3923 = vdwg.mxu0
  %v3928 = vcombine.low %v3836, %v3838
  %v3929 = vcombine.low %v3918, %v3920
  %v3931 = vunpack.c.l.s4 1983009808
  %v3932 = vunpack.c.0.s8 %v3931
  %v3933 = vlaneseq
  %v3934 = vshrl.u32 %v3933, 7
  %v3935 = vsub.s32 %v3932, %v3934
  %v3936 = vrot.slane %v3928, %v3935
  %v3938 = vunpack.c.l.s4 1983009808
  %v3939 = vunpack.c.0.s8 %v3938
  %v3940 = vlaneseq
  %v3941 = vshrl.u32 %v3940, 7
  %v3942 = vsub.s32 %v3939, %v3941
  %v3943 = vrot.slane %v3929, %v3942
  %v3944 = vcombine.low %v3936, %v3943
  %v3946 = vadd.f32 %v2000, %v3944
  %s3947 = scalar_lea.vmem %s4, 4
  %v3948 = vld [vmem:[%s3947] sm:$0xf]
  %v3950 = vlaneseq
  %v3951 = vshrl.u32 %v3950, 7
  %v3952 = vsub.s32 0, %v3951
  %v3953 = vrot.slane %v3948, %v3952
  %v3954 = vlaneseq
  %v3955 = vshrl.u32 %v3954, 7
  %v3956 = vsub.s32 1, %v3955
  %v3957 = vrot.slane %v3948, %v3956
  %v3958 = vlaneseq
  %v3959 = vshrl.u32 %v3958, 7
  %v3960 = vsub.s32 2, %v3959
  %v3961 = vrot.slane %v3948, %v3960
  %v3962 = vlaneseq
  %v3963 = vshrl.u32 %v3962, 7
  %v3964 = vsub.s32 3, %v3963
  %v3965 = vrot.slane %v3948, %v3964
  %v3966 = vcombine.low %v3953, %v3957
  %v3967 = vcombine.low %v3961, %v3965
  %v3969 = vunpack.c.l.s4 1983009808
  %v3970 = vunpack.c.0.s8 %v3969
  %v3971 = vlaneseq
  %v3972 = vshrl.u32 %v3971, 7
  %v3973 = vsub.s32 %v3970, %v3972
  %v3974 = vrot.slane %v3966, %v3973
  %v3976 = vunpack.c.l.s4 1983009808
  %v3977 = vunpack.c.0.s8 %v3976
  %v3978 = vlaneseq
  %v3979 = vshrl.u32 %v3978, 7
  %v3980 = vsub.s32 %v3977, %v3979
  %v3981 = vrot.slane %v3967, %v3980
  %v3982 = vcombine.low %v3974, %v3981
  %v3984 = vadd.f32 %v3946, %v3982
  %3985 = vst [vmem:[%s5] sm:$0xff] %v3984
  // Predicated region
  $region22: #{generator_forward.10} parent=0 // pred_check
    _
  $region23: #{generator_forward.10} parent=0 // pred_check_branch
    %3987 = sbr.rel (0) target = $region25
  $region24: #{generator_forward.10} parent=0 // pred_region
    _
  $region25: #{generator_forward.10} parent=0 // pred_fallthru
    _
  // Predicated region
  $region26: #{generator_forward.10} parent=0 // pred_check
    _
  $region27: #{generator_forward.10} parent=0 // pred_check_branch
    %3989 = sbr.rel (0) target = $region29
  $region28: #{generator_forward.10} parent=0 // pred_region
    _
  $region29: #{generator_forward.10} parent=0 // pred_fallthru
    _

// kernel: generator_forward.13
$region0: #{generator_forward.13}
  #allocation0 [shape = 'u32[]', space=smem, size = 0x4, offset = 0x4, fixed_abs, tag = 'smem constant byte address 0x4 - core index']
  #allocation1 [shape = 'u32[144,128]{1,0:T(1,128)}', space=vmem, size = 0x12000, scoped, tag = 'internal scratch']
  %s0 = inlined_call_operand.vmem [shape: bf16[128,72], index: 0, kind: input, shape index: {}]
  %s1 = inlined_call_operand.vmem [shape: bf16[72,512], index: 1, kind: input, shape index: {}]
  %s2 = inlined_call_operand.vmem [shape: f32[1,512], index: 2, kind: input, shape index: {}]
  %s3 = inlined_call_operand.vmem [shape: f32[128,512], index: 3, kind: output, shape index: {}]
  %s4 = sld [smem:[#allocation0]]
  $region22: #{generator_forward.13} parent=0
    _
  %s6 = ssub.s32 1, %s4
  %s7 = scalar_select 0, %s6, %s4
  // Predicated region
  $region2: #{generator_forward.13} parent=0 // pred_check
    _
  $region3: #{generator_forward.13} parent=0 // pred_check_branch
    %9 = sbr.rel (0) target = $region5
  $region4: #{generator_forward.13} parent=0 // pred_region
    _
  $region5: #{generator_forward.13} parent=0 // pred_fallthru
    _
  // Predicated region
  $region6: #{generator_forward.13} parent=0 // pred_check
    _
  $region7: #{generator_forward.13} parent=0 // pred_check_branch
    %11 = sbr.rel (0) target = $region9
  $region8: #{generator_forward.13} parent=0 // pred_region
    _
  $region9: #{generator_forward.13} parent=0 // pred_fallthru
    _
  // Predicated region
  $region10: #{generator_forward.13} parent=0 // pred_check
    _
  $region11: #{generator_forward.13} parent=0 // pred_check_branch
    %13 = sbr.rel (0) target = $region13
  $region12: #{generator_forward.13} parent=0 // pred_region
    _
  $region13: #{generator_forward.13} parent=0 // pred_fallthru
    _
  %v15 = vld [vmem:[%s0] sm:$0xf]
  %v16 = vld [vmem:[%s0 + $0x4] sm:$0xf]
  %v17 = vld [vmem:[%s0 + $0x8] sm:$0xf]
  %v18 = vld [vmem:[%s0 + $0xc] sm:$0xf]
  %v19 = vld [vmem:[%s0 + $0x10] sm:$0xf]
  %v20 = vld [vmem:[%s0 + $0x14] sm:$0xf]
  %v21 = vld [vmem:[%s0 + $0x18] sm:$0xf]
  %v22 = vld [vmem:[%s0 + $0x1c] sm:$0xf]
  %v23 = vld [vmem:[%s0 + $0x20] sm:$0xf]
  %v24 = vld [vmem:[%s0 + $0x24] sm:$0xf]
  %v25 = vld [vmem:[%s0 + $0x28] sm:$0xf]
  %v26 = vld [vmem:[%s0 + $0x2c] sm:$0xf]
  %v27 = vld [vmem:[%s0 + $0x30] sm:$0xf]
  %v28 = vld [vmem:[%s0 + $0x34] sm:$0xf]
  %v29 = vld [vmem:[%s0 + $0x38] sm:$0xf]
  %v30 = vld [vmem:[%s0 + $0x3c] sm:$0xf]
  %v31 = vld [vmem:[%s1] sm:$0xff]
  %v32 = vld [vmem:[%s1 + $0x8] sm:$0xff]
  %v33 = vld [vmem:[%s1 + $0x10] sm:$0xff]
  %v34 = vld [vmem:[%s1 + $0x18] sm:$0xff]
  %v35 = vld [vmem:[%s1 + $0x20] sm:$0xff]
  %v36 = vld [vmem:[%s1 + $0x28] sm:$0xff]
  %v37 = vld [vmem:[%s1 + $0x30] sm:$0xff]
  %v38 = vld [vmem:[%s1 + $0x38] sm:$0xff]
  %v39 = vld [vmem:[%s1 + $0x40] sm:$0xff]
  %v40 = vld [vmem:[%s1 + $0x48] sm:$0xff]
  %v41 = vld [vmem:[%s1 + $0x50] sm:$0xff]
  %v42 = vld [vmem:[%s1 + $0x58] sm:$0xff]
  %v43 = vld [vmem:[%s1 + $0x60] sm:$0xff]
  %v44 = vld [vmem:[%s1 + $0x68] sm:$0xff]
  %v45 = vld [vmem:[%s1 + $0x70] sm:$0xff]
  %v46 = vld [vmem:[%s1 + $0x78] sm:$0xff]
  %v47 = vld [vmem:[%s1 + $0x80] sm:$0xff]
  %v48 = vld [vmem:[%s1 + $0x88] sm:$0xff]
  %v49 = vld [vmem:[%s2] sm:$0xf]
  %v51 = vlaneseq
  %v52 = vshrl.u32 %v51, 7
  %v53 = vsub.s32 0, %v52
  %v54 = vrot.slane %v49, %v53
  %v55 = vlaneseq
  %v56 = vshrl.u32 %v55, 7
  %v57 = vsub.s32 1, %v56
  %v58 = vrot.slane %v49, %v57
  %v59 = vlaneseq
  %v60 = vshrl.u32 %v59, 7
  %v61 = vsub.s32 2, %v60
  %v62 = vrot.slane %v49, %v61
  %v63 = vlaneseq
  %v64 = vshrl.u32 %v63, 7
  %v65 = vsub.s32 3, %v64
  %v66 = vrot.slane %v49, %v65
  %v87 = vunpack.c.l.b16 %v15
  %v88 = vunpack.c.l.b16 %v16
  %v89 = vunpack.c.l.b16 %v17
  %v90 = vunpack.c.l.b16 %v18
  %v91 = vunpack.c.l.b16 %v19
  %v92 = vunpack.c.l.b16 %v20
  %v93 = vunpack.c.l.b16 %v21
  %v94 = vunpack.c.l.b16 %v22
  %v95 = vunpack.c.l.b16 %v23
  %v96 = vunpack.c.l.b16 %v24
  %v97 = vunpack.c.l.b16 %v25
  %v98 = vunpack.c.l.b16 %v26
  %v99 = vunpack.c.l.b16 %v27
  %v100 = vunpack.c.l.b16 %v28
  %v101 = vunpack.c.l.b16 %v29
  %v102 = vunpack.c.l.b16 %v30
  %v103 = vpack.c.b16 %v88, %v87
  %v104 = vpack.c.b16 %v90, %v89
  %v105 = vpack.c.b16 %v92, %v91
  %v106 = vpack.c.b16 %v94, %v93
  %v107 = vpack.c.b16 %v96, %v95
  %v108 = vpack.c.b16 %v98, %v97
  %v109 = vpack.c.b16 %v100, %v99
  %v110 = vpack.c.b16 %v102, %v101
  %v129 = vunpack.c.l.b16 %v31
  %v130 = vunpack.c.h.b16 %v31
  %v131 = vunpack.c.l.b16 %v32
  %v132 = vunpack.c.h.b16 %v32
  %v133 = vunpack.c.l.b16 %v33
  %v134 = vunpack.c.h.b16 %v33
  %v135 = vunpack.c.l.b16 %v34
  %v136 = vunpack.c.h.b16 %v34
  %v137 = vunpack.c.l.b16 %v35
  %v138 = vunpack.c.h.b16 %v35
  %v139 = vunpack.c.l.b16 %v36
  %v140 = vunpack.c.h.b16 %v36
  %v141 = vunpack.c.l.b16 %v37
  %v142 = vunpack.c.h.b16 %v37
  %v143 = vunpack.c.l.b16 %v38
  %v144 = vunpack.c.h.b16 %v38
  %v145 = vunpack.c.l.b16 %v39
  %v146 = vunpack.c.h.b16 %v39
  %v147 = vunpack.c.l.b16 %v40
  %v148 = vunpack.c.h.b16 %v40
  %v149 = vunpack.c.l.b16 %v41
  %v150 = vunpack.c.h.b16 %v41
  %v151 = vunpack.c.l.b16 %v42
  %v152 = vunpack.c.h.b16 %v42
  %v153 = vunpack.c.l.b16 %v43
  %v154 = vunpack.c.h.b16 %v43
  %v155 = vunpack.c.l.b16 %v44
  %v156 = vunpack.c.h.b16 %v44
  %v157 = vunpack.c.l.b16 %v45
  %v158 = vunpack.c.h.b16 %v45
  %v159 = vunpack.c.l.b16 %v46
  %v160 = vunpack.c.h.b16 %v46
  %v161 = vunpack.c.l.b16 %v47
  %v162 = vunpack.c.h.b16 %v47
  %v163 = vunpack.c.l.b16 %v48
  %v164 = vunpack.c.h.b16 %v48
  %v165 = vpack.c.b16 %v133, %v129
  %v166 = vpack.c.b16 %v134, %v130
  %v167 = vpack.c.b16 %v135, %v131
  %v168 = vpack.c.b16 %v136, %v132
  %v169 = vpack.c.b16 %v141, %v137
  %v170 = vpack.c.b16 %v142, %v138
  %v171 = vpack.c.b16 %v143, %v139
  %v172 = vpack.c.b16 %v144, %v140
  %v173 = vpack.c.b16 %v149, %v145
  %v174 = vpack.c.b16 %v150, %v146
  %v175 = vpack.c.b16 %v151, %v147
  %v176 = vpack.c.b16 %v152, %v148
  %v177 = vpack.c.b16 %v157, %v153
  %v178 = vpack.c.b16 %v158, %v154
  %v179 = vpack.c.b16 %v159, %v155
  %v180 = vpack.c.b16 %v160, %v156
  %v181 = vpack.c.b16 %v161, %v161
  %v182 = vpack.c.b16 %v162, %v162
  %v183 = vpack.c.b16 %v163, %v163
  %v184 = vpack.c.b16 %v164, %v164
  %vm201 = vcmask 588800
  %v203 = vsel %vm201, %v103, 0
  %v206 = vsel %vm201, %v104, 0
  %v209 = vsel %vm201, %v105, 0
  %v212 = vsel %vm201, %v106, 0
  %v215 = vsel %vm201, %v107, 0
  %v218 = vsel %vm201, %v108, 0
  %v221 = vsel %vm201, %v109, 0
  %v224 = vsel %vm201, %v110, 0
  %vm226 = vcmask 1043456
  %v228 = vsel %vm226, %v181, 0
  %v231 = vsel %vm226, %v182, 0
  %v234 = vsel %vm226, %v183, 0
  %v237 = vsel %vm226, %v184, 0
  %239 = vmatprep.subr.bf16.mxu0 %v166
  %240 = vmatpush1.bf16.msra.mxu0 %v165
  %241 = vmatprep.subr.bf16.mxu0 %v170
  %242 = vmatpush1.bf16.msra.mxu0 %v169
  %243 = vmatprep.subr.bf16.mxu0 %v174
  %244 = vmatpush1.bf16.msra.mxu0 %v173
  %245 = vmatprep.subr.bf16.mxu0 %v178
  %246 = vmatpush1.bf16.msra.mxu0 %v177
  %247 = vmatprep.subr.bf16.mxu0 %v231
  %248 = vmatpush1.bf16.msra.mxu0 %v228
  %249 = vmatprep.subr.bf16.mxu0 0
  %250 = vmatpush1.bf16.msra.mxu0 0
  %251 = vmatprep.subr.bf16.mxu0 0
  %252 = vmatpush1.bf16.msra.mxu0 0
  %253 = vmatprep.subr.bf16.mxu0 0
  %254 = vmatpush1.bf16.msra.mxu0 0
  %255 = vmatprep.subr.bf16.mxu0 0
  %256 = vmatpush1.bf16.msra.mxu0 0
  %257 = vmatprep.subr.bf16.mxu0 0
  %258 = vmatpush1.bf16.msra.mxu0 0
  %259 = vmatprep.subr.bf16.mxu0 0
  %260 = vmatpush1.bf16.msra.mxu0 0
  %261 = vmatprep.subr.bf16.mxu0 0
  %262 = vmatpush1.bf16.msra.mxu0 0
  %263 = vmatprep.subr.bf16.mxu0 0
  %264 = vmatpush1.bf16.msra.mxu0 0
  %265 = vmatprep.subr.bf16.mxu0 0
  %266 = vmatpush1.bf16.msra.mxu0 0
  %267 = vmatprep.subr.bf16.mxu0 0
  %268 = vmatpush1.bf16.msra.mxu0 0
  %269 = vmatprep.subr.bf16.mxu0 0
  %270 = vmatpush1.bf16.msra.mxu0 0
  %271 = vmatprep.mubr.bf16.mxu0 0
  %272 = vmatmul.mubr.bf16.gmra.mrb[0].mxu0 %v203
  %v273 = vpop.f32.mrb[0].mxu0
  %v274 = vadd.f32 %v54, %v273
  %v275 = vpop.f32.mrb[0].mxu0
  %v276 = vadd.f32 %v58, %v275
  %v277 = vpop.f32.mrb[0].mxu0
  %v278 = vadd.f32 %v54, %v277
  %v279 = vpop.f32.mrb[0].mxu0
  %v280 = vadd.f32 %v58, %v279
  %281 = vmatprep.mubr.bf16.mxu0 0
  %282 = vmatmul.mubr.bf16.gmra.mrb[0].mxu0 %v206
  %v283 = vpop.f32.mrb[0].mxu0
  %v284 = vadd.f32 %v54, %v283
  %v285 = vpop.f32.mrb[0].mxu0
  %v286 = vadd.f32 %v58, %v285
  %v287 = vpop.f32.mrb[0].mxu0
  %v288 = vadd.f32 %v54, %v287
  %v289 = vpop.f32.mrb[0].mxu0
  %v290 = vadd.f32 %v58, %v289
  %291 = vmatprep.mubr.bf16.mxu0 0
  %292 = vmatmul.mubr.bf16.gmra.mrb[0].mxu0 %v209
  %v293 = vpop.f32.mrb[0].mxu0
  %v294 = vadd.f32 %v54, %v293
  %v295 = vpop.f32.mrb[0].mxu0
  %v296 = vadd.f32 %v58, %v295
  %v297 = vpop.f32.mrb[0].mxu0
  %v298 = vadd.f32 %v54, %v297
  %v299 = vpop.f32.mrb[0].mxu0
  %v300 = vadd.f32 %v58, %v299
  %301 = vmatprep.mubr.bf16.mxu0 0
  %302 = vmatmul.mubr.bf16.gmra.mrb[0].mxu0 %v212
  %v303 = vpop.f32.mrb[0].mxu0
  %v304 = vadd.f32 %v54, %v303
  %v305 = vpop.f32.mrb[0].mxu0
  %v306 = vadd.f32 %v58, %v305
  %v307 = vpop.f32.mrb[0].mxu0
  %v308 = vadd.f32 %v54, %v307
  %v309 = vpop.f32.mrb[0].mxu0
  %v310 = vadd.f32 %v58, %v309
  %311 = vmatprep.mubr.bf16.mxu0 0
  %312 = vmatmul.mubr.bf16.gmra.mrb[0].mxu0 %v215
  %v313 = vpop.f32.mrb[0].mxu0
  %v314 = vadd.f32 %v54, %v313
  %v315 = vpop.f32.mrb[0].mxu0
  %v316 = vadd.f32 %v58, %v315
  %v317 = vpop.f32.mrb[0].mxu0
  %v318 = vadd.f32 %v54, %v317
  %v319 = vpop.f32.mrb[0].mxu0
  %v320 = vadd.f32 %v58, %v319
  %321 = vmatprep.mubr.bf16.mxu0 0
  %322 = vmatmul.mubr.bf16.gmra.mrb[0].mxu0 %v218
  %v323 = vpop.f32.mrb[0].mxu0
  %v324 = vadd.f32 %v54, %v323
  %v325 = vpop.f32.mrb[0].mxu0
  %v326 = vadd.f32 %v58, %v325
  %v327 = vpop.f32.mrb[0].mxu0
  %v328 = vadd.f32 %v54, %v327
  %v329 = vpop.f32.mrb[0].mxu0
  %v330 = vadd.f32 %v58, %v329
  %331 = vmatprep.mubr.bf16.mxu0 0
  %332 = vmatmul.mubr.bf16.gmra.mrb[0].mxu0 %v221
  %v333 = vpop.f32.mrb[0].mxu0
  %v334 = vadd.f32 %v54, %v333
  %v335 = vpop.f32.mrb[0].mxu0
  %v336 = vadd.f32 %v58, %v335
  %v337 = vpop.f32.mrb[0].mxu0
  %v338 = vadd.f32 %v54, %v337
  %v339 = vpop.f32.mrb[0].mxu0
  %v340 = vadd.f32 %v58, %v339
  %341 = vmatprep.mubr.bf16.mxu0 0
  %342 = vmatmul.mubr.bf16.gmra.mrb[0].mxu0 %v224
  %v343 = vpop.f32.mrb[0].mxu0
  %v344 = vadd.f32 %v54, %v343
  %v345 = vpop.f32.mrb[0].mxu0
  %v346 = vadd.f32 %v58, %v345
  %v347 = vpop.f32.mrb[0].mxu0
  %v348 = vadd.f32 %v54, %v347
  %v349 = vpop.f32.mrb[0].mxu0
  %v350 = vadd.f32 %v58, %v349
  %351 = vdwg.mxu0
  %352 = vmatprep.subr.bf16.mxu0 %v168
  %353 = vmatpush1.bf16.msra.mxu0 %v167
  %354 = vmatprep.subr.bf16.mxu0 %v172
  %355 = vmatpush1.bf16.msra.mxu0 %v171
  %356 = vmatprep.subr.bf16.mxu0 %v176
  %357 = vmatpush1.bf16.msra.mxu0 %v175
  %358 = vmatprep.subr.bf16.mxu0 %v180
  %359 = vmatpush1.bf16.msra.mxu0 %v179
  %360 = vmatprep.subr.bf16.mxu0 %v237
  %361 = vmatpush1.bf16.msra.mxu0 %v234
  %362 = vmatprep.subr.bf16.mxu0 0
  %363 = vmatpush1.bf16.msra.mxu0 0
  %364 = vmatprep.subr.bf16.mxu0 0
  %365 = vmatpush1.bf16.msra.mxu0 0
  %366 = vmatprep.subr.bf16.mxu0 0
  %367 = vmatpush1.bf16.msra.mxu0 0
  %368 = vmatprep.subr.bf16.mxu0 0
  %369 = vmatpush1.bf16.msra.mxu0 0
  %370 = vmatprep.subr.bf16.mxu0 0
  %371 = vmatpush1.bf16.msra.mxu0 0
  %372 = vmatprep.subr.bf16.mxu0 0
  %373 = vmatpush1.bf16.msra.mxu0 0
  %374 = vmatprep.subr.bf16.mxu0 0
  %375 = vmatpush1.bf16.msra.mxu0 0
  %376 = vmatprep.subr.bf16.mxu0 0
  %377 = vmatpush1.bf16.msra.mxu0 0
  %378 = vmatprep.subr.bf16.mxu0 0
  %379 = vmatpush1.bf16.msra.mxu0 0
  %380 = vmatprep.subr.bf16.mxu0 0
  %381 = vmatpush1.bf16.msra.mxu0 0
  %382 = vmatprep.subr.bf16.mxu0 0
  %383 = vmatpush1.bf16.msra.mxu0 0
  %384 = vmatprep.mubr.bf16.mxu0 0
  %385 = vmatmul.mubr.bf16.gmra.mrb[0].mxu0 %v203
  %v386 = vpop.f32.mrb[0].mxu0
  %v387 = vadd.f32 %v62, %v386
  %v388 = vpop.f32.mrb[0].mxu0
  %v389 = vadd.f32 %v66, %v388
  %v390 = vpop.f32.mrb[0].mxu0
  %v391 = vadd.f32 %v62, %v390
  %v392 = vpop.f32.mrb[0].mxu0
  %v393 = vadd.f32 %v66, %v392
  %394 = vmatprep.mubr.bf16.mxu0 0
  %395 = vmatmul.mubr.bf16.gmra.mrb[0].mxu0 %v206
  %v396 = vpop.f32.mrb[0].mxu0
  %v397 = vadd.f32 %v62, %v396
  %v398 = vpop.f32.mrb[0].mxu0
  %v399 = vadd.f32 %v66, %v398
  %v400 = vpop.f32.mrb[0].mxu0
  %v401 = vadd.f32 %v62, %v400
  %v402 = vpop.f32.mrb[0].mxu0
  %v403 = vadd.f32 %v66, %v402
  %404 = vmatprep.mubr.bf16.mxu0 0
  %405 = vmatmul.mubr.bf16.gmra.mrb[0].mxu0 %v209
  %v406 = vpop.f32.mrb[0].mxu0
  %v407 = vadd.f32 %v62, %v406
  %v408 = vpop.f32.mrb[0].mxu0
  %v409 = vadd.f32 %v66, %v408
  %v410 = vpop.f32.mrb[0].mxu0
  %v411 = vadd.f32 %v62, %v410
  %v412 = vpop.f32.mrb[0].mxu0
  %v413 = vadd.f32 %v66, %v412
  %414 = vmatprep.mubr.bf16.mxu0 0
  %415 = vmatmul.mubr.bf16.gmra.mrb[0].mxu0 %v212
  %v416 = vpop.f32.mrb[0].mxu0
  %v417 = vadd.f32 %v62, %v416
  %v418 = vpop.f32.mrb[0].mxu0
  %v419 = vadd.f32 %v66, %v418
  %v420 = vpop.f32.mrb[0].mxu0
  %v421 = vadd.f32 %v62, %v420
  %v422 = vpop.f32.mrb[0].mxu0
  %v423 = vadd.f32 %v66, %v422
  %424 = vmatprep.mubr.bf16.mxu0 0
  %425 = vmatmul.mubr.bf16.gmra.mrb[0].mxu0 %v215
  %v426 = vpop.f32.mrb[0].mxu0
  %v427 = vadd.f32 %v62, %v426
  %v428 = vpop.f32.mrb[0].mxu0
  %v429 = vadd.f32 %v66, %v428
  %v430 = vpop.f32.mrb[0].mxu0
  %v431 = vadd.f32 %v62, %v430
  %v432 = vpop.f32.mrb[0].mxu0
  %v433 = vadd.f32 %v66, %v432
  %434 = vmatprep.mubr.bf16.mxu0 0
  %435 = vmatmul.mubr.bf16.gmra.mrb[0].mxu0 %v218
  %v436 = vpop.f32.mrb[0].mxu0
  %v437 = vadd.f32 %v62, %v436
  %v438 = vpop.f32.mrb[0].mxu0
  %v439 = vadd.f32 %v66, %v438
  %v440 = vpop.f32.mrb[0].mxu0
  %v441 = vadd.f32 %v62, %v440
  %v442 = vpop.f32.mrb[0].mxu0
  %v443 = vadd.f32 %v66, %v442
  %444 = vmatprep.mubr.bf16.mxu0 0
  %445 = vmatmul.mubr.bf16.gmra.mrb[0].mxu0 %v221
  %v446 = vpop.f32.mrb[0].mxu0
  %v447 = vadd.f32 %v62, %v446
  %v448 = vpop.f32.mrb[0].mxu0
  %v449 = vadd.f32 %v66, %v448
  %v450 = vpop.f32.mrb[0].mxu0
  %v451 = vadd.f32 %v62, %v450
  %v452 = vpop.f32.mrb[0].mxu0
  %v453 = vadd.f32 %v66, %v452
  %454 = vmatprep.mubr.bf16.mxu0 0
  %455 = vmatmul.mubr.bf16.gmra.mrb[0].mxu0 %v224
  %v456 = vpop.f32.mrb[0].mxu0
  %v457 = vadd.f32 %v62, %v456
  %v458 = vpop.f32.mrb[0].mxu0
  %v459 = vadd.f32 %v66, %v458
  %v460 = vpop.f32.mrb[0].mxu0
  %v461 = vadd.f32 %v62, %v460
  %v462 = vpop.f32.mrb[0].mxu0
  %v463 = vadd.f32 %v66, %v462
  %464 = vdwg.mxu0
  %v465 = vtanh.pop %v274
  %v466 = vtanh.pop %v276
  %v467 = vtanh.pop %v387
  %v468 = vtanh.pop %v389
  %v469 = vtanh.pop %v278
  %v470 = vtanh.pop %v280
  %v471 = vtanh.pop %v391
  %v472 = vtanh.pop %v393
  %v473 = vtanh.pop %v284
  %v474 = vtanh.pop %v286
  %v475 = vtanh.pop %v397
  %v476 = vtanh.pop %v399
  %v477 = vtanh.pop %v288
  %v478 = vtanh.pop %v290
  %v479 = vtanh.pop %v401
  %v480 = vtanh.pop %v403
  %v481 = vtanh.pop %v294
  %v482 = vtanh.pop %v296
  %v483 = vtanh.pop %v407
  %v484 = vtanh.pop %v409
  %v485 = vtanh.pop %v298
  %v486 = vtanh.pop %v300
  %v487 = vtanh.pop %v411
  %v488 = vtanh.pop %v413
  %v489 = vtanh.pop %v304
  %v490 = vtanh.pop %v306
  %v491 = vtanh.pop %v417
  %v492 = vtanh.pop %v419
  %v493 = vtanh.pop %v308
  %v494 = vtanh.pop %v310
  %v495 = vtanh.pop %v421
  %v496 = vtanh.pop %v423
  %v497 = vtanh.pop %v314
  %v498 = vtanh.pop %v316
  %v499 = vtanh.pop %v427
  %v500 = vtanh.pop %v429
  %v501 = vtanh.pop %v318
  %v502 = vtanh.pop %v320
  %v503 = vtanh.pop %v431
  %v504 = vtanh.pop %v433
  %v505 = vtanh.pop %v324
  %v506 = vtanh.pop %v326
  %v507 = vtanh.pop %v437
  %v508 = vtanh.pop %v439
  %v509 = vtanh.pop %v328
  %v510 = vtanh.pop %v330
  %v511 = vtanh.pop %v441
  %v512 = vtanh.pop %v443
  %v513 = vtanh.pop %v334
  %v514 = vtanh.pop %v336
  %v515 = vtanh.pop %v447
  %v516 = vtanh.pop %v449
  %v517 = vtanh.pop %v338
  %v518 = vtanh.pop %v340
  %v519 = vtanh.pop %v451
  %v520 = vtanh.pop %v453
  %v521 = vtanh.pop %v344
  %v522 = vtanh.pop %v346
  %v523 = vtanh.pop %v457
  %v524 = vtanh.pop %v459
  %v525 = vtanh.pop %v348
  %v526 = vtanh.pop %v350
  %v527 = vtanh.pop %v461
  %v528 = vtanh.pop %v463
  %529 = vst [vmem:[%s3] sm:$0xff] %v465
  %530 = vst [vmem:[%s3 + $0x8] sm:$0xff] %v466
  %531 = vst [vmem:[%s3 + $0x10] sm:$0xff] %v467
  %532 = vst [vmem:[%s3 + $0x18] sm:$0xff] %v468
  %533 = vst [vmem:[%s3 + $0x20] sm:$0xff] %v469
  %534 = vst [vmem:[%s3 + $0x28] sm:$0xff] %v470
  %535 = vst [vmem:[%s3 + $0x30] sm:$0xff] %v471
  %536 = vst [vmem:[%s3 + $0x38] sm:$0xff] %v472
  %537 = vst [vmem:[%s3 + $0x40] sm:$0xff] %v473
  %538 = vst [vmem:[%s3 + $0x48] sm:$0xff] %v474
  %539 = vst [vmem:[%s3 + $0x50] sm:$0xff] %v475
  %540 = vst [vmem:[%s3 + $0x58] sm:$0xff] %v476
  %541 = vst [vmem:[%s3 + $0x60] sm:$0xff] %v477
  %542 = vst [vmem:[%s3 + $0x68] sm:$0xff] %v478
  %543 = vst [vmem:[%s3 + $0x70] sm:$0xff] %v479
  %544 = vst [vmem:[%s3 + $0x78] sm:$0xff] %v480
  %545 = vst [vmem:[%s3 + $0x80] sm:$0xff] %v481
  %546 = vst [vmem:[%s3 + $0x88] sm:$0xff] %v482
  %547 = vst [vmem:[%s3 + $0x90] sm:$0xff] %v483
  %548 = vst [vmem:[%s3 + $0x98] sm:$0xff] %v484
  %549 = vst [vmem:[%s3 + $0xa0] sm:$0xff] %v485
  %550 = vst [vmem:[%s3 + $0xa8] sm:$0xff] %v486
  %551 = vst [vmem:[%s3 + $0xb0] sm:$0xff] %v487
  %552 = vst [vmem:[%s3 + $0xb8] sm:$0xff] %v488
  %553 = vst [vmem:[%s3 + $0xc0] sm:$0xff] %v489
  %554 = vst [vmem:[%s3 + $0xc8] sm:$0xff] %v490
  %555 = vst [vmem:[%s3 + $0xd0] sm:$0xff] %v491
  %556 = vst [vmem:[%s3 + $0xd8] sm:$0xff] %v492
  %557 = vst [vmem:[%s3 + $0xe0] sm:$0xff] %v493
  %558 = vst [vmem:[%s3 + $0xe8] sm:$0xff] %v494
  %559 = vst [vmem:[%s3 + $0xf0] sm:$0xff] %v495
  %560 = vst [vmem:[%s3 + $0xf8] sm:$0xff] %v496
  %561 = vst [vmem:[%s3 + $0x100] sm:$0xff] %v497
  %562 = vst [vmem:[%s3 + $0x108] sm:$0xff] %v498
  %563 = vst [vmem:[%s3 + $0x110] sm:$0xff] %v499
  %564 = vst [vmem:[%s3 + $0x118] sm:$0xff] %v500
  %565 = vst [vmem:[%s3 + $0x120] sm:$0xff] %v501
  %566 = vst [vmem:[%s3 + $0x128] sm:$0xff] %v502
  %567 = vst [vmem:[%s3 + $0x130] sm:$0xff] %v503
  %568 = vst [vmem:[%s3 + $0x138] sm:$0xff] %v504
  %569 = vst [vmem:[%s3 + $0x140] sm:$0xff] %v505
  %570 = vst [vmem:[%s3 + $0x148] sm:$0xff] %v506
  %571 = vst [vmem:[%s3 + $0x150] sm:$0xff] %v507
  %572 = vst [vmem:[%s3 + $0x158] sm:$0xff] %v508
  %573 = vst [vmem:[%s3 + $0x160] sm:$0xff] %v509
  %574 = vst [vmem:[%s3 + $0x168] sm:$0xff] %v510
  %575 = vst [vmem:[%s3 + $0x170] sm:$0xff] %v511
  %576 = vst [vmem:[%s3 + $0x178] sm:$0xff] %v512
  %577 = vst [vmem:[%s3 + $0x180] sm:$0xff] %v513
  %578 = vst [vmem:[%s3 + $0x188] sm:$0xff] %v514
  %579 = vst [vmem:[%s3 + $0x190] sm:$0xff] %v515
  %580 = vst [vmem:[%s3 + $0x198] sm:$0xff] %v516
  %581 = vst [vmem:[%s3 + $0x1a0] sm:$0xff] %v517
  %582 = vst [vmem:[%s3 + $0x1a8] sm:$0xff] %v518
  %583 = vst [vmem:[%s3 + $0x1b0] sm:$0xff] %v519
  %584 = vst [vmem:[%s3 + $0x1b8] sm:$0xff] %v520
  %585 = vst [vmem:[%s3 + $0x1c0] sm:$0xff] %v521
  %586 = vst [vmem:[%s3 + $0x1c8] sm:$0xff] %v522
  %587 = vst [vmem:[%s3 + $0x1d0] sm:$0xff] %v523
  %588 = vst [vmem:[%s3 + $0x1d8] sm:$0xff] %v524
  %589 = vst [vmem:[%s3 + $0x1e0] sm:$0xff] %v525
  %590 = vst [vmem:[%s3 + $0x1e8] sm:$0xff] %v526
  %591 = vst [vmem:[%s3 + $0x1f0] sm:$0xff] %v527
  %592 = vst [vmem:[%s3 + $0x1f8] sm:$0xff] %v528
  // Predicated region
  $region14: #{generator_forward.13} parent=0 // pred_check
    _
  $region15: #{generator_forward.13} parent=0 // pred_check_branch
    %594 = sbr.rel (0) target = $region17
  $region16: #{generator_forward.13} parent=0 // pred_region
    _
  $region17: #{generator_forward.13} parent=0 // pred_fallthru
    _
  // Predicated region
  $region18: #{generator_forward.13} parent=0 // pred_check
    _
  $region19: #{generator_forward.13} parent=0 // pred_check_branch
    %596 = sbr.rel (0) target = $region21
  $region20: #{generator_forward.13} parent=0 // pred_region
    _
  $region21: #{generator_forward.13} parent=0 // pred_fallthru
    _

</llo_original>
